<compile_context>
chip_gen: v5e
topology: v5e:2x2
jax: 0.10.0
libtpu: 0.0.40
codegen_flags: <defaults>
</compile_context>

<pallas_src>
import functools

import jax
import jax.numpy as jnp
from jax.experimental import pallas as pl
from jax.experimental.pallas import tpu as pltpu

LRELU_SLOPE = 0.2
BN_EPS = 1e-5
MAX_TM = 512


# ---------------------------------------------------------------------------
# Pallas kernels
# ---------------------------------------------------------------------------
def _matmul_lrelu_kernel(p_ref, w_ref, o_ref):
    """One M-tile of: leaky_relu(patches @ W_blockdiag), lane-dense output."""
    y = jnp.dot(p_ref[...], w_ref[...], preferred_element_type=jnp.float32)
    o_ref[...] = jnp.where(y >= 0, y, LRELU_SLOPE * y).astype(o_ref.dtype)


def _matmul_stats_kernel(p_ref, w_ref, y_ref, s_ref, q_ref):
    """Pass A of a BN layer: matmul + per-tile partial sum / sum-of-squares."""
    y = jnp.dot(p_ref[...], w_ref[...], preferred_element_type=jnp.float32)
    y_ref[...] = y
    s_ref[0] = jnp.sum(y, axis=0, keepdims=True)
    q_ref[0] = jnp.sum(y * y, axis=0, keepdims=True)


def _bn_lrelu_kernel(y_ref, sc_ref, sh_ref, o_ref):
    """Pass B of a BN layer: fused per-channel affine + LeakyReLU."""
    t = y_ref[...] * sc_ref[...] + sh_ref[...]
    o_ref[...] = jnp.where(t >= 0, t, LRELU_SLOPE * t).astype(o_ref.dtype)


# ---------------------------------------------------------------------------
# Host-side glue (reshapes / slices only; the hot path is in Pallas)
# ---------------------------------------------------------------------------
def _round_up(x, m):
    return -(-x // m) * m


def _im2col_nhwc(x, k=4, stride=2, pad=1):
    """x: (N, H, W, C) -> patches (N*Ho*Wo, k*k*C), K ordered (kh, kw, C)."""
    n, h, w, c = x.shape
    xp = jnp.pad(x, ((0, 0), (pad, pad), (pad, pad), (0, 0)))
    ho = (h + 2 * pad - k) // stride + 1
    wo = (w + 2 * pad - k) // stride + 1
    cols = []
    for di in range(k):
        for dj in range(k):
            cols.append(
                xp[:, di:di + stride * ho:stride, dj:dj + stride * wo:stride, :])
    p = jnp.stack(cols, axis=3)                  # (N, Ho, Wo, k*k, C)
    return p.reshape(n * ho * wo, k * k * c), (n, ho, wo)


def _weight_matrix(w):
    """PyTorch OIHW weight -> (K, Cout) with K ordered (kh, kw, Cin)."""
    cout, cin, kh, kw = w.shape
    return jnp.transpose(w, (2, 3, 1, 0)).reshape(kh * kw * cin, cout)


def _block_diag(wm, r):
    """(K, C) -> block-diagonal (r*K, r*C) so that the matmul output is
    lane-dense (r*C == 128) while staying a plain row-major view of (M, C)."""
    if r == 1:
        return wm
    eye = jnp.eye(r, dtype=jnp.float32)
    return jnp.kron(eye, wm.astype(jnp.float32))


def _pick_r(cout, m):
    if cout >= 128 or 128 % cout != 0:
        return 1
    r = 128 // cout
    while r > 1 and m % r != 0:
        r //= 2
    return max(r, 1)


def _prep_patches(x, w):
    """Common preprocessing for both layer types."""
    cout = w.shape[0]
    patches, (n, ho, wo) = _im2col_nhwc(x)
    m, k = patches.shape
    r = _pick_r(cout, m)
    mr, rk, rc = m // r, k * r, cout * r
    wbd = _block_diag(_weight_matrix(w), r).astype(jnp.bfloat16)
    pr = patches.astype(jnp.bfloat16).reshape(mr, rk)
    tm = min(MAX_TM, _round_up(mr, 16))
    mp = _round_up(mr, tm)
    if mp > mr:
        pr = jnp.pad(pr, ((0, mp - mr), (0, 0)))   # zero rows: no effect on BN stats
    return pr, wbd, (n, ho, wo), (m, cout, r, mr, rk, rc, tm, mp)


# ---------------------------------------------------------------------------
# Layer wrappers
# ---------------------------------------------------------------------------
def conv_lrelu_nhwc(x, w):
    """Conv2d(4,2,1,bias=False) + LeakyReLU(0.2).  x NHWC -> NHWC (bf16)."""
    pr, wbd, (n, ho, wo), (m, cout, r, mr, rk, rc, tm, mp) = _prep_patches(x, w)
    grid_m = mp // tm
    out = pl.pallas_call(
        _matmul_lrelu_kernel,
        out_shape=jax.ShapeDtypeStruct((mp, rc), jnp.bfloat16),
        grid=(grid_m,),
        in_specs=[pl.BlockSpec((tm, rk), lambda i: (i, 0)),
                  pl.BlockSpec((rk, rc), lambda i: (0, 0))],
        out_specs=pl.BlockSpec((tm, rc), lambda i: (i, 0)),
        compiler_params=pltpu.CompilerParams(dimension_semantics=("parallel",)),
        cost_estimate=pl.CostEstimate(
            flops=2 * mp * rk * rc, transcendentals=0,
            bytes_accessed=mp * rk * 2 + rk * rc * 2 + mp * rc * 2),
    )(pr, wbd)
    return out[:mr].reshape(n, ho, wo, cout)


def conv_bn_lrelu_nhwc(x, w, gamma, beta, out_dtype=jnp.bfloat16):
    """Conv2d(4,2,1) + BatchNorm2d (training-mode batch stats) + LeakyReLU.

    Two tiled pallas_calls: (A) matmul + partial sums, (B) affine + LeakyReLU.
    """
    pr, wbd, (n, ho, wo), (m, cout, r, mr, rk, rc, tm, mp) = _prep_patches(x, w)
    grid_m = mp // tm

    y, ps, pq = pl.pallas_call(
        _matmul_stats_kernel,
        out_shape=(jax.ShapeDtypeStruct((mp, rc), jnp.float32),
                   jax.ShapeDtypeStruct((grid_m, 1, rc), jnp.float32),
                   jax.ShapeDtypeStruct((grid_m, 1, rc), jnp.float32)),
        grid=(grid_m,),
        in_specs=[pl.BlockSpec((tm, rk), lambda i: (i, 0)),
                  pl.BlockSpec((rk, rc), lambda i: (0, 0))],
        out_specs=(pl.BlockSpec((tm, rc), lambda i: (i, 0)),
                   pl.BlockSpec((1, 1, rc), lambda i: (i, 0, 0)),
                   pl.BlockSpec((1, 1, rc), lambda i: (i, 0, 0))),
        compiler_params=pltpu.CompilerParams(dimension_semantics=("parallel",)),
        cost_estimate=pl.CostEstimate(
            flops=2 * mp * rk * rc, transcendentals=0,
            bytes_accessed=mp * rk * 2 + rk * rc * 2 + mp * rc * 4),
    )(pr, wbd)

    # Tiny per-channel reduction + affine fold (cout floats) in plain JAX.
    ssum = jnp.sum(ps, axis=(0, 1)).reshape(r, cout).sum(axis=0)
    ssq = jnp.sum(pq, axis=(0, 1)).reshape(r, cout).sum(axis=0)
    mean = ssum / m
    var = jnp.maximum(ssq / m - mean * mean, 0.0)
    scale = gamma * jax.lax.rsqrt(var + BN_EPS)
    shift = beta - mean * scale
    sc = jnp.tile(scale, r).reshape(1, rc).astype(jnp.float32)
    sh = jnp.tile(shift, r).reshape(1, rc).astype(jnp.float32)

    out = pl.pallas_call(
        _bn_lrelu_kernel,
        out_shape=jax.ShapeDtypeStruct((mp, rc), out_dtype),
        grid=(grid_m,),
        in_specs=[pl.BlockSpec((tm, rc), lambda i: (i, 0)),
                  pl.BlockSpec((1, rc), lambda i: (0, 0)),
                  pl.BlockSpec((1, rc), lambda i: (0, 0))],
        out_specs=pl.BlockSpec((tm, rc), lambda i: (i, 0)),
        compiler_params=pltpu.CompilerParams(dimension_semantics=("parallel",)),
    )(y, sc, sh)
    return out[:mr].reshape(n, ho, wo, cout)


# ---------------------------------------------------------------------------
# STAGE1_D_IMG forward (encode_img only — that is all forward() returns)
# ---------------------------------------------------------------------------
def stage1_d_img_forward(image, params):
    x = jnp.transpose(image, (0, 2, 3, 1))            # NCHW -> NHWC, once
    h = conv_lrelu_nhwc(x, params["w1"])
    h = conv_bn_lrelu_nhwc(h, params["w2"], params["g2"], params["b2"], jnp.bfloat16)
    h = conv_bn_lrelu_nhwc(h, params["w3"], params["g3"], params["b3"], jnp.bfloat16)
    h = conv_bn_lrelu_nhwc(h, params["w4"], params["g4"], params["b4"], jnp.float32)
    return jnp.transpose(h, (0, 3, 1, 2))             # NHWC -> NCHW, once


def init_params(key, ndf):
    ks = jax.random.split(key, 10)
    return {
        "w1": 0.05 * jax.random.normal(ks[0], (ndf, 3, 4, 4), jnp.float32),
        "w2": 0.05 * jax.random.normal(ks[1], (ndf * 2, ndf, 4, 4), jnp.float32),
        "w3": 0.05 * jax.random.normal(ks[2], (ndf * 4, ndf * 2, 4, 4), jnp.float32),
        "w4": 0.05 * jax.random.normal(ks[3], (ndf * 8, ndf * 4, 4, 4), jnp.float32),
        "g2": 1.0 + 0.1 * jax.random.normal(ks[4], (ndf * 2,), jnp.float32),
        "b2": 0.1 * jax.random.normal(ks[5], (ndf * 2,), jnp.float32),
        "g3": 1.0 + 0.1 * jax.random.normal(ks[6], (ndf * 4,), jnp.float32),
        "b3": 0.1 * jax.random.normal(ks[7], (ndf * 4,), jnp.float32),
        "g4": 1.0 + 0.1 * jax.random.normal(ks[8], (ndf * 8,), jnp.float32),
        "b4": 0.1 * jax.random.normal(ks[9], (ndf * 8,), jnp.float32),
    }


# ---------------------------------------------------------------------------
# Pure-JAX reference (lax.conv).  Conv inputs are cast to bf16 exactly like the
# Pallas path (f32 accumulation); BN / LeakyReLU stay in f32.
# ---------------------------------------------------------------------------
def _ref_forward(x, p):
    def conv(x, w):
        return jax.lax.conv_general_dilated(
            x.astype(jnp.bfloat16), w.astype(jnp.bfloat16), (2, 2),
            [(1, 1), (1, 1)],
            dimension_numbers=("NCHW", "OIHW", "NCHW"),
            preferred_element_type=jnp.float32)

    def lrelu(y):
        return jnp.where(y >= 0, y, LRELU_SLOPE * y)

    def bn(y, g, b):
        m = y.mean(axis=(0, 2, 3), keepdims=True)
        v = jnp.square(y - m).mean(axis=(0, 2, 3), keepdims=True)
        return (y - m) * jax.lax.rsqrt(v + BN_EPS) * g.reshape(1, -1, 1, 1) \
            + b.reshape(1, -1, 1, 1)

    h = lrelu(conv(x, p["w1"]))
    h = lrelu(bn(conv(h, p["w2"]), p["g2"], p["b2"]))
    h = lrelu(bn(conv(h, p["w3"]), p["g3"], p["b3"]))
    h = lrelu(bn(conv(h, p["w4"]), p["g4"], p["b4"]))
    return h


if __name__ == "__main__":
    # Small deterministic config: ndf (cfg.GAN.DF_DIM) = 16, batch=2, 64x64 RGB
    ndf = 16
    key = jax.random.PRNGKey(0)
    k_img, k_param = jax.random.split(key)
    image = jax.random.normal(k_img, (2, 3, 64, 64), jnp.float32)
    params = init_params(k_param, ndf)

    fwd = jax.jit(functools.partial(stage1_d_img_forward, params=params))
    out = jax.block_until_ready(fwd(image))

    assert out.shape == (2, ndf * 8, 4, 4), out.shape

    ref = _ref_forward(image, params)
    max_err = float(jnp.max(jnp.abs(out - ref)))
    assert jnp.allclose(out, ref, rtol=2e-3, atol=2e-3), max_err

    print("KERNEL_OK")
</pallas_src>

<mosaic_0001>
module attributes {stable_mosaic.version = 11 : i64} {
  func.func @_matmul_lrelu_kernel(%arg0: i32, %arg1: memref<256x384xbf16, #tpu.memory_space<vmem>>, %arg2: memref<384x128xbf16, #tpu.memory_space<vmem>>, %arg3: memref<256x128xbf16, #tpu.memory_space<vmem>>) attributes {dimension_semantics = [#tpu.dimension_semantics<parallel>], iteration_bounds = array<i64: 1>, scalar_prefetch = 0 : i64, scratch_operands = 0 : i64, tpu.core_type = #tpu.core_type<tc>, window_params = [{transform_indices = @transform_0, window_bounds = array<i64: 256, 384>}, {pipeline_mode = #tpu.pipeline_mode<synchronous>, transform_indices = @transform_1, window_bounds = array<i64: 384, 128>}, {transform_indices = @transform_2, window_bounds = array<i64: 256, 128>}]} {
    %c0 = arith.constant 0 : index
    %c0_0 = arith.constant 0 : index
    %0 = vector.load %arg1[%c0, %c0_0] : memref<256x384xbf16, #tpu.memory_space<vmem>>, vector<256x384xbf16>
    %c0_1 = arith.constant 0 : index
    %c0_2 = arith.constant 0 : index
    %1 = vector.load %arg2[%c0_1, %c0_2] : memref<384x128xbf16, #tpu.memory_space<vmem>>, vector<384x128xbf16>
    %cst = arith.constant dense<0.000000e+00> : vector<256x128xf32>
    %2 = tpu.matmul %0, %1, %cst {dimension_numbers = #tpu.dot_dimension_numbers<[1], [0], [0], [1], [0, 0, 1, 1], [], []>} : vector<256x384xbf16>, vector<384x128xbf16>, vector<256x128xf32> -> vector<256x128xf32>
    %cst_3 = arith.constant 0.000000e+00 : f32
    %3 = vector.broadcast %cst_3 : f32 to vector<256x128xf32>
    %4 = arith.cmpf oge, %2, %3 : vector<256x128xf32>
    %cst_4 = arith.constant 2.000000e-01 : f32
    %5 = vector.broadcast %cst_4 : f32 to vector<256x128xf32>
    %6 = arith.mulf %5, %2 : vector<256x128xf32>
    %7 = arith.select %4, %2, %6 : vector<256x128xi1>, vector<256x128xf32>
    %8 = arith.truncf %7 : vector<256x128xf32> to vector<256x128xbf16>
    %c0_5 = arith.constant 0 : index
    %c0_6 = arith.constant 0 : index
    %9 = vector.load %arg3[%c0_5, %c0_6] : memref<256x128xbf16, #tpu.memory_space<vmem>>, vector<256x128xbf16>
    tpu.vector_store %arg3[%c0_5, %c0_6], %8 {strides = array<i32>} : memref<256x128xbf16, #tpu.memory_space<vmem>>, vector<256x128xbf16>,
    return
  }
  func.func @transform_0(%arg0: i32) -> (i32, i32) {
    %c0_i32 = arith.constant 0 : i32
    %c0_i32_0 = arith.constant 0 : i32
    return %arg0, %c0_i32 : i32, i32
  }
  func.func @transform_1(%arg0: i32) -> (i32, i32) {
    %c0_i32 = arith.constant 0 : i32
    %c0_i32_0 = arith.constant 0 : i32
    %c0_i32_1 = arith.constant 0 : i32
    return %c0_i32, %c0_i32_0 : i32, i32
  }
  func.func @transform_2(%arg0: i32) -> (i32, i32) {
    %c0_i32 = arith.constant 0 : i32
    %c0_i32_0 = arith.constant 0 : i32
    return %arg0, %c0_i32 : i32, i32
  }
}

module attributes {stable_mosaic.version = 11 : i64} {
  func.func @_matmul_stats_kernel(%arg0: i32, %arg1: memref<128x1024xbf16, #tpu.memory_space<vmem>>, %arg2: memref<1024x128xbf16, #tpu.memory_space<vmem>>, %arg3: memref<128x128xf32, #tpu.memory_space<vmem>>, %arg4: memref<1x1x128xf32, #tpu.memory_space<vmem>>, %arg5: memref<1x1x128xf32, #tpu.memory_space<vmem>>) attributes {dimension_semantics = [#tpu.dimension_semantics<parallel>], iteration_bounds = array<i64: 1>, scalar_prefetch = 0 : i64, scratch_operands = 0 : i64, tpu.core_type = #tpu.core_type<tc>, window_params = [{transform_indices = @transform_0, window_bounds = array<i64: 128, 1024>}, {pipeline_mode = #tpu.pipeline_mode<synchronous>, transform_indices = @transform_1, window_bounds = array<i64: 1024, 128>}, {transform_indices = @transform_2, window_bounds = array<i64: 128, 128>}, {transform_indices = @transform_3, window_bounds = array<i64: 1, 1, 128>}, {transform_indices = @transform_4, window_bounds = array<i64: 1, 1, 128>}]} {
    %c0 = arith.constant 0 : index
    %c0_0 = arith.constant 0 : index
    %0 = vector.load %arg1[%c0, %c0_0] : memref<128x1024xbf16, #tpu.memory_space<vmem>>, vector<128x1024xbf16>
    %c0_1 = arith.constant 0 : index
    %c0_2 = arith.constant 0 : index
    %1 = vector.load %arg2[%c0_1, %c0_2] : memref<1024x128xbf16, #tpu.memory_space<vmem>>, vector<1024x128xbf16>
    %cst = arith.constant dense<0.000000e+00> : vector<128x128xf32>
    %2 = tpu.matmul %0, %1, %cst {dimension_numbers = #tpu.dot_dimension_numbers<[1], [0], [0], [1], [0, 0, 1, 1], [], []>} : vector<128x1024xbf16>, vector<1024x128xbf16>, vector<128x128xf32> -> vector<128x128xf32>
    %c0_3 = arith.constant 0 : index
    %c0_4 = arith.constant 0 : index
    %3 = vector.load %arg3[%c0_3, %c0_4] : memref<128x128xf32, #tpu.memory_space<vmem>>, vector<128x128xf32>
    tpu.vector_store %arg3[%c0_3, %c0_4], %2 {strides = array<i32>} : memref<128x128xf32, #tpu.memory_space<vmem>>, vector<128x128xf32>,
    %cst_5 = arith.constant dense<0.000000e+00> : vector<128xf32>
    %4 = vector.multi_reduction <add>, %2, %cst_5 [0] : vector<128x128xf32> to vector<128xf32>
    %5 = vector.shape_cast %4 : vector<128xf32> to vector<1x128xf32>
    %c0_6 = arith.constant 0 : index
    %c0_7 = arith.constant 0 : index
    %c0_8 = arith.constant 0 : index
    %6 = vector.load %arg4[%c0_6, %c0_7, %c0_8] : memref<1x1x128xf32, #tpu.memory_space<vmem>>, vector<1x1x128xf32>
    %7 = vector.shape_cast %6 : vector<1x1x128xf32> to vector<1x128xf32>
    %8 = vector.shape_cast %5 : vector<1x128xf32> to vector<1x1x128xf32>
    tpu.vector_store %arg4[%c0_6, %c0_7, %c0_8], %8 {strides = array<i32>} : memref<1x1x128xf32, #tpu.memory_space<vmem>>, vector<1x1x128xf32>,
    %9 = arith.mulf %2, %2 : vector<128x128xf32>
    %cst_9 = arith.constant dense<0.000000e+00> : vector<128xf32>
    %10 = vector.multi_reduction <add>, %9, %cst_9 [0] : vector<128x128xf32> to vector<128xf32>
    %11 = vector.shape_cast %10 : vector<128xf32> to vector<1x128xf32>
    %c0_10 = arith.constant 0 : index
    %c0_11 = arith.constant 0 : index
    %c0_12 = arith.constant 0 : index
    %12 = vector.load %arg5[%c0_10, %c0_11, %c0_12] : memref<1x1x128xf32, #tpu.memory_space<vmem>>, vector<1x1x128xf32>
    %13 = vector.shape_cast %12 : vector<1x1x128xf32> to vector<1x128xf32>
    %14 = vector.shape_cast %11 : vector<1x128xf32> to vector<1x1x128xf32>
    tpu.vector_store %arg5[%c0_10, %c0_11, %c0_12], %14 {strides = array<i32>} : memref<1x1x128xf32, #tpu.memory_space<vmem>>, vector<1x1x128xf32>,
    return
  }
  func.func @transform_0(%arg0: i32) -> (i32, i32) {
    %c0_i32 = arith.constant 0 : i32
    %c0_i32_0 = arith.constant 0 : i32
    return %arg0, %c0_i32 : i32, i32
  }
  func.func @transform_1(%arg0: i32) -> (i32, i32) {
    %c0_i32 = arith.constant 0 : i32
    %c0_i32_0 = arith.constant 0 : i32
    %c0_i32_1 = arith.constant 0 : i32
    return %c0_i32, %c0_i32_0 : i32, i32
  }
  func.func @transform_2(%arg0: i32) -> (i32, i32) {
    %c0_i32 = arith.constant 0 : i32
    %c0_i32_0 = arith.constant 0 : i32
    return %arg0, %c0_i32 : i32, i32
  }
  func.func @transform_3(%arg0: i32) -> (i32, i32, i32) {
    %c0_i32 = arith.constant 0 : i32
    %c0_i32_0 = arith.constant 0 : i32
    %c0_i32_1 = arith.constant 0 : i32
    return %arg0, %c0_i32, %c0_i32_0 : i32, i32, i32
  }
  func.func @transform_4(%arg0: i32) -> (i32, i32, i32) {
    %c0_i32 = arith.constant 0 : i32
    %c0_i32_0 = arith.constant 0 : i32
    %c0_i32_1 = arith.constant 0 : i32
    return %arg0, %c0_i32, %c0_i32_0 : i32, i32, i32
  }
}

module attributes {stable_mosaic.version = 11 : i64} {
  func.func @_bn_lrelu_kernel(%arg0: i32, %arg1: memref<128x128xf32, #tpu.memory_space<vmem>>, %arg2: memref<1x128xf32, #tpu.memory_space<vmem>>, %arg3: memref<1x128xf32, #tpu.memory_space<vmem>>, %arg4: memref<128x128xbf16, #tpu.memory_space<vmem>>) attributes {dimension_semantics = [#tpu.dimension_semantics<parallel>], iteration_bounds = array<i64: 1>, scalar_prefetch = 0 : i64, scratch_operands = 0 : i64, tpu.core_type = #tpu.core_type<tc>, window_params = [{transform_indices = @transform_0, window_bounds = array<i64: 128, 128>}, {pipeline_mode = #tpu.pipeline_mode<synchronous>, transform_indices = @transform_1, window_bounds = array<i64: 1, 128>}, {pipeline_mode = #tpu.pipeline_mode<synchronous>, transform_indices = @transform_2, window_bounds = array<i64: 1, 128>}, {transform_indices = @transform_3, window_bounds = array<i64: 128, 128>}]} {
    %c0 = arith.constant 0 : index
    %c0_0 = arith.constant 0 : index
    %0 = vector.load %arg1[%c0, %c0_0] : memref<128x128xf32, #tpu.memory_space<vmem>>, vector<128x128xf32>
    %c0_1 = arith.constant 0 : index
    %c0_2 = arith.constant 0 : index
    %1 = vector.load %arg2[%c0_1, %c0_2] : memref<1x128xf32, #tpu.memory_space<vmem>>, vector<1x128xf32>
    %2 = vector.broadcast %1 : vector<1x128xf32> to vector<128x128xf32>
    %3 = arith.mulf %0, %2 : vector<128x128xf32>
    %c0_3 = arith.constant 0 : index
    %c0_4 = arith.constant 0 : index
    %4 = vector.load %arg3[%c0_3, %c0_4] : memref<1x128xf32, #tpu.memory_space<vmem>>, vector<1x128xf32>
    %5 = vector.broadcast %4 : vector<1x128xf32> to vector<128x128xf32>
    %6 = arith.addf %3, %5 : vector<128x128xf32>
    %cst = arith.constant 0.000000e+00 : f32
    %7 = vector.broadcast %cst : f32 to vector<128x128xf32>
    %8 = arith.cmpf oge, %6, %7 : vector<128x128xf32>
    %cst_5 = arith.constant 2.000000e-01 : f32
    %9 = vector.broadcast %cst_5 : f32 to vector<128x128xf32>
    %10 = arith.mulf %9, %6 : vector<128x128xf32>
    %11 = arith.select %8, %6, %10 : vector<128x128xi1>, vector<128x128xf32>
    %12 = arith.truncf %11 : vector<128x128xf32> to vector<128x128xbf16>
    %c0_6 = arith.constant 0 : index
    %c0_7 = arith.constant 0 : index
    %13 = vector.load %arg4[%c0_6, %c0_7] : memref<128x128xbf16, #tpu.memory_space<vmem>>, vector<128x128xbf16>
    tpu.vector_store %arg4[%c0_6, %c0_7], %12 {strides = array<i32>} : memref<128x128xbf16, #tpu.memory_space<vmem>>, vector<128x128xbf16>,
    return
  }
  func.func @transform_0(%arg0: i32) -> (i32, i32) {
    %c0_i32 = arith.constant 0 : i32
    %c0_i32_0 = arith.constant 0 : i32
    return %arg0, %c0_i32 : i32, i32
  }
  func.func @transform_1(%arg0: i32) -> (i32, i32) {
    %c0_i32 = arith.constant 0 : i32
    %c0_i32_0 = arith.constant 0 : i32
    %c0_i32_1 = arith.constant 0 : i32
    return %c0_i32, %c0_i32_0 : i32, i32
  }
  func.func @transform_2(%arg0: i32) -> (i32, i32) {
    %c0_i32 = arith.constant 0 : i32
    %c0_i32_0 = arith.constant 0 : i32
    %c0_i32_1 = arith.constant 0 : i32
    return %c0_i32, %c0_i32_0 : i32, i32
  }
  func.func @transform_3(%arg0: i32) -> (i32, i32) {
    %c0_i32 = arith.constant 0 : i32
    %c0_i32_0 = arith.constant 0 : i32
    return %arg0, %c0_i32 : i32, i32
  }
}

module attributes {stable_mosaic.version = 11 : i64} {
  func.func @_matmul_stats_kernel(%arg0: i32, %arg1: memref<64x1024xbf16, #tpu.memory_space<vmem>>, %arg2: memref<1024x128xbf16, #tpu.memory_space<vmem>>, %arg3: memref<64x128xf32, #tpu.memory_space<vmem>>, %arg4: memref<1x1x128xf32, #tpu.memory_space<vmem>>, %arg5: memref<1x1x128xf32, #tpu.memory_space<vmem>>) attributes {dimension_semantics = [#tpu.dimension_semantics<parallel>], iteration_bounds = array<i64: 1>, scalar_prefetch = 0 : i64, scratch_operands = 0 : i64, tpu.core_type = #tpu.core_type<tc>, window_params = [{transform_indices = @transform_0, window_bounds = array<i64: 64, 1024>}, {pipeline_mode = #tpu.pipeline_mode<synchronous>, transform_indices = @transform_1, window_bounds = array<i64: 1024, 128>}, {transform_indices = @transform_2, window_bounds = array<i64: 64, 128>}, {transform_indices = @transform_3, window_bounds = array<i64: 1, 1, 128>}, {transform_indices = @transform_4, window_bounds = array<i64: 1, 1, 128>}]} {
    %c0 = arith.constant 0 : index
    %c0_0 = arith.constant 0 : index
    %0 = vector.load %arg1[%c0, %c0_0] : memref<64x1024xbf16, #tpu.memory_space<vmem>>, vector<64x1024xbf16>
    %c0_1 = arith.constant 0 : index
    %c0_2 = arith.constant 0 : index
    %1 = vector.load %arg2[%c0_1, %c0_2] : memref<1024x128xbf16, #tpu.memory_space<vmem>>, vector<1024x128xbf16>
    %cst = arith.constant dense<0.000000e+00> : vector<64x128xf32>
    %2 = tpu.matmul %0, %1, %cst {dimension_numbers = #tpu.dot_dimension_numbers<[1], [0], [0], [1], [0, 0, 1, 1], [], []>} : vector<64x1024xbf16>, vector<1024x128xbf16>, vector<64x128xf32> -> vector<64x128xf32>
    %c0_3 = arith.constant 0 : index
    %c0_4 = arith.constant 0 : index
    %3 = vector.load %arg3[%c0_3, %c0_4] : memref<64x128xf32, #tpu.memory_space<vmem>>, vector<64x128xf32>
    tpu.vector_store %arg3[%c0_3, %c0_4], %2 {strides = array<i32>} : memref<64x128xf32, #tpu.memory_space<vmem>>, vector<64x128xf32>,
    %cst_5 = arith.constant dense<0.000000e+00> : vector<128xf32>
    %4 = vector.multi_reduction <add>, %2, %cst_5 [0] : vector<64x128xf32> to vector<128xf32>
    %5 = vector.shape_cast %4 : vector<128xf32> to vector<1x128xf32>
    %c0_6 = arith.constant 0 : index
    %c0_7 = arith.constant 0 : index
    %c0_8 = arith.constant 0 : index
    %6 = vector.load %arg4[%c0_6, %c0_7, %c0_8] : memref<1x1x128xf32, #tpu.memory_space<vmem>>, vector<1x1x128xf32>
    %7 = vector.shape_cast %6 : vector<1x1x128xf32> to vector<1x128xf32>
    %8 = vector.shape_cast %5 : vector<1x128xf32> to vector<1x1x128xf32>
    tpu.vector_store %arg4[%c0_6, %c0_7, %c0_8], %8 {strides = array<i32>} : memref<1x1x128xf32, #tpu.memory_space<vmem>>, vector<1x1x128xf32>,
    %9 = arith.mulf %2, %2 : vector<64x128xf32>
    %cst_9 = arith.constant dense<0.000000e+00> : vector<128xf32>
    %10 = vector.multi_reduction <add>, %9, %cst_9 [0] : vector<64x128xf32> to vector<128xf32>
    %11 = vector.shape_cast %10 : vector<128xf32> to vector<1x128xf32>
    %c0_10 = arith.constant 0 : index
    %c0_11 = arith.constant 0 : index
    %c0_12 = arith.constant 0 : index
    %12 = vector.load %arg5[%c0_10, %c0_11, %c0_12] : memref<1x1x128xf32, #tpu.memory_space<vmem>>, vector<1x1x128xf32>
    %13 = vector.shape_cast %12 : vector<1x1x128xf32> to vector<1x128xf32>
    %14 = vector.shape_cast %11 : vector<1x128xf32> to vector<1x1x128xf32>
    tpu.vector_store %arg5[%c0_10, %c0_11, %c0_12], %14 {strides = array<i32>} : memref<1x1x128xf32, #tpu.memory_space<vmem>>, vector<1x1x128xf32>,
    return
  }
  func.func @transform_0(%arg0: i32) -> (i32, i32) {
    %c0_i32 = arith.constant 0 : i32
    %c0_i32_0 = arith.constant 0 : i32
    return %arg0, %c0_i32 : i32, i32
  }
  func.func @transform_1(%arg0: i32) -> (i32, i32) {
    %c0_i32 = arith.constant 0 : i32
    %c0_i32_0 = arith.constant 0 : i32
    %c0_i32_1 = arith.constant 0 : i32
    return %c0_i32, %c0_i32_0 : i32, i32
  }
  func.func @transform_2(%arg0: i32) -> (i32, i32) {
    %c0_i32 = arith.constant 0 : i32
    %c0_i32_0 = arith.constant 0 : i32
    return %arg0, %c0_i32 : i32, i32
  }
  func.func @transform_3(%arg0: i32) -> (i32, i32, i32) {
    %c0_i32 = arith.constant 0 : i32
    %c0_i32_0 = arith.constant 0 : i32
    %c0_i32_1 = arith.constant 0 : i32
    return %arg0, %c0_i32, %c0_i32_0 : i32, i32, i32
  }
  func.func @transform_4(%arg0: i32) -> (i32, i32, i32) {
    %c0_i32 = arith.constant 0 : i32
    %c0_i32_0 = arith.constant 0 : i32
    %c0_i32_1 = arith.constant 0 : i32
    return %arg0, %c0_i32, %c0_i32_0 : i32, i32, i32
  }
}

module attributes {stable_mosaic.version = 11 : i64} {
  func.func @_bn_lrelu_kernel(%arg0: i32, %arg1: memref<64x128xf32, #tpu.memory_space<vmem>>, %arg2: memref<1x128xf32, #tpu.memory_space<vmem>>, %arg3: memref<1x128xf32, #tpu.memory_space<vmem>>, %arg4: memref<64x128xbf16, #tpu.memory_space<vmem>>) attributes {dimension_semantics = [#tpu.dimension_semantics<parallel>], iteration_bounds = array<i64: 1>, scalar_prefetch = 0 : i64, scratch_operands = 0 : i64, tpu.core_type = #tpu.core_type<tc>, window_params = [{transform_indices = @transform_0, window_bounds = array<i64: 64, 128>}, {pipeline_mode = #tpu.pipeline_mode<synchronous>, transform_indices = @transform_1, window_bounds = array<i64: 1, 128>}, {pipeline_mode = #tpu.pipeline_mode<synchronous>, transform_indices = @transform_2, window_bounds = array<i64: 1, 128>}, {transform_indices = @transform_3, window_bounds = array<i64: 64, 128>}]} {
    %c0 = arith.constant 0 : index
    %c0_0 = arith.constant 0 : index
    %0 = vector.load %arg1[%c0, %c0_0] : memref<64x128xf32, #tpu.memory_space<vmem>>, vector<64x128xf32>
    %c0_1 = arith.constant 0 : index
    %c0_2 = arith.constant 0 : index
    %1 = vector.load %arg2[%c0_1, %c0_2] : memref<1x128xf32, #tpu.memory_space<vmem>>, vector<1x128xf32>
    %2 = vector.broadcast %1 : vector<1x128xf32> to vector<64x128xf32>
    %3 = arith.mulf %0, %2 : vector<64x128xf32>
    %c0_3 = arith.constant 0 : index
    %c0_4 = arith.constant 0 : index
    %4 = vector.load %arg3[%c0_3, %c0_4] : memref<1x128xf32, #tpu.memory_space<vmem>>, vector<1x128xf32>
    %5 = vector.broadcast %4 : vector<1x128xf32> to vector<64x128xf32>
    %6 = arith.addf %3, %5 : vector<64x128xf32>
    %cst = arith.constant 0.000000e+00 : f32
    %7 = vector.broadcast %cst : f32 to vector<64x128xf32>
    %8 = arith.cmpf oge, %6, %7 : vector<64x128xf32>
    %cst_5 = arith.constant 2.000000e-01 : f32
    %9 = vector.broadcast %cst_5 : f32 to vector<64x128xf32>
    %10 = arith.mulf %9, %6 : vector<64x128xf32>
    %11 = arith.select %8, %6, %10 : vector<64x128xi1>, vector<64x128xf32>
    %12 = arith.truncf %11 : vector<64x128xf32> to vector<64x128xbf16>
    %c0_6 = arith.constant 0 : index
    %c0_7 = arith.constant 0 : index
    %13 = vector.load %arg4[%c0_6, %c0_7] : memref<64x128xbf16, #tpu.memory_space<vmem>>, vector<64x128xbf16>
    tpu.vector_store %arg4[%c0_6, %c0_7], %12 {strides = array<i32>} : memref<64x128xbf16, #tpu.memory_space<vmem>>, vector<64x128xbf16>,
    return
  }
  func.func @transform_0(%arg0: i32) -> (i32, i32) {
    %c0_i32 = arith.constant 0 : i32
    %c0_i32_0 = arith.constant 0 : i32
    return %arg0, %c0_i32 : i32, i32
  }
  func.func @transform_1(%arg0: i32) -> (i32, i32) {
    %c0_i32 = arith.constant 0 : i32
    %c0_i32_0 = arith.constant 0 : i32
    %c0_i32_1 = arith.constant 0 : i32
    return %c0_i32, %c0_i32_0 : i32, i32
  }
  func.func @transform_2(%arg0: i32) -> (i32, i32) {
    %c0_i32 = arith.constant 0 : i32
    %c0_i32_0 = arith.constant 0 : i32
    %c0_i32_1 = arith.constant 0 : i32
    return %c0_i32, %c0_i32_0 : i32, i32
  }
  func.func @transform_3(%arg0: i32) -> (i32, i32) {
    %c0_i32 = arith.constant 0 : i32
    %c0_i32_0 = arith.constant 0 : i32
    return %arg0, %c0_i32 : i32, i32
  }
}

module attributes {stable_mosaic.version = 11 : i64} {
  func.func @_matmul_stats_kernel(%arg0: i32, %arg1: memref<32x1024xbf16, #tpu.memory_space<vmem>>, %arg2: memref<1024x128xbf16, #tpu.memory_space<vmem>>, %arg3: memref<32x128xf32, #tpu.memory_space<vmem>>, %arg4: memref<1x1x128xf32, #tpu.memory_space<vmem>>, %arg5: memref<1x1x128xf32, #tpu.memory_space<vmem>>) attributes {dimension_semantics = [#tpu.dimension_semantics<parallel>], iteration_bounds = array<i64: 1>, scalar_prefetch = 0 : i64, scratch_operands = 0 : i64, tpu.core_type = #tpu.core_type<tc>, window_params = [{transform_indices = @transform_0, window_bounds = array<i64: 32, 1024>}, {pipeline_mode = #tpu.pipeline_mode<synchronous>, transform_indices = @transform_1, window_bounds = array<i64: 1024, 128>}, {transform_indices = @transform_2, window_bounds = array<i64: 32, 128>}, {transform_indices = @transform_3, window_bounds = array<i64: 1, 1, 128>}, {transform_indices = @transform_4, window_bounds = array<i64: 1, 1, 128>}]} {
    %c0 = arith.constant 0 : index
    %c0_0 = arith.constant 0 : index
    %0 = vector.load %arg1[%c0, %c0_0] : memref<32x1024xbf16, #tpu.memory_space<vmem>>, vector<32x1024xbf16>
    %c0_1 = arith.constant 0 : index
    %c0_2 = arith.constant 0 : index
    %1 = vector.load %arg2[%c0_1, %c0_2] : memref<1024x128xbf16, #tpu.memory_space<vmem>>, vector<1024x128xbf16>
    %cst = arith.constant dense<0.000000e+00> : vector<32x128xf32>
    %2 = tpu.matmul %0, %1, %cst {dimension_numbers = #tpu.dot_dimension_numbers<[1], [0], [0], [1], [0, 0, 1, 1], [], []>} : vector<32x1024xbf16>, vector<1024x128xbf16>, vector<32x128xf32> -> vector<32x128xf32>
    %c0_3 = arith.constant 0 : index
    %c0_4 = arith.constant 0 : index
    %3 = vector.load %arg3[%c0_3, %c0_4] : memref<32x128xf32, #tpu.memory_space<vmem>>, vector<32x128xf32>
    tpu.vector_store %arg3[%c0_3, %c0_4], %2 {strides = array<i32>} : memref<32x128xf32, #tpu.memory_space<vmem>>, vector<32x128xf32>,
    %cst_5 = arith.constant dense<0.000000e+00> : vector<128xf32>
    %4 = vector.multi_reduction <add>, %2, %cst_5 [0] : vector<32x128xf32> to vector<128xf32>
    %5 = vector.shape_cast %4 : vector<128xf32> to vector<1x128xf32>
    %c0_6 = arith.constant 0 : index
    %c0_7 = arith.constant 0 : index
    %c0_8 = arith.constant 0 : index
    %6 = vector.load %arg4[%c0_6, %c0_7, %c0_8] : memref<1x1x128xf32, #tpu.memory_space<vmem>>, vector<1x1x128xf32>
    %7 = vector.shape_cast %6 : vector<1x1x128xf32> to vector<1x128xf32>
    %8 = vector.shape_cast %5 : vector<1x128xf32> to vector<1x1x128xf32>
    tpu.vector_store %arg4[%c0_6, %c0_7, %c0_8], %8 {strides = array<i32>} : memref<1x1x128xf32, #tpu.memory_space<vmem>>, vector<1x1x128xf32>,
    %9 = arith.mulf %2, %2 : vector<32x128xf32>
    %cst_9 = arith.constant dense<0.000000e+00> : vector<128xf32>
    %10 = vector.multi_reduction <add>, %9, %cst_9 [0] : vector<32x128xf32> to vector<128xf32>
    %11 = vector.shape_cast %10 : vector<128xf32> to vector<1x128xf32>
    %c0_10 = arith.constant 0 : index
    %c0_11 = arith.constant 0 : index
    %c0_12 = arith.constant 0 : index
    %12 = vector.load %arg5[%c0_10, %c0_11, %c0_12] : memref<1x1x128xf32, #tpu.memory_space<vmem>>, vector<1x1x128xf32>
    %13 = vector.shape_cast %12 : vector<1x1x128xf32> to vector<1x128xf32>
    %14 = vector.shape_cast %11 : vector<1x128xf32> to vector<1x1x128xf32>
    tpu.vector_store %arg5[%c0_10, %c0_11, %c0_12], %14 {strides = array<i32>} : memref<1x1x128xf32, #tpu.memory_space<vmem>>, vector<1x1x128xf32>,
    return
  }
  func.func @transform_0(%arg0: i32) -> (i32, i32) {
    %c0_i32 = arith.constant 0 : i32
    %c0_i32_0 = arith.constant 0 : i32
    return %arg0, %c0_i32 : i32, i32
  }
  func.func @transform_1(%arg0: i32) -> (i32, i32) {
    %c0_i32 = arith.constant 0 : i32
    %c0_i32_0 = arith.constant 0 : i32
    %c0_i32_1 = arith.constant 0 : i32
    return %c0_i32, %c0_i32_0 : i32, i32
  }
  func.func @transform_2(%arg0: i32) -> (i32, i32) {
    %c0_i32 = arith.constant 0 : i32
    %c0_i32_0 = arith.constant 0 : i32
    return %arg0, %c0_i32 : i32, i32
  }
  func.func @transform_3(%arg0: i32) -> (i32, i32, i32) {
    %c0_i32 = arith.constant 0 : i32
    %c0_i32_0 = arith.constant 0 : i32
    %c0_i32_1 = arith.constant 0 : i32
    return %arg0, %c0_i32, %c0_i32_0 : i32, i32, i32
  }
  func.func @transform_4(%arg0: i32) -> (i32, i32, i32) {
    %c0_i32 = arith.constant 0 : i32
    %c0_i32_0 = arith.constant 0 : i32
    %c0_i32_1 = arith.constant 0 : i32
    return %arg0, %c0_i32, %c0_i32_0 : i32, i32, i32
  }
}

module attributes {stable_mosaic.version = 11 : i64} {
  func.func @_bn_lrelu_kernel(%arg0: i32, %arg1: memref<32x128xf32, #tpu.memory_space<vmem>>, %arg2: memref<1x128xf32, #tpu.memory_space<vmem>>, %arg3: memref<1x128xf32, #tpu.memory_space<vmem>>, %arg4: memref<32x128xf32, #tpu.memory_space<vmem>>) attributes {dimension_semantics = [#tpu.dimension_semantics<parallel>], iteration_bounds = array<i64: 1>, scalar_prefetch = 0 : i64, scratch_operands = 0 : i64, tpu.core_type = #tpu.core_type<tc>, window_params = [{transform_indices = @transform_0, window_bounds = array<i64: 32, 128>}, {pipeline_mode = #tpu.pipeline_mode<synchronous>, transform_indices = @transform_1, window_bounds = array<i64: 1, 128>}, {pipeline_mode = #tpu.pipeline_mode<synchronous>, transform_indices = @transform_2, window_bounds = array<i64: 1, 128>}, {transform_indices = @transform_3, window_bounds = array<i64: 32, 128>}]} {
    %c0 = arith.constant 0 : index
    %c0_0 = arith.constant 0 : index
    %0 = vector.load %arg1[%c0, %c0_0] : memref<32x128xf32, #tpu.memory_space<vmem>>, vector<32x128xf32>
    %c0_1 = arith.constant 0 : index
    %c0_2 = arith.constant 0 : index
    %1 = vector.load %arg2[%c0_1, %c0_2] : memref<1x128xf32, #tpu.memory_space<vmem>>, vector<1x128xf32>
    %2 = vector.broadcast %1 : vector<1x128xf32> to vector<32x128xf32>
    %3 = arith.mulf %0, %2 : vector<32x128xf32>
    %c0_3 = arith.constant 0 : index
    %c0_4 = arith.constant 0 : index
    %4 = vector.load %arg3[%c0_3, %c0_4] : memref<1x128xf32, #tpu.memory_space<vmem>>, vector<1x128xf32>
    %5 = vector.broadcast %4 : vector<1x128xf32> to vector<32x128xf32>
    %6 = arith.addf %3, %5 : vector<32x128xf32>
    %cst = arith.constant 0.000000e+00 : f32
    %7 = vector.broadcast %cst : f32 to vector<32x128xf32>
    %8 = arith.cmpf oge, %6, %7 : vector<32x128xf32>
    %cst_5 = arith.constant 2.000000e-01 : f32
    %9 = vector.broadcast %cst_5 : f32 to vector<32x128xf32>
    %10 = arith.mulf %9, %6 : vector<32x128xf32>
    %11 = arith.select %8, %6, %10 : vector<32x128xi1>, vector<32x128xf32>
    %c0_6 = arith.constant 0 : index
    %c0_7 = arith.constant 0 : index
    %12 = vector.load %arg4[%c0_6, %c0_7] : memref<32x128xf32, #tpu.memory_space<vmem>>, vector<32x128xf32>
    tpu.vector_store %arg4[%c0_6, %c0_7], %11 {strides = array<i32>} : memref<32x128xf32, #tpu.memory_space<vmem>>, vector<32x128xf32>,
    return
  }
  func.func @transform_0(%arg0: i32) -> (i32, i32) {
    %c0_i32 = arith.constant 0 : i32
    %c0_i32_0 = arith.constant 0 : i32
    return %arg0, %c0_i32 : i32, i32
  }
  func.func @transform_1(%arg0: i32) -> (i32, i32) {
    %c0_i32 = arith.constant 0 : i32
    %c0_i32_0 = arith.constant 0 : i32
    %c0_i32_1 = arith.constant 0 : i32
    return %c0_i32, %c0_i32_0 : i32, i32
  }
  func.func @transform_2(%arg0: i32) -> (i32, i32) {
    %c0_i32 = arith.constant 0 : i32
    %c0_i32_0 = arith.constant 0 : i32
    %c0_i32_1 = arith.constant 0 : i32
    return %c0_i32, %c0_i32_0 : i32, i32
  }
  func.func @transform_3(%arg0: i32) -> (i32, i32) {
    %c0_i32 = arith.constant 0 : i32
    %c0_i32_0 = arith.constant 0 : i32
    return %arg0, %c0_i32 : i32, i32
  }
}

</mosaic_0001>

<llo_original>
// kernel: stage1_d_img_forward.7
$region0: #{stage1_d_img_forward.7}
  #allocation0 [shape = 'u32[]', space=smem, size = 0x4, offset = 0x4, fixed_abs, tag = 'smem constant byte address 0x4 - core index']
  #allocation1 [shape = 'u32[72,128]{1,0:T(1,128)}', space=vmem, size = 0x9000, scoped, tag = 'internal scratch']
  %s0 = inlined_call_operand.vmem [shape: bf16[256,384], index: 0, kind: input, shape index: {}]
  %s1 = inlined_call_operand.vmem [shape: bf16[384,128], index: 1, kind: input, shape index: {}]
  %s2 = inlined_call_operand.vmem [shape: bf16[256,128], index: 2, kind: output, shape index: {}]
  %s3 = sld [smem:[#allocation0]]
  $region18: #{stage1_d_img_forward.7} parent=0
    _
  %s5 = ssub.s32 1, %s3
  %s6 = scalar_select 0, %s5, %s3
  // Predicated region
  $region2: #{stage1_d_img_forward.7} parent=0 // pred_check
    _
  $region3: #{stage1_d_img_forward.7} parent=0 // pred_check_branch
    %8 = sbr.rel (0) target = $region5
  $region4: #{stage1_d_img_forward.7} parent=0 // pred_region
    _
  $region5: #{stage1_d_img_forward.7} parent=0 // pred_fallthru
    _
  // Predicated region
  $region6: #{stage1_d_img_forward.7} parent=0 // pred_check
    _
  $region7: #{stage1_d_img_forward.7} parent=0 // pred_check_branch
    %10 = sbr.rel (0) target = $region9
  $region8: #{stage1_d_img_forward.7} parent=0 // pred_region
    _
  $region9: #{stage1_d_img_forward.7} parent=0 // pred_fallthru
    _
  %v11 = vld [vmem:[%s0] sm:$0xff]
  %v12 = vld [vmem:[%s0 + $0x8] sm:$0xf]
  %v13 = vld [vmem:[%s0 + $0xc] sm:$0xff]
  %v14 = vld [vmem:[%s0 + $0x14] sm:$0xf]
  %v15 = vld [vmem:[%s0 + $0x18] sm:$0xff]
  %v16 = vld [vmem:[%s0 + $0x20] sm:$0xf]
  %v17 = vld [vmem:[%s0 + $0x24] sm:$0xff]
  %v18 = vld [vmem:[%s0 + $0x2c] sm:$0xf]
  %v19 = vld [vmem:[%s0 + $0x30] sm:$0xff]
  %v20 = vld [vmem:[%s0 + $0x38] sm:$0xf]
  %v21 = vld [vmem:[%s0 + $0x3c] sm:$0xff]
  %v22 = vld [vmem:[%s0 + $0x44] sm:$0xf]
  %v23 = vld [vmem:[%s0 + $0x48] sm:$0xff]
  %v24 = vld [vmem:[%s0 + $0x50] sm:$0xf]
  %v25 = vld [vmem:[%s0 + $0x54] sm:$0xff]
  %v26 = vld [vmem:[%s0 + $0x5c] sm:$0xf]
  %v27 = vld [vmem:[%s0 + $0x60] sm:$0xff]
  %v28 = vld [vmem:[%s0 + $0x68] sm:$0xf]
  %v29 = vld [vmem:[%s0 + $0x6c] sm:$0xff]
  %v30 = vld [vmem:[%s0 + $0x74] sm:$0xf]
  %v31 = vld [vmem:[%s0 + $0x78] sm:$0xff]
  %v32 = vld [vmem:[%s0 + $0x80] sm:$0xf]
  %v33 = vld [vmem:[%s0 + $0x84] sm:$0xff]
  %v34 = vld [vmem:[%s0 + $0x8c] sm:$0xf]
  %v35 = vld [vmem:[%s0 + $0x90] sm:$0xff]
  %v36 = vld [vmem:[%s0 + $0x98] sm:$0xf]
  %v37 = vld [vmem:[%s0 + $0x9c] sm:$0xff]
  %v38 = vld [vmem:[%s0 + $0xa4] sm:$0xf]
  %v39 = vld [vmem:[%s0 + $0xa8] sm:$0xff]
  %v40 = vld [vmem:[%s0 + $0xb0] sm:$0xf]
  %v41 = vld [vmem:[%s0 + $0xb4] sm:$0xff]
  %v42 = vld [vmem:[%s0 + $0xbc] sm:$0xf]
  %v43 = vld [vmem:[%s0 + $0xc0] sm:$0xff]
  %v44 = vld [vmem:[%s0 + $0xc8] sm:$0xf]
  %v45 = vld [vmem:[%s0 + $0xcc] sm:$0xff]
  %v46 = vld [vmem:[%s0 + $0xd4] sm:$0xf]
  %v47 = vld [vmem:[%s0 + $0xd8] sm:$0xff]
  %v48 = vld [vmem:[%s0 + $0xe0] sm:$0xf]
  %v49 = vld [vmem:[%s0 + $0xe4] sm:$0xff]
  %v50 = vld [vmem:[%s0 + $0xec] sm:$0xf]
  %v51 = vld [vmem:[%s0 + $0xf0] sm:$0xff]
  %v52 = vld [vmem:[%s0 + $0xf8] sm:$0xf]
  %v53 = vld [vmem:[%s0 + $0xfc] sm:$0xff]
  %v54 = vld [vmem:[%s0 + $0x104] sm:$0xf]
  %v55 = vld [vmem:[%s0 + $0x108] sm:$0xff]
  %v56 = vld [vmem:[%s0 + $0x110] sm:$0xf]
  %v57 = vld [vmem:[%s0 + $0x114] sm:$0xff]
  %v58 = vld [vmem:[%s0 + $0x11c] sm:$0xf]
  %v59 = vld [vmem:[%s0 + $0x120] sm:$0xff]
  %v60 = vld [vmem:[%s0 + $0x128] sm:$0xf]
  %v61 = vld [vmem:[%s0 + $0x12c] sm:$0xff]
  %v62 = vld [vmem:[%s0 + $0x134] sm:$0xf]
  %v63 = vld [vmem:[%s0 + $0x138] sm:$0xff]
  %v64 = vld [vmem:[%s0 + $0x140] sm:$0xf]
  %v65 = vld [vmem:[%s0 + $0x144] sm:$0xff]
  %v66 = vld [vmem:[%s0 + $0x14c] sm:$0xf]
  %v67 = vld [vmem:[%s0 + $0x150] sm:$0xff]
  %v68 = vld [vmem:[%s0 + $0x158] sm:$0xf]
  %v69 = vld [vmem:[%s0 + $0x15c] sm:$0xff]
  %v70 = vld [vmem:[%s0 + $0x164] sm:$0xf]
  %v71 = vld [vmem:[%s0 + $0x168] sm:$0xff]
  %v72 = vld [vmem:[%s0 + $0x170] sm:$0xf]
  %v73 = vld [vmem:[%s0 + $0x174] sm:$0xff]
  %v74 = vld [vmem:[%s0 + $0x17c] sm:$0xf]
  %v75 = vld [vmem:[%s1] sm:$0xf]
  %v76 = vld [vmem:[%s1 + $0x4] sm:$0xf]
  %v77 = vld [vmem:[%s1 + $0x8] sm:$0xf]
  %v78 = vld [vmem:[%s1 + $0xc] sm:$0xf]
  %v79 = vld [vmem:[%s1 + $0x10] sm:$0xf]
  %v80 = vld [vmem:[%s1 + $0x14] sm:$0xf]
  %v81 = vld [vmem:[%s1 + $0x18] sm:$0xf]
  %v82 = vld [vmem:[%s1 + $0x1c] sm:$0xf]
  %v83 = vld [vmem:[%s1 + $0x20] sm:$0xf]
  %v84 = vld [vmem:[%s1 + $0x24] sm:$0xf]
  %v85 = vld [vmem:[%s1 + $0x28] sm:$0xf]
  %v86 = vld [vmem:[%s1 + $0x2c] sm:$0xf]
  %v87 = vld [vmem:[%s1 + $0x30] sm:$0xf]
  %v88 = vld [vmem:[%s1 + $0x34] sm:$0xf]
  %v89 = vld [vmem:[%s1 + $0x38] sm:$0xf]
  %v90 = vld [vmem:[%s1 + $0x3c] sm:$0xf]
  %v91 = vld [vmem:[%s1 + $0x40] sm:$0xf]
  %v92 = vld [vmem:[%s1 + $0x44] sm:$0xf]
  %v93 = vld [vmem:[%s1 + $0x48] sm:$0xf]
  %v94 = vld [vmem:[%s1 + $0x4c] sm:$0xf]
  %v95 = vld [vmem:[%s1 + $0x50] sm:$0xf]
  %v96 = vld [vmem:[%s1 + $0x54] sm:$0xf]
  %v97 = vld [vmem:[%s1 + $0x58] sm:$0xf]
  %v98 = vld [vmem:[%s1 + $0x5c] sm:$0xf]
  %v99 = vld [vmem:[%s1 + $0x60] sm:$0xf]
  %v100 = vld [vmem:[%s1 + $0x64] sm:$0xf]
  %v101 = vld [vmem:[%s1 + $0x68] sm:$0xf]
  %v102 = vld [vmem:[%s1 + $0x6c] sm:$0xf]
  %v103 = vld [vmem:[%s1 + $0x70] sm:$0xf]
  %v104 = vld [vmem:[%s1 + $0x74] sm:$0xf]
  %v105 = vld [vmem:[%s1 + $0x78] sm:$0xf]
  %v106 = vld [vmem:[%s1 + $0x7c] sm:$0xf]
  %v107 = vld [vmem:[%s1 + $0x80] sm:$0xf]
  %v108 = vld [vmem:[%s1 + $0x84] sm:$0xf]
  %v109 = vld [vmem:[%s1 + $0x88] sm:$0xf]
  %v110 = vld [vmem:[%s1 + $0x8c] sm:$0xf]
  %v111 = vld [vmem:[%s1 + $0x90] sm:$0xf]
  %v112 = vld [vmem:[%s1 + $0x94] sm:$0xf]
  %v113 = vld [vmem:[%s1 + $0x98] sm:$0xf]
  %v114 = vld [vmem:[%s1 + $0x9c] sm:$0xf]
  %v115 = vld [vmem:[%s1 + $0xa0] sm:$0xf]
  %v116 = vld [vmem:[%s1 + $0xa4] sm:$0xf]
  %v117 = vld [vmem:[%s1 + $0xa8] sm:$0xf]
  %v118 = vld [vmem:[%s1 + $0xac] sm:$0xf]
  %v119 = vld [vmem:[%s1 + $0xb0] sm:$0xf]
  %v120 = vld [vmem:[%s1 + $0xb4] sm:$0xf]
  %v121 = vld [vmem:[%s1 + $0xb8] sm:$0xf]
  %v122 = vld [vmem:[%s1 + $0xbc] sm:$0xf]
  %v187 = vunpack.c.l.b16 %v11
  %v188 = vunpack.c.h.b16 %v11
  %v189 = vunpack.c.l.b16 %v12
  %v190 = vunpack.c.l.b16 %v13
  %v191 = vunpack.c.h.b16 %v13
  %v192 = vunpack.c.l.b16 %v14
  %v193 = vunpack.c.l.b16 %v15
  %v194 = vunpack.c.h.b16 %v15
  %v195 = vunpack.c.l.b16 %v16
  %v196 = vunpack.c.l.b16 %v17
  %v197 = vunpack.c.h.b16 %v17
  %v198 = vunpack.c.l.b16 %v18
  %v199 = vunpack.c.l.b16 %v19
  %v200 = vunpack.c.h.b16 %v19
  %v201 = vunpack.c.l.b16 %v20
  %v202 = vunpack.c.l.b16 %v21
  %v203 = vunpack.c.h.b16 %v21
  %v204 = vunpack.c.l.b16 %v22
  %v205 = vunpack.c.l.b16 %v23
  %v206 = vunpack.c.h.b16 %v23
  %v207 = vunpack.c.l.b16 %v24
  %v208 = vunpack.c.l.b16 %v25
  %v209 = vunpack.c.h.b16 %v25
  %v210 = vunpack.c.l.b16 %v26
  %v211 = vunpack.c.l.b16 %v27
  %v212 = vunpack.c.h.b16 %v27
  %v213 = vunpack.c.l.b16 %v28
  %v214 = vunpack.c.l.b16 %v29
  %v215 = vunpack.c.h.b16 %v29
  %v216 = vunpack.c.l.b16 %v30
  %v217 = vunpack.c.l.b16 %v31
  %v218 = vunpack.c.h.b16 %v31
  %v219 = vunpack.c.l.b16 %v32
  %v220 = vunpack.c.l.b16 %v33
  %v221 = vunpack.c.h.b16 %v33
  %v222 = vunpack.c.l.b16 %v34
  %v223 = vunpack.c.l.b16 %v35
  %v224 = vunpack.c.h.b16 %v35
  %v225 = vunpack.c.l.b16 %v36
  %v226 = vunpack.c.l.b16 %v37
  %v227 = vunpack.c.h.b16 %v37
  %v228 = vunpack.c.l.b16 %v38
  %v229 = vunpack.c.l.b16 %v39
  %v230 = vunpack.c.h.b16 %v39
  %v231 = vunpack.c.l.b16 %v40
  %v232 = vunpack.c.l.b16 %v41
  %v233 = vunpack.c.h.b16 %v41
  %v234 = vunpack.c.l.b16 %v42
  %v235 = vunpack.c.l.b16 %v43
  %v236 = vunpack.c.h.b16 %v43
  %v237 = vunpack.c.l.b16 %v44
  %v238 = vunpack.c.l.b16 %v45
  %v239 = vunpack.c.h.b16 %v45
  %v240 = vunpack.c.l.b16 %v46
  %v241 = vunpack.c.l.b16 %v47
  %v242 = vunpack.c.h.b16 %v47
  %v243 = vunpack.c.l.b16 %v48
  %v244 = vunpack.c.l.b16 %v49
  %v245 = vunpack.c.h.b16 %v49
  %v246 = vunpack.c.l.b16 %v50
  %v247 = vunpack.c.l.b16 %v51
  %v248 = vunpack.c.h.b16 %v51
  %v249 = vunpack.c.l.b16 %v52
  %v250 = vunpack.c.l.b16 %v53
  %v251 = vunpack.c.h.b16 %v53
  %v252 = vunpack.c.l.b16 %v54
  %v253 = vunpack.c.l.b16 %v55
  %v254 = vunpack.c.h.b16 %v55
  %v255 = vunpack.c.l.b16 %v56
  %v256 = vunpack.c.l.b16 %v57
  %v257 = vunpack.c.h.b16 %v57
  %v258 = vunpack.c.l.b16 %v58
  %v259 = vunpack.c.l.b16 %v59
  %v260 = vunpack.c.h.b16 %v59
  %v261 = vunpack.c.l.b16 %v60
  %v262 = vunpack.c.l.b16 %v61
  %v263 = vunpack.c.h.b16 %v61
  %v264 = vunpack.c.l.b16 %v62
  %v265 = vunpack.c.l.b16 %v63
  %v266 = vunpack.c.h.b16 %v63
  %v267 = vunpack.c.l.b16 %v64
  %v268 = vunpack.c.l.b16 %v65
  %v269 = vunpack.c.h.b16 %v65
  %v270 = vunpack.c.l.b16 %v66
  %v271 = vunpack.c.l.b16 %v67
  %v272 = vunpack.c.h.b16 %v67
  %v273 = vunpack.c.l.b16 %v68
  %v274 = vunpack.c.l.b16 %v69
  %v275 = vunpack.c.h.b16 %v69
  %v276 = vunpack.c.l.b16 %v70
  %v277 = vunpack.c.l.b16 %v71
  %v278 = vunpack.c.h.b16 %v71
  %v279 = vunpack.c.l.b16 %v72
  %v280 = vunpack.c.l.b16 %v73
  %v281 = vunpack.c.h.b16 %v73
  %v282 = vunpack.c.l.b16 %v74
  %v283 = vpack.c.b16 %v190, %v187
  %v284 = vpack.c.b16 %v191, %v188
  %v285 = vpack.c.b16 %v192, %v189
  %v286 = vpack.c.b16 %v196, %v193
  %v287 = vpack.c.b16 %v197, %v194
  %v288 = vpack.c.b16 %v198, %v195
  %v289 = vpack.c.b16 %v202, %v199
  %v290 = vpack.c.b16 %v203, %v200
  %v291 = vpack.c.b16 %v204, %v201
  %v292 = vpack.c.b16 %v208, %v205
  %v293 = vpack.c.b16 %v209, %v206
  %v294 = vpack.c.b16 %v210, %v207
  %v295 = vpack.c.b16 %v214, %v211
  %v296 = vpack.c.b16 %v215, %v212
  %v297 = vpack.c.b16 %v216, %v213
  %v298 = vpack.c.b16 %v220, %v217
  %v299 = vpack.c.b16 %v221, %v218
  %v300 = vpack.c.b16 %v222, %v219
  %v301 = vpack.c.b16 %v226, %v223
  %v302 = vpack.c.b16 %v227, %v224
  %v303 = vpack.c.b16 %v228, %v225
  %v304 = vpack.c.b16 %v232, %v229
  %v305 = vpack.c.b16 %v233, %v230
  %v306 = vpack.c.b16 %v234, %v231
  %v307 = vpack.c.b16 %v238, %v235
  %v308 = vpack.c.b16 %v239, %v236
  %v309 = vpack.c.b16 %v240, %v237
  %v310 = vpack.c.b16 %v244, %v241
  %v311 = vpack.c.b16 %v245, %v242
  %v312 = vpack.c.b16 %v246, %v243
  %v313 = vpack.c.b16 %v250, %v247
  %v314 = vpack.c.b16 %v251, %v248
  %v315 = vpack.c.b16 %v252, %v249
  %v316 = vpack.c.b16 %v256, %v253
  %v317 = vpack.c.b16 %v257, %v254
  %v318 = vpack.c.b16 %v258, %v255
  %v319 = vpack.c.b16 %v262, %v259
  %v320 = vpack.c.b16 %v263, %v260
  %v321 = vpack.c.b16 %v264, %v261
  %v322 = vpack.c.b16 %v268, %v265
  %v323 = vpack.c.b16 %v269, %v266
  %v324 = vpack.c.b16 %v270, %v267
  %v325 = vpack.c.b16 %v274, %v271
  %v326 = vpack.c.b16 %v275, %v272
  %v327 = vpack.c.b16 %v276, %v273
  %v328 = vpack.c.b16 %v280, %v277
  %v329 = vpack.c.b16 %v281, %v278
  %v330 = vpack.c.b16 %v282, %v279
  %v427 = vunpack.c.l.b16 %v75
  %v428 = vunpack.c.l.b16 %v76
  %v429 = vunpack.c.l.b16 %v77
  %v430 = vunpack.c.l.b16 %v78
  %v431 = vunpack.c.l.b16 %v79
  %v432 = vunpack.c.l.b16 %v80
  %v433 = vunpack.c.l.b16 %v81
  %v434 = vunpack.c.l.b16 %v82
  %v435 = vunpack.c.l.b16 %v83
  %v436 = vunpack.c.l.b16 %v84
  %v437 = vunpack.c.l.b16 %v85
  %v438 = vunpack.c.l.b16 %v86
  %v439 = vunpack.c.l.b16 %v87
  %v440 = vunpack.c.l.b16 %v88
  %v441 = vunpack.c.l.b16 %v89
  %v442 = vunpack.c.l.b16 %v90
  %v443 = vunpack.c.l.b16 %v91
  %v444 = vunpack.c.l.b16 %v92
  %v445 = vunpack.c.l.b16 %v93
  %v446 = vunpack.c.l.b16 %v94
  %v447 = vunpack.c.l.b16 %v95
  %v448 = vunpack.c.l.b16 %v96
  %v449 = vunpack.c.l.b16 %v97
  %v450 = vunpack.c.l.b16 %v98
  %v451 = vunpack.c.l.b16 %v99
  %v452 = vunpack.c.l.b16 %v100
  %v453 = vunpack.c.l.b16 %v101
  %v454 = vunpack.c.l.b16 %v102
  %v455 = vunpack.c.l.b16 %v103
  %v456 = vunpack.c.l.b16 %v104
  %v457 = vunpack.c.l.b16 %v105
  %v458 = vunpack.c.l.b16 %v106
  %v459 = vunpack.c.l.b16 %v107
  %v460 = vunpack.c.l.b16 %v108
  %v461 = vunpack.c.l.b16 %v109
  %v462 = vunpack.c.l.b16 %v110
  %v463 = vunpack.c.l.b16 %v111
  %v464 = vunpack.c.l.b16 %v112
  %v465 = vunpack.c.l.b16 %v113
  %v466 = vunpack.c.l.b16 %v114
  %v467 = vunpack.c.l.b16 %v115
  %v468 = vunpack.c.l.b16 %v116
  %v469 = vunpack.c.l.b16 %v117
  %v470 = vunpack.c.l.b16 %v118
  %v471 = vunpack.c.l.b16 %v119
  %v472 = vunpack.c.l.b16 %v120
  %v473 = vunpack.c.l.b16 %v121
  %v474 = vunpack.c.l.b16 %v122
  %v475 = vpack.c.b16 %v428, %v427
  %v476 = vpack.c.b16 %v430, %v429
  %v477 = vpack.c.b16 %v432, %v431
  %v478 = vpack.c.b16 %v434, %v433
  %v479 = vpack.c.b16 %v436, %v435
  %v480 = vpack.c.b16 %v438, %v437
  %v481 = vpack.c.b16 %v440, %v439
  %v482 = vpack.c.b16 %v442, %v441
  %v483 = vpack.c.b16 %v444, %v443
  %v484 = vpack.c.b16 %v446, %v445
  %v485 = vpack.c.b16 %v448, %v447
  %v486 = vpack.c.b16 %v450, %v449
  %v487 = vpack.c.b16 %v452, %v451
  %v488 = vpack.c.b16 %v454, %v453
  %v489 = vpack.c.b16 %v456, %v455
  %v490 = vpack.c.b16 %v458, %v457
  %v491 = vpack.c.b16 %v460, %v459
  %v492 = vpack.c.b16 %v462, %v461
  %v493 = vpack.c.b16 %v464, %v463
  %v494 = vpack.c.b16 %v466, %v465
  %v495 = vpack.c.b16 %v468, %v467
  %v496 = vpack.c.b16 %v470, %v469
  %v497 = vpack.c.b16 %v472, %v471
  %v498 = vpack.c.b16 %v474, %v473
  %523 = vmatpush.bf16.msra.mxu0 %v482
  %524 = vmatpush.bf16.msra.mxu0 %v481
  %525 = vmatpush.bf16.msra.mxu0 %v480
  %526 = vmatpush.bf16.msra.mxu0 %v479
  %527 = vmatpush.bf16.msra.mxu0 %v478
  %528 = vmatpush.bf16.msra.mxu0 %v477
  %529 = vmatpush.bf16.msra.mxu0 %v476
  %530 = vmatpush.bf16.msra.mxu0 %v475
  %531 = vmatmul.bf16.gmra.mxu0 %v283
  %v532 = vpop.f32.mrf.mxu0
  %v533 = vadd.f32 0.0, %v532
  %v534 = vpop.f32.mrf.mxu0
  %v535 = vadd.f32 0.0, %v534
  %536 = vmatmul.bf16.gmra.mxu0 %v286
  %v537 = vpop.f32.mrf.mxu0
  %v538 = vadd.f32 0.0, %v537
  %v539 = vpop.f32.mrf.mxu0
  %v540 = vadd.f32 0.0, %v539
  %541 = vmatmul.bf16.gmra.mxu0 %v289
  %v542 = vpop.f32.mrf.mxu0
  %v543 = vadd.f32 0.0, %v542
  %v544 = vpop.f32.mrf.mxu0
  %v545 = vadd.f32 0.0, %v544
  %546 = vmatmul.bf16.gmra.mxu0 %v292
  %v547 = vpop.f32.mrf.mxu0
  %v548 = vadd.f32 0.0, %v547
  %v549 = vpop.f32.mrf.mxu0
  %v550 = vadd.f32 0.0, %v549
  %551 = vmatmul.bf16.gmra.mxu0 %v295
  %v552 = vpop.f32.mrf.mxu0
  %v553 = vadd.f32 0.0, %v552
  %v554 = vpop.f32.mrf.mxu0
  %v555 = vadd.f32 0.0, %v554
  %556 = vmatmul.bf16.gmra.mxu0 %v298
  %v557 = vpop.f32.mrf.mxu0
  %v558 = vadd.f32 0.0, %v557
  %v559 = vpop.f32.mrf.mxu0
  %v560 = vadd.f32 0.0, %v559
  %561 = vmatmul.bf16.gmra.mxu0 %v301
  %v562 = vpop.f32.mrf.mxu0
  %v563 = vadd.f32 0.0, %v562
  %v564 = vpop.f32.mrf.mxu0
  %v565 = vadd.f32 0.0, %v564
  %566 = vmatmul.bf16.gmra.mxu0 %v304
  %v567 = vpop.f32.mrf.mxu0
  %v568 = vadd.f32 0.0, %v567
  %v569 = vpop.f32.mrf.mxu0
  %v570 = vadd.f32 0.0, %v569
  %571 = vmatmul.bf16.gmra.mxu0 %v307
  %v572 = vpop.f32.mrf.mxu0
  %v573 = vadd.f32 0.0, %v572
  %v574 = vpop.f32.mrf.mxu0
  %v575 = vadd.f32 0.0, %v574
  %576 = vmatmul.bf16.gmra.mxu0 %v310
  %v577 = vpop.f32.mrf.mxu0
  %v578 = vadd.f32 0.0, %v577
  %v579 = vpop.f32.mrf.mxu0
  %v580 = vadd.f32 0.0, %v579
  %581 = vmatmul.bf16.gmra.mxu0 %v313
  %v582 = vpop.f32.mrf.mxu0
  %v583 = vadd.f32 0.0, %v582
  %v584 = vpop.f32.mrf.mxu0
  %v585 = vadd.f32 0.0, %v584
  %586 = vmatmul.bf16.gmra.mxu0 %v316
  %v587 = vpop.f32.mrf.mxu0
  %v588 = vadd.f32 0.0, %v587
  %v589 = vpop.f32.mrf.mxu0
  %v590 = vadd.f32 0.0, %v589
  %591 = vmatmul.bf16.gmra.mxu0 %v319
  %v592 = vpop.f32.mrf.mxu0
  %v593 = vadd.f32 0.0, %v592
  %v594 = vpop.f32.mrf.mxu0
  %v595 = vadd.f32 0.0, %v594
  %596 = vmatmul.bf16.gmra.mxu0 %v322
  %v597 = vpop.f32.mrf.mxu0
  %v598 = vadd.f32 0.0, %v597
  %v599 = vpop.f32.mrf.mxu0
  %v600 = vadd.f32 0.0, %v599
  %601 = vmatmul.bf16.gmra.mxu0 %v325
  %v602 = vpop.f32.mrf.mxu0
  %v603 = vadd.f32 0.0, %v602
  %v604 = vpop.f32.mrf.mxu0
  %v605 = vadd.f32 0.0, %v604
  %606 = vmatmul.bf16.gmra.mxu0 %v328
  %v607 = vpop.f32.mrf.mxu0
  %v608 = vadd.f32 0.0, %v607
  %v609 = vpop.f32.mrf.mxu0
  %v610 = vadd.f32 0.0, %v609
  %611 = vdwg.mxu0
  %612 = vmatpush.bf16.msra.mxu0 %v490
  %613 = vmatpush.bf16.msra.mxu0 %v489
  %614 = vmatpush.bf16.msra.mxu0 %v488
  %615 = vmatpush.bf16.msra.mxu0 %v487
  %616 = vmatpush.bf16.msra.mxu0 %v486
  %617 = vmatpush.bf16.msra.mxu0 %v485
  %618 = vmatpush.bf16.msra.mxu0 %v484
  %619 = vmatpush.bf16.msra.mxu0 %v483
  %620 = vmatmul.bf16.gmra.mxu0 %v284
  %v621 = vpop.f32.mrf.mxu0
  %v622 = vadd.f32 %v533, %v621
  %v623 = vpop.f32.mrf.mxu0
  %v624 = vadd.f32 %v535, %v623
  %625 = vmatmul.bf16.gmra.mxu0 %v287
  %v626 = vpop.f32.mrf.mxu0
  %v627 = vadd.f32 %v538, %v626
  %v628 = vpop.f32.mrf.mxu0
  %v629 = vadd.f32 %v540, %v628
  %630 = vmatmul.bf16.gmra.mxu0 %v290
  %v631 = vpop.f32.mrf.mxu0
  %v632 = vadd.f32 %v543, %v631
  %v633 = vpop.f32.mrf.mxu0
  %v634 = vadd.f32 %v545, %v633
  %635 = vmatmul.bf16.gmra.mxu0 %v293
  %v636 = vpop.f32.mrf.mxu0
  %v637 = vadd.f32 %v548, %v636
  %v638 = vpop.f32.mrf.mxu0
  %v639 = vadd.f32 %v550, %v638
  %640 = vmatmul.bf16.gmra.mxu0 %v296
  %v641 = vpop.f32.mrf.mxu0
  %v642 = vadd.f32 %v553, %v641
  %v643 = vpop.f32.mrf.mxu0
  %v644 = vadd.f32 %v555, %v643
  %645 = vmatmul.bf16.gmra.mxu0 %v299
  %v646 = vpop.f32.mrf.mxu0
  %v647 = vadd.f32 %v558, %v646
  %v648 = vpop.f32.mrf.mxu0
  %v649 = vadd.f32 %v560, %v648
  %650 = vmatmul.bf16.gmra.mxu0 %v302
  %v651 = vpop.f32.mrf.mxu0
  %v652 = vadd.f32 %v563, %v651
  %v653 = vpop.f32.mrf.mxu0
  %v654 = vadd.f32 %v565, %v653
  %655 = vmatmul.bf16.gmra.mxu0 %v305
  %v656 = vpop.f32.mrf.mxu0
  %v657 = vadd.f32 %v568, %v656
  %v658 = vpop.f32.mrf.mxu0
  %v659 = vadd.f32 %v570, %v658
  %660 = vmatmul.bf16.gmra.mxu0 %v308
  %v661 = vpop.f32.mrf.mxu0
  %v662 = vadd.f32 %v573, %v661
  %v663 = vpop.f32.mrf.mxu0
  %v664 = vadd.f32 %v575, %v663
  %665 = vmatmul.bf16.gmra.mxu0 %v311
  %v666 = vpop.f32.mrf.mxu0
  %v667 = vadd.f32 %v578, %v666
  %v668 = vpop.f32.mrf.mxu0
  %v669 = vadd.f32 %v580, %v668
  %670 = vmatmul.bf16.gmra.mxu0 %v314
  %v671 = vpop.f32.mrf.mxu0
  %v672 = vadd.f32 %v583, %v671
  %v673 = vpop.f32.mrf.mxu0
  %v674 = vadd.f32 %v585, %v673
  %675 = vmatmul.bf16.gmra.mxu0 %v317
  %v676 = vpop.f32.mrf.mxu0
  %v677 = vadd.f32 %v588, %v676
  %v678 = vpop.f32.mrf.mxu0
  %v679 = vadd.f32 %v590, %v678
  %680 = vmatmul.bf16.gmra.mxu0 %v320
  %v681 = vpop.f32.mrf.mxu0
  %v682 = vadd.f32 %v593, %v681
  %v683 = vpop.f32.mrf.mxu0
  %v684 = vadd.f32 %v595, %v683
  %685 = vmatmul.bf16.gmra.mxu0 %v323
  %v686 = vpop.f32.mrf.mxu0
  %v687 = vadd.f32 %v598, %v686
  %v688 = vpop.f32.mrf.mxu0
  %v689 = vadd.f32 %v600, %v688
  %690 = vmatmul.bf16.gmra.mxu0 %v326
  %v691 = vpop.f32.mrf.mxu0
  %v692 = vadd.f32 %v603, %v691
  %v693 = vpop.f32.mrf.mxu0
  %v694 = vadd.f32 %v605, %v693
  %695 = vmatmul.bf16.gmra.mxu0 %v329
  %v696 = vpop.f32.mrf.mxu0
  %v697 = vadd.f32 %v608, %v696
  %v698 = vpop.f32.mrf.mxu0
  %v699 = vadd.f32 %v610, %v698
  %700 = vdwg.mxu0
  %701 = vmatpush.bf16.msra.mxu0 %v498
  %702 = vmatpush.bf16.msra.mxu0 %v497
  %703 = vmatpush.bf16.msra.mxu0 %v496
  %704 = vmatpush.bf16.msra.mxu0 %v495
  %705 = vmatpush.bf16.msra.mxu0 %v494
  %706 = vmatpush.bf16.msra.mxu0 %v493
  %707 = vmatpush.bf16.msra.mxu0 %v492
  %708 = vmatpush.bf16.msra.mxu0 %v491
  %709 = vmatmul.bf16.gmra.mxu0 %v285
  %v710 = vpop.f32.mrf.mxu0
  %v711 = vadd.f32 %v622, %v710
  %v712 = vpop.f32.mrf.mxu0
  %v713 = vadd.f32 %v624, %v712
  %714 = vmatmul.bf16.gmra.mxu0 %v288
  %v715 = vpop.f32.mrf.mxu0
  %v716 = vadd.f32 %v627, %v715
  %v717 = vpop.f32.mrf.mxu0
  %v718 = vadd.f32 %v629, %v717
  %719 = vmatmul.bf16.gmra.mxu0 %v291
  %v720 = vpop.f32.mrf.mxu0
  %v721 = vadd.f32 %v632, %v720
  %v722 = vpop.f32.mrf.mxu0
  %v723 = vadd.f32 %v634, %v722
  %724 = vmatmul.bf16.gmra.mxu0 %v294
  %v725 = vpop.f32.mrf.mxu0
  %v726 = vadd.f32 %v637, %v725
  %v727 = vpop.f32.mrf.mxu0
  %v728 = vadd.f32 %v639, %v727
  %729 = vmatmul.bf16.gmra.mxu0 %v297
  %v730 = vpop.f32.mrf.mxu0
  %v731 = vadd.f32 %v642, %v730
  %v732 = vpop.f32.mrf.mxu0
  %v733 = vadd.f32 %v644, %v732
  %734 = vmatmul.bf16.gmra.mxu0 %v300
  %v735 = vpop.f32.mrf.mxu0
  %v736 = vadd.f32 %v647, %v735
  %v737 = vpop.f32.mrf.mxu0
  %v738 = vadd.f32 %v649, %v737
  %739 = vmatmul.bf16.gmra.mxu0 %v303
  %v740 = vpop.f32.mrf.mxu0
  %v741 = vadd.f32 %v652, %v740
  %v742 = vpop.f32.mrf.mxu0
  %v743 = vadd.f32 %v654, %v742
  %744 = vmatmul.bf16.gmra.mxu0 %v306
  %v745 = vpop.f32.mrf.mxu0
  %v746 = vadd.f32 %v657, %v745
  %v747 = vpop.f32.mrf.mxu0
  %v748 = vadd.f32 %v659, %v747
  %749 = vmatmul.bf16.gmra.mxu0 %v309
  %v750 = vpop.f32.mrf.mxu0
  %v751 = vadd.f32 %v662, %v750
  %v752 = vpop.f32.mrf.mxu0
  %v753 = vadd.f32 %v664, %v752
  %754 = vmatmul.bf16.gmra.mxu0 %v312
  %v755 = vpop.f32.mrf.mxu0
  %v756 = vadd.f32 %v667, %v755
  %v757 = vpop.f32.mrf.mxu0
  %v758 = vadd.f32 %v669, %v757
  %759 = vmatmul.bf16.gmra.mxu0 %v315
  %v760 = vpop.f32.mrf.mxu0
  %v761 = vadd.f32 %v672, %v760
  %v762 = vpop.f32.mrf.mxu0
  %v763 = vadd.f32 %v674, %v762
  %764 = vmatmul.bf16.gmra.mxu0 %v318
  %v765 = vpop.f32.mrf.mxu0
  %v766 = vadd.f32 %v677, %v765
  %v767 = vpop.f32.mrf.mxu0
  %v768 = vadd.f32 %v679, %v767
  %769 = vmatmul.bf16.gmra.mxu0 %v321
  %v770 = vpop.f32.mrf.mxu0
  %v771 = vadd.f32 %v682, %v770
  %v772 = vpop.f32.mrf.mxu0
  %v773 = vadd.f32 %v684, %v772
  %774 = vmatmul.bf16.gmra.mxu0 %v324
  %v775 = vpop.f32.mrf.mxu0
  %v776 = vadd.f32 %v687, %v775
  %v777 = vpop.f32.mrf.mxu0
  %v778 = vadd.f32 %v689, %v777
  %779 = vmatmul.bf16.gmra.mxu0 %v327
  %v780 = vpop.f32.mrf.mxu0
  %v781 = vadd.f32 %v692, %v780
  %v782 = vpop.f32.mrf.mxu0
  %v783 = vadd.f32 %v694, %v782
  %784 = vmatmul.bf16.gmra.mxu0 %v330
  %v785 = vpop.f32.mrf.mxu0
  %v786 = vadd.f32 %v697, %v785
  %v787 = vpop.f32.mrf.mxu0
  %v788 = vadd.f32 %v699, %v787
  %789 = vdwg.mxu0
  %vm790 = vcmp.ge.f32.partialorder %v711, 0.0
  %vm791 = vcmp.ge.f32.partialorder %v713, 0.0
  %vm792 = vcmp.ge.f32.partialorder %v716, 0.0
  %vm793 = vcmp.ge.f32.partialorder %v718, 0.0
  %vm794 = vcmp.ge.f32.partialorder %v721, 0.0
  %vm795 = vcmp.ge.f32.partialorder %v723, 0.0
  %vm796 = vcmp.ge.f32.partialorder %v726, 0.0
  %vm797 = vcmp.ge.f32.partialorder %v728, 0.0
  %vm798 = vcmp.ge.f32.partialorder %v731, 0.0
  %vm799 = vcmp.ge.f32.partialorder %v733, 0.0
  %vm800 = vcmp.ge.f32.partialorder %v736, 0.0
  %vm801 = vcmp.ge.f32.partialorder %v738, 0.0
  %vm802 = vcmp.ge.f32.partialorder %v741, 0.0
  %vm803 = vcmp.ge.f32.partialorder %v743, 0.0
  %vm804 = vcmp.ge.f32.partialorder %v746, 0.0
  %vm805 = vcmp.ge.f32.partialorder %v748, 0.0
  %vm806 = vcmp.ge.f32.partialorder %v751, 0.0
  %vm807 = vcmp.ge.f32.partialorder %v753, 0.0
  %vm808 = vcmp.ge.f32.partialorder %v756, 0.0
  %vm809 = vcmp.ge.f32.partialorder %v758, 0.0
  %vm810 = vcmp.ge.f32.partialorder %v761, 0.0
  %vm811 = vcmp.ge.f32.partialorder %v763, 0.0
  %vm812 = vcmp.ge.f32.partialorder %v766, 0.0
  %vm813 = vcmp.ge.f32.partialorder %v768, 0.0
  %vm814 = vcmp.ge.f32.partialorder %v771, 0.0
  %vm815 = vcmp.ge.f32.partialorder %v773, 0.0
  %vm816 = vcmp.ge.f32.partialorder %v776, 0.0
  %vm817 = vcmp.ge.f32.partialorder %v778, 0.0
  %vm818 = vcmp.ge.f32.partialorder %v781, 0.0
  %vm819 = vcmp.ge.f32.partialorder %v783, 0.0
  %vm820 = vcmp.ge.f32.partialorder %v786, 0.0
  %vm821 = vcmp.ge.f32.partialorder %v788, 0.0
  %v822 = vmul.f32 %v711, 0.2
  %v823 = vmul.f32 %v713, 0.2
  %v824 = vmul.f32 %v716, 0.2
  %v825 = vmul.f32 %v718, 0.2
  %v826 = vmul.f32 %v721, 0.2
  %v827 = vmul.f32 %v723, 0.2
  %v828 = vmul.f32 %v726, 0.2
  %v829 = vmul.f32 %v728, 0.2
  %v830 = vmul.f32 %v731, 0.2
  %v831 = vmul.f32 %v733, 0.2
  %v832 = vmul.f32 %v736, 0.2
  %v833 = vmul.f32 %v738, 0.2
  %v834 = vmul.f32 %v741, 0.2
  %v835 = vmul.f32 %v743, 0.2
  %v836 = vmul.f32 %v746, 0.2
  %v837 = vmul.f32 %v748, 0.2
  %v838 = vmul.f32 %v751, 0.2
  %v839 = vmul.f32 %v753, 0.2
  %v840 = vmul.f32 %v756, 0.2
  %v841 = vmul.f32 %v758, 0.2
  %v842 = vmul.f32 %v761, 0.2
  %v843 = vmul.f32 %v763, 0.2
  %v844 = vmul.f32 %v766, 0.2
  %v845 = vmul.f32 %v768, 0.2
  %v846 = vmul.f32 %v771, 0.2
  %v847 = vmul.f32 %v773, 0.2
  %v848 = vmul.f32 %v776, 0.2
  %v849 = vmul.f32 %v778, 0.2
  %v850 = vmul.f32 %v781, 0.2
  %v851 = vmul.f32 %v783, 0.2
  %v852 = vmul.f32 %v786, 0.2
  %v853 = vmul.f32 %v788, 0.2
  %v854 = vsel %vm790, %v711, %v822
  %v855 = vsel %vm791, %v713, %v823
  %v856 = vsel %vm792, %v716, %v824
  %v857 = vsel %vm793, %v718, %v825
  %v858 = vsel %vm794, %v721, %v826
  %v859 = vsel %vm795, %v723, %v827
  %v860 = vsel %vm796, %v726, %v828
  %v861 = vsel %vm797, %v728, %v829
  %v862 = vsel %vm798, %v731, %v830
  %v863 = vsel %vm799, %v733, %v831
  %v864 = vsel %vm800, %v736, %v832
  %v865 = vsel %vm801, %v738, %v833
  %v866 = vsel %vm802, %v741, %v834
  %v867 = vsel %vm803, %v743, %v835
  %v868 = vsel %vm804, %v746, %v836
  %v869 = vsel %vm805, %v748, %v837
  %v870 = vsel %vm806, %v751, %v838
  %v871 = vsel %vm807, %v753, %v839
  %v872 = vsel %vm808, %v756, %v840
  %v873 = vsel %vm809, %v758, %v841
  %v874 = vsel %vm810, %v761, %v842
  %v875 = vsel %vm811, %v763, %v843
  %v876 = vsel %vm812, %v766, %v844
  %v877 = vsel %vm813, %v768, %v845
  %v878 = vsel %vm814, %v771, %v846
  %v879 = vsel %vm815, %v773, %v847
  %v880 = vsel %vm816, %v776, %v848
  %v881 = vsel %vm817, %v778, %v849
  %v882 = vsel %vm818, %v781, %v850
  %v883 = vsel %vm819, %v783, %v851
  %v884 = vsel %vm820, %v786, %v852
  %v885 = vsel %vm821, %v788, %v853
  %v886 = vpack.c.bf16 %v854, %v854
  %v887 = vpack.c.bf16 %v855, %v855
  %v888 = vpack.c.bf16 %v856, %v856
  %v889 = vpack.c.bf16 %v857, %v857
  %v890 = vpack.c.bf16 %v858, %v858
  %v891 = vpack.c.bf16 %v859, %v859
  %v892 = vpack.c.bf16 %v860, %v860
  %v893 = vpack.c.bf16 %v861, %v861
  %v894 = vpack.c.bf16 %v862, %v862
  %v895 = vpack.c.bf16 %v863, %v863
  %v896 = vpack.c.bf16 %v864, %v864
  %v897 = vpack.c.bf16 %v865, %v865
  %v898 = vpack.c.bf16 %v866, %v866
  %v899 = vpack.c.bf16 %v867, %v867
  %v900 = vpack.c.bf16 %v868, %v868
  %v901 = vpack.c.bf16 %v869, %v869
  %v902 = vpack.c.bf16 %v870, %v870
  %v903 = vpack.c.bf16 %v871, %v871
  %v904 = vpack.c.bf16 %v872, %v872
  %v905 = vpack.c.bf16 %v873, %v873
  %v906 = vpack.c.bf16 %v874, %v874
  %v907 = vpack.c.bf16 %v875, %v875
  %v908 = vpack.c.bf16 %v876, %v876
  %v909 = vpack.c.bf16 %v877, %v877
  %v910 = vpack.c.bf16 %v878, %v878
  %v911 = vpack.c.bf16 %v879, %v879
  %v912 = vpack.c.bf16 %v880, %v880
  %v913 = vpack.c.bf16 %v881, %v881
  %v914 = vpack.c.bf16 %v882, %v882
  %v915 = vpack.c.bf16 %v883, %v883
  %v916 = vpack.c.bf16 %v884, %v884
  %v917 = vpack.c.bf16 %v885, %v885
  %918 = vst [vmem:[%s2] sm:$0xf] %v886
  %919 = vst [vmem:[%s2 + $0x4] sm:$0xf] %v887
  %920 = vst [vmem:[%s2 + $0x8] sm:$0xf] %v888
  %921 = vst [vmem:[%s2 + $0xc] sm:$0xf] %v889
  %922 = vst [vmem:[%s2 + $0x10] sm:$0xf] %v890
  %923 = vst [vmem:[%s2 + $0x14] sm:$0xf] %v891
  %924 = vst [vmem:[%s2 + $0x18] sm:$0xf] %v892
  %925 = vst [vmem:[%s2 + $0x1c] sm:$0xf] %v893
  %926 = vst [vmem:[%s2 + $0x20] sm:$0xf] %v894
  %927 = vst [vmem:[%s2 + $0x24] sm:$0xf] %v895
  %928 = vst [vmem:[%s2 + $0x28] sm:$0xf] %v896
  %929 = vst [vmem:[%s2 + $0x2c] sm:$0xf] %v897
  %930 = vst [vmem:[%s2 + $0x30] sm:$0xf] %v898
  %931 = vst [vmem:[%s2 + $0x34] sm:$0xf] %v899
  %932 = vst [vmem:[%s2 + $0x38] sm:$0xf] %v900
  %933 = vst [vmem:[%s2 + $0x3c] sm:$0xf] %v901
  %934 = vst [vmem:[%s2 + $0x40] sm:$0xf] %v902
  %935 = vst [vmem:[%s2 + $0x44] sm:$0xf] %v903
  %936 = vst [vmem:[%s2 + $0x48] sm:$0xf] %v904
  %937 = vst [vmem:[%s2 + $0x4c] sm:$0xf] %v905
  %938 = vst [vmem:[%s2 + $0x50] sm:$0xf] %v906
  %939 = vst [vmem:[%s2 + $0x54] sm:$0xf] %v907
  %940 = vst [vmem:[%s2 + $0x58] sm:$0xf] %v908
  %941 = vst [vmem:[%s2 + $0x5c] sm:$0xf] %v909
  %942 = vst [vmem:[%s2 + $0x60] sm:$0xf] %v910
  %943 = vst [vmem:[%s2 + $0x64] sm:$0xf] %v911
  %944 = vst [vmem:[%s2 + $0x68] sm:$0xf] %v912
  %945 = vst [vmem:[%s2 + $0x6c] sm:$0xf] %v913
  %946 = vst [vmem:[%s2 + $0x70] sm:$0xf] %v914
  %947 = vst [vmem:[%s2 + $0x74] sm:$0xf] %v915
  %948 = vst [vmem:[%s2 + $0x78] sm:$0xf] %v916
  %949 = vst [vmem:[%s2 + $0x7c] sm:$0xf] %v917
  // Predicated region
  $region10: #{stage1_d_img_forward.7} parent=0 // pred_check
    _
  $region11: #{stage1_d_img_forward.7} parent=0 // pred_check_branch
    %951 = sbr.rel (0) target = $region13
  $region12: #{stage1_d_img_forward.7} parent=0 // pred_region
    _
  $region13: #{stage1_d_img_forward.7} parent=0 // pred_fallthru
    _
  // Predicated region
  $region14: #{stage1_d_img_forward.7} parent=0 // pred_check
    _
  $region15: #{stage1_d_img_forward.7} parent=0 // pred_check_branch
    %953 = sbr.rel (0) target = $region17
  $region16: #{stage1_d_img_forward.7} parent=0 // pred_region
    _
  $region17: #{stage1_d_img_forward.7} parent=0 // pred_fallthru
    _

// kernel: stage1_d_img_forward.8
$region0: #{stage1_d_img_forward.8}
  #allocation0 [shape = 'u32[]', space=smem, size = 0x4, offset = 0x4, fixed_abs, tag = 'smem constant byte address 0x4 - core index']
  #allocation1 [shape = 'u32[72,128]{1,0:T(1,128)}', space=vmem, size = 0x9000, scoped, tag = 'internal scratch']
  %s0 = inlined_call_operand.vmem [shape: bf16[128,1024], index: 0, kind: input, shape index: {}]
  %s1 = inlined_call_operand.vmem [shape: bf16[1024,128], index: 1, kind: input, shape index: {}]
  %s2 = inlined_call_operand.vmem [shape: f32[128,128], index: 2, kind: output, shape index: {0}]
  %s3 = inlined_call_operand.vmem [shape: f32[1,1,128], index: 3, kind: output, shape index: {1}]
  %s4 = inlined_call_operand.vmem [shape: f32[1,1,128], index: 4, kind: output, shape index: {2}]
  %5 = xla_tuple %s2, %s3, %s4
  %s6 = sld [smem:[#allocation0]]
  $region34: #{stage1_d_img_forward.8} parent=0
    _
  %s8 = ssub.s32 1, %s6
  %s9 = scalar_select 0, %s8, %s6
  // Predicated region
  $region2: #{stage1_d_img_forward.8} parent=0 // pred_check
    _
  $region3: #{stage1_d_img_forward.8} parent=0 // pred_check_branch
    %11 = sbr.rel (0) target = $region5
  $region4: #{stage1_d_img_forward.8} parent=0 // pred_region
    _
  $region5: #{stage1_d_img_forward.8} parent=0 // pred_fallthru
    _
  // Predicated region
  $region6: #{stage1_d_img_forward.8} parent=0 // pred_check
    _
  $region7: #{stage1_d_img_forward.8} parent=0 // pred_check_branch
    %13 = sbr.rel (0) target = $region9
  $region8: #{stage1_d_img_forward.8} parent=0 // pred_region
    _
  $region9: #{stage1_d_img_forward.8} parent=0 // pred_fallthru
    _
  %v14 = vld [vmem:[%s0] sm:$0xff]
  %v15 = vld [vmem:[%s0 + $0x8] sm:$0xff]
  %v16 = vld [vmem:[%s0 + $0x10] sm:$0xff]
  %v17 = vld [vmem:[%s0 + $0x18] sm:$0xff]
  %v18 = vld [vmem:[%s0 + $0x20] sm:$0xff]
  %v19 = vld [vmem:[%s0 + $0x28] sm:$0xff]
  %v20 = vld [vmem:[%s0 + $0x30] sm:$0xff]
  %v21 = vld [vmem:[%s0 + $0x38] sm:$0xff]
  %v22 = vld [vmem:[%s0 + $0x40] sm:$0xff]
  %v23 = vld [vmem:[%s0 + $0x48] sm:$0xff]
  %v24 = vld [vmem:[%s0 + $0x50] sm:$0xff]
  %v25 = vld [vmem:[%s0 + $0x58] sm:$0xff]
  %v26 = vld [vmem:[%s0 + $0x60] sm:$0xff]
  %v27 = vld [vmem:[%s0 + $0x68] sm:$0xff]
  %v28 = vld [vmem:[%s0 + $0x70] sm:$0xff]
  %v29 = vld [vmem:[%s0 + $0x78] sm:$0xff]
  %v30 = vld [vmem:[%s0 + $0x80] sm:$0xff]
  %v31 = vld [vmem:[%s0 + $0x88] sm:$0xff]
  %v32 = vld [vmem:[%s0 + $0x90] sm:$0xff]
  %v33 = vld [vmem:[%s0 + $0x98] sm:$0xff]
  %v34 = vld [vmem:[%s0 + $0xa0] sm:$0xff]
  %v35 = vld [vmem:[%s0 + $0xa8] sm:$0xff]
  %v36 = vld [vmem:[%s0 + $0xb0] sm:$0xff]
  %v37 = vld [vmem:[%s0 + $0xb8] sm:$0xff]
  %v38 = vld [vmem:[%s0 + $0xc0] sm:$0xff]
  %v39 = vld [vmem:[%s0 + $0xc8] sm:$0xff]
  %v40 = vld [vmem:[%s0 + $0xd0] sm:$0xff]
  %v41 = vld [vmem:[%s0 + $0xd8] sm:$0xff]
  %v42 = vld [vmem:[%s0 + $0xe0] sm:$0xff]
  %v43 = vld [vmem:[%s0 + $0xe8] sm:$0xff]
  %v44 = vld [vmem:[%s0 + $0xf0] sm:$0xff]
  %v45 = vld [vmem:[%s0 + $0xf8] sm:$0xff]
  %v46 = vld [vmem:[%s0 + $0x100] sm:$0xff]
  %v47 = vld [vmem:[%s0 + $0x108] sm:$0xff]
  %v48 = vld [vmem:[%s0 + $0x110] sm:$0xff]
  %v49 = vld [vmem:[%s0 + $0x118] sm:$0xff]
  %v50 = vld [vmem:[%s0 + $0x120] sm:$0xff]
  %v51 = vld [vmem:[%s0 + $0x128] sm:$0xff]
  %v52 = vld [vmem:[%s0 + $0x130] sm:$0xff]
  %v53 = vld [vmem:[%s0 + $0x138] sm:$0xff]
  %v54 = vld [vmem:[%s0 + $0x140] sm:$0xff]
  %v55 = vld [vmem:[%s0 + $0x148] sm:$0xff]
  %v56 = vld [vmem:[%s0 + $0x150] sm:$0xff]
  %v57 = vld [vmem:[%s0 + $0x158] sm:$0xff]
  %v58 = vld [vmem:[%s0 + $0x160] sm:$0xff]
  %v59 = vld [vmem:[%s0 + $0x168] sm:$0xff]
  %v60 = vld [vmem:[%s0 + $0x170] sm:$0xff]
  %v61 = vld [vmem:[%s0 + $0x178] sm:$0xff]
  %v62 = vld [vmem:[%s0 + $0x180] sm:$0xff]
  %v63 = vld [vmem:[%s0 + $0x188] sm:$0xff]
  %v64 = vld [vmem:[%s0 + $0x190] sm:$0xff]
  %v65 = vld [vmem:[%s0 + $0x198] sm:$0xff]
  %v66 = vld [vmem:[%s0 + $0x1a0] sm:$0xff]
  %v67 = vld [vmem:[%s0 + $0x1a8] sm:$0xff]
  %v68 = vld [vmem:[%s0 + $0x1b0] sm:$0xff]
  %v69 = vld [vmem:[%s0 + $0x1b8] sm:$0xff]
  %v70 = vld [vmem:[%s0 + $0x1c0] sm:$0xff]
  %v71 = vld [vmem:[%s0 + $0x1c8] sm:$0xff]
  %v72 = vld [vmem:[%s0 + $0x1d0] sm:$0xff]
  %v73 = vld [vmem:[%s0 + $0x1d8] sm:$0xff]
  %v74 = vld [vmem:[%s0 + $0x1e0] sm:$0xff]
  %v75 = vld [vmem:[%s0 + $0x1e8] sm:$0xff]
  %v76 = vld [vmem:[%s0 + $0x1f0] sm:$0xff]
  %v77 = vld [vmem:[%s0 + $0x1f8] sm:$0xff]
  %v78 = vld [vmem:[%s1] sm:$0xf]
  %v79 = vld [vmem:[%s1 + $0x4] sm:$0xf]
  %v80 = vld [vmem:[%s1 + $0x8] sm:$0xf]
  %v81 = vld [vmem:[%s1 + $0xc] sm:$0xf]
  %v82 = vld [vmem:[%s1 + $0x10] sm:$0xf]
  %v83 = vld [vmem:[%s1 + $0x14] sm:$0xf]
  %v84 = vld [vmem:[%s1 + $0x18] sm:$0xf]
  %v85 = vld [vmem:[%s1 + $0x1c] sm:$0xf]
  %v86 = vld [vmem:[%s1 + $0x20] sm:$0xf]
  %v87 = vld [vmem:[%s1 + $0x24] sm:$0xf]
  %v88 = vld [vmem:[%s1 + $0x28] sm:$0xf]
  %v89 = vld [vmem:[%s1 + $0x2c] sm:$0xf]
  %v90 = vld [vmem:[%s1 + $0x30] sm:$0xf]
  %v91 = vld [vmem:[%s1 + $0x34] sm:$0xf]
  %v92 = vld [vmem:[%s1 + $0x38] sm:$0xf]
  %v93 = vld [vmem:[%s1 + $0x3c] sm:$0xf]
  %v94 = vld [vmem:[%s1 + $0x40] sm:$0xf]
  %v95 = vld [vmem:[%s1 + $0x44] sm:$0xf]
  %v96 = vld [vmem:[%s1 + $0x48] sm:$0xf]
  %v97 = vld [vmem:[%s1 + $0x4c] sm:$0xf]
  %v98 = vld [vmem:[%s1 + $0x50] sm:$0xf]
  %v99 = vld [vmem:[%s1 + $0x54] sm:$0xf]
  %v100 = vld [vmem:[%s1 + $0x58] sm:$0xf]
  %v101 = vld [vmem:[%s1 + $0x5c] sm:$0xf]
  %v102 = vld [vmem:[%s1 + $0x60] sm:$0xf]
  %v103 = vld [vmem:[%s1 + $0x64] sm:$0xf]
  %v104 = vld [vmem:[%s1 + $0x68] sm:$0xf]
  %v105 = vld [vmem:[%s1 + $0x6c] sm:$0xf]
  %v106 = vld [vmem:[%s1 + $0x70] sm:$0xf]
  %v107 = vld [vmem:[%s1 + $0x74] sm:$0xf]
  %v108 = vld [vmem:[%s1 + $0x78] sm:$0xf]
  %v109 = vld [vmem:[%s1 + $0x7c] sm:$0xf]
  %v110 = vld [vmem:[%s1 + $0x80] sm:$0xf]
  %v111 = vld [vmem:[%s1 + $0x84] sm:$0xf]
  %v112 = vld [vmem:[%s1 + $0x88] sm:$0xf]
  %v113 = vld [vmem:[%s1 + $0x8c] sm:$0xf]
  %v114 = vld [vmem:[%s1 + $0x90] sm:$0xf]
  %v115 = vld [vmem:[%s1 + $0x94] sm:$0xf]
  %v116 = vld [vmem:[%s1 + $0x98] sm:$0xf]
  %v117 = vld [vmem:[%s1 + $0x9c] sm:$0xf]
  %v118 = vld [vmem:[%s1 + $0xa0] sm:$0xf]
  %v119 = vld [vmem:[%s1 + $0xa4] sm:$0xf]
  %v120 = vld [vmem:[%s1 + $0xa8] sm:$0xf]
  %v121 = vld [vmem:[%s1 + $0xac] sm:$0xf]
  %v122 = vld [vmem:[%s1 + $0xb0] sm:$0xf]
  %v123 = vld [vmem:[%s1 + $0xb4] sm:$0xf]
  %v124 = vld [vmem:[%s1 + $0xb8] sm:$0xf]
  %v125 = vld [vmem:[%s1 + $0xbc] sm:$0xf]
  %v126 = vld [vmem:[%s1 + $0xc0] sm:$0xf]
  %v127 = vld [vmem:[%s1 + $0xc4] sm:$0xf]
  %v128 = vld [vmem:[%s1 + $0xc8] sm:$0xf]
  %v129 = vld [vmem:[%s1 + $0xcc] sm:$0xf]
  %v130 = vld [vmem:[%s1 + $0xd0] sm:$0xf]
  %v131 = vld [vmem:[%s1 + $0xd4] sm:$0xf]
  %v132 = vld [vmem:[%s1 + $0xd8] sm:$0xf]
  %v133 = vld [vmem:[%s1 + $0xdc] sm:$0xf]
  %v134 = vld [vmem:[%s1 + $0xe0] sm:$0xf]
  %v135 = vld [vmem:[%s1 + $0xe4] sm:$0xf]
  %v136 = vld [vmem:[%s1 + $0xe8] sm:$0xf]
  %v137 = vld [vmem:[%s1 + $0xec] sm:$0xf]
  %v138 = vld [vmem:[%s1 + $0xf0] sm:$0xf]
  %v139 = vld [vmem:[%s1 + $0xf4] sm:$0xf]
  %v140 = vld [vmem:[%s1 + $0xf8] sm:$0xf]
  %v141 = vld [vmem:[%s1 + $0xfc] sm:$0xf]
  %v142 = vld [vmem:[%s1 + $0x100] sm:$0xf]
  %v143 = vld [vmem:[%s1 + $0x104] sm:$0xf]
  %v144 = vld [vmem:[%s1 + $0x108] sm:$0xf]
  %v145 = vld [vmem:[%s1 + $0x10c] sm:$0xf]
  %v146 = vld [vmem:[%s1 + $0x110] sm:$0xf]
  %v147 = vld [vmem:[%s1 + $0x114] sm:$0xf]
  %v148 = vld [vmem:[%s1 + $0x118] sm:$0xf]
  %v149 = vld [vmem:[%s1 + $0x11c] sm:$0xf]
  %v150 = vld [vmem:[%s1 + $0x120] sm:$0xf]
  %v151 = vld [vmem:[%s1 + $0x124] sm:$0xf]
  %v152 = vld [vmem:[%s1 + $0x128] sm:$0xf]
  %v153 = vld [vmem:[%s1 + $0x12c] sm:$0xf]
  %v154 = vld [vmem:[%s1 + $0x130] sm:$0xf]
  %v155 = vld [vmem:[%s1 + $0x134] sm:$0xf]
  %v156 = vld [vmem:[%s1 + $0x138] sm:$0xf]
  %v157 = vld [vmem:[%s1 + $0x13c] sm:$0xf]
  %v158 = vld [vmem:[%s1 + $0x140] sm:$0xf]
  %v159 = vld [vmem:[%s1 + $0x144] sm:$0xf]
  %v160 = vld [vmem:[%s1 + $0x148] sm:$0xf]
  %v161 = vld [vmem:[%s1 + $0x14c] sm:$0xf]
  %v162 = vld [vmem:[%s1 + $0x150] sm:$0xf]
  %v163 = vld [vmem:[%s1 + $0x154] sm:$0xf]
  %v164 = vld [vmem:[%s1 + $0x158] sm:$0xf]
  %v165 = vld [vmem:[%s1 + $0x15c] sm:$0xf]
  %v166 = vld [vmem:[%s1 + $0x160] sm:$0xf]
  %v167 = vld [vmem:[%s1 + $0x164] sm:$0xf]
  %v168 = vld [vmem:[%s1 + $0x168] sm:$0xf]
  %v169 = vld [vmem:[%s1 + $0x16c] sm:$0xf]
  %v170 = vld [vmem:[%s1 + $0x170] sm:$0xf]
  %v171 = vld [vmem:[%s1 + $0x174] sm:$0xf]
  %v172 = vld [vmem:[%s1 + $0x178] sm:$0xf]
  %v173 = vld [vmem:[%s1 + $0x17c] sm:$0xf]
  %v174 = vld [vmem:[%s1 + $0x180] sm:$0xf]
  %v175 = vld [vmem:[%s1 + $0x184] sm:$0xf]
  %v176 = vld [vmem:[%s1 + $0x188] sm:$0xf]
  %v177 = vld [vmem:[%s1 + $0x18c] sm:$0xf]
  %v178 = vld [vmem:[%s1 + $0x190] sm:$0xf]
  %v179 = vld [vmem:[%s1 + $0x194] sm:$0xf]
  %v180 = vld [vmem:[%s1 + $0x198] sm:$0xf]
  %v181 = vld [vmem:[%s1 + $0x19c] sm:$0xf]
  %v182 = vld [vmem:[%s1 + $0x1a0] sm:$0xf]
  %v183 = vld [vmem:[%s1 + $0x1a4] sm:$0xf]
  %v184 = vld [vmem:[%s1 + $0x1a8] sm:$0xf]
  %v185 = vld [vmem:[%s1 + $0x1ac] sm:$0xf]
  %v186 = vld [vmem:[%s1 + $0x1b0] sm:$0xf]
  %v187 = vld [vmem:[%s1 + $0x1b4] sm:$0xf]
  %v188 = vld [vmem:[%s1 + $0x1b8] sm:$0xf]
  %v189 = vld [vmem:[%s1 + $0x1bc] sm:$0xf]
  %v190 = vld [vmem:[%s1 + $0x1c0] sm:$0xf]
  %v191 = vld [vmem:[%s1 + $0x1c4] sm:$0xf]
  %v192 = vld [vmem:[%s1 + $0x1c8] sm:$0xf]
  %v193 = vld [vmem:[%s1 + $0x1cc] sm:$0xf]
  %v194 = vld [vmem:[%s1 + $0x1d0] sm:$0xf]
  %v195 = vld [vmem:[%s1 + $0x1d4] sm:$0xf]
  %v196 = vld [vmem:[%s1 + $0x1d8] sm:$0xf]
  %v197 = vld [vmem:[%s1 + $0x1dc] sm:$0xf]
  %v198 = vld [vmem:[%s1 + $0x1e0] sm:$0xf]
  %v199 = vld [vmem:[%s1 + $0x1e4] sm:$0xf]
  %v200 = vld [vmem:[%s1 + $0x1e8] sm:$0xf]
  %v201 = vld [vmem:[%s1 + $0x1ec] sm:$0xf]
  %v202 = vld [vmem:[%s1 + $0x1f0] sm:$0xf]
  %v203 = vld [vmem:[%s1 + $0x1f4] sm:$0xf]
  %v204 = vld [vmem:[%s1 + $0x1f8] sm:$0xf]
  %v205 = vld [vmem:[%s1 + $0x1fc] sm:$0xf]
  %v270 = vunpack.c.l.b16 %v14
  %v271 = vunpack.c.h.b16 %v14
  %v272 = vunpack.c.l.b16 %v15
  %v273 = vunpack.c.h.b16 %v15
  %v274 = vunpack.c.l.b16 %v16
  %v275 = vunpack.c.h.b16 %v16
  %v276 = vunpack.c.l.b16 %v17
  %v277 = vunpack.c.h.b16 %v17
  %v278 = vunpack.c.l.b16 %v18
  %v279 = vunpack.c.h.b16 %v18
  %v280 = vunpack.c.l.b16 %v19
  %v281 = vunpack.c.h.b16 %v19
  %v282 = vunpack.c.l.b16 %v20
  %v283 = vunpack.c.h.b16 %v20
  %v284 = vunpack.c.l.b16 %v21
  %v285 = vunpack.c.h.b16 %v21
  %v286 = vunpack.c.l.b16 %v22
  %v287 = vunpack.c.h.b16 %v22
  %v288 = vunpack.c.l.b16 %v23
  %v289 = vunpack.c.h.b16 %v23
  %v290 = vunpack.c.l.b16 %v24
  %v291 = vunpack.c.h.b16 %v24
  %v292 = vunpack.c.l.b16 %v25
  %v293 = vunpack.c.h.b16 %v25
  %v294 = vunpack.c.l.b16 %v26
  %v295 = vunpack.c.h.b16 %v26
  %v296 = vunpack.c.l.b16 %v27
  %v297 = vunpack.c.h.b16 %v27
  %v298 = vunpack.c.l.b16 %v28
  %v299 = vunpack.c.h.b16 %v28
  %v300 = vunpack.c.l.b16 %v29
  %v301 = vunpack.c.h.b16 %v29
  %v302 = vunpack.c.l.b16 %v30
  %v303 = vunpack.c.h.b16 %v30
  %v304 = vunpack.c.l.b16 %v31
  %v305 = vunpack.c.h.b16 %v31
  %v306 = vunpack.c.l.b16 %v32
  %v307 = vunpack.c.h.b16 %v32
  %v308 = vunpack.c.l.b16 %v33
  %v309 = vunpack.c.h.b16 %v33
  %v310 = vunpack.c.l.b16 %v34
  %v311 = vunpack.c.h.b16 %v34
  %v312 = vunpack.c.l.b16 %v35
  %v313 = vunpack.c.h.b16 %v35
  %v314 = vunpack.c.l.b16 %v36
  %v315 = vunpack.c.h.b16 %v36
  %v316 = vunpack.c.l.b16 %v37
  %v317 = vunpack.c.h.b16 %v37
  %v318 = vunpack.c.l.b16 %v38
  %v319 = vunpack.c.h.b16 %v38
  %v320 = vunpack.c.l.b16 %v39
  %v321 = vunpack.c.h.b16 %v39
  %v322 = vunpack.c.l.b16 %v40
  %v323 = vunpack.c.h.b16 %v40
  %v324 = vunpack.c.l.b16 %v41
  %v325 = vunpack.c.h.b16 %v41
  %v326 = vunpack.c.l.b16 %v42
  %v327 = vunpack.c.h.b16 %v42
  %v328 = vunpack.c.l.b16 %v43
  %v329 = vunpack.c.h.b16 %v43
  %v330 = vunpack.c.l.b16 %v44
  %v331 = vunpack.c.h.b16 %v44
  %v332 = vunpack.c.l.b16 %v45
  %v333 = vunpack.c.h.b16 %v45
  %v334 = vunpack.c.l.b16 %v46
  %v335 = vunpack.c.h.b16 %v46
  %v336 = vunpack.c.l.b16 %v47
  %v337 = vunpack.c.h.b16 %v47
  %v338 = vunpack.c.l.b16 %v48
  %v339 = vunpack.c.h.b16 %v48
  %v340 = vunpack.c.l.b16 %v49
  %v341 = vunpack.c.h.b16 %v49
  %v342 = vunpack.c.l.b16 %v50
  %v343 = vunpack.c.h.b16 %v50
  %v344 = vunpack.c.l.b16 %v51
  %v345 = vunpack.c.h.b16 %v51
  %v346 = vunpack.c.l.b16 %v52
  %v347 = vunpack.c.h.b16 %v52
  %v348 = vunpack.c.l.b16 %v53
  %v349 = vunpack.c.h.b16 %v53
  %v350 = vunpack.c.l.b16 %v54
  %v351 = vunpack.c.h.b16 %v54
  %v352 = vunpack.c.l.b16 %v55
  %v353 = vunpack.c.h.b16 %v55
  %v354 = vunpack.c.l.b16 %v56
  %v355 = vunpack.c.h.b16 %v56
  %v356 = vunpack.c.l.b16 %v57
  %v357 = vunpack.c.h.b16 %v57
  %v358 = vunpack.c.l.b16 %v58
  %v359 = vunpack.c.h.b16 %v58
  %v360 = vunpack.c.l.b16 %v59
  %v361 = vunpack.c.h.b16 %v59
  %v362 = vunpack.c.l.b16 %v60
  %v363 = vunpack.c.h.b16 %v60
  %v364 = vunpack.c.l.b16 %v61
  %v365 = vunpack.c.h.b16 %v61
  %v366 = vunpack.c.l.b16 %v62
  %v367 = vunpack.c.h.b16 %v62
  %v368 = vunpack.c.l.b16 %v63
  %v369 = vunpack.c.h.b16 %v63
  %v370 = vunpack.c.l.b16 %v64
  %v371 = vunpack.c.h.b16 %v64
  %v372 = vunpack.c.l.b16 %v65
  %v373 = vunpack.c.h.b16 %v65
  %v374 = vunpack.c.l.b16 %v66
  %v375 = vunpack.c.h.b16 %v66
  %v376 = vunpack.c.l.b16 %v67
  %v377 = vunpack.c.h.b16 %v67
  %v378 = vunpack.c.l.b16 %v68
  %v379 = vunpack.c.h.b16 %v68
  %v380 = vunpack.c.l.b16 %v69
  %v381 = vunpack.c.h.b16 %v69
  %v382 = vunpack.c.l.b16 %v70
  %v383 = vunpack.c.h.b16 %v70
  %v384 = vunpack.c.l.b16 %v71
  %v385 = vunpack.c.h.b16 %v71
  %v386 = vunpack.c.l.b16 %v72
  %v387 = vunpack.c.h.b16 %v72
  %v388 = vunpack.c.l.b16 %v73
  %v389 = vunpack.c.h.b16 %v73
  %v390 = vunpack.c.l.b16 %v74
  %v391 = vunpack.c.h.b16 %v74
  %v392 = vunpack.c.l.b16 %v75
  %v393 = vunpack.c.h.b16 %v75
  %v394 = vunpack.c.l.b16 %v76
  %v395 = vunpack.c.h.b16 %v76
  %v396 = vunpack.c.l.b16 %v77
  %v397 = vunpack.c.h.b16 %v77
  %v398 = vpack.c.b16 %v278, %v270
  %v399 = vpack.c.b16 %v279, %v271
  %v400 = vpack.c.b16 %v280, %v272
  %v401 = vpack.c.b16 %v281, %v273
  %v402 = vpack.c.b16 %v282, %v274
  %v403 = vpack.c.b16 %v283, %v275
  %v404 = vpack.c.b16 %v284, %v276
  %v405 = vpack.c.b16 %v285, %v277
  %v406 = vpack.c.b16 %v294, %v286
  %v407 = vpack.c.b16 %v295, %v287
  %v408 = vpack.c.b16 %v296, %v288
  %v409 = vpack.c.b16 %v297, %v289
  %v410 = vpack.c.b16 %v298, %v290
  %v411 = vpack.c.b16 %v299, %v291
  %v412 = vpack.c.b16 %v300, %v292
  %v413 = vpack.c.b16 %v301, %v293
  %v414 = vpack.c.b16 %v310, %v302
  %v415 = vpack.c.b16 %v311, %v303
  %v416 = vpack.c.b16 %v312, %v304
  %v417 = vpack.c.b16 %v313, %v305
  %v418 = vpack.c.b16 %v314, %v306
  %v419 = vpack.c.b16 %v315, %v307
  %v420 = vpack.c.b16 %v316, %v308
  %v421 = vpack.c.b16 %v317, %v309
  %v422 = vpack.c.b16 %v326, %v318
  %v423 = vpack.c.b16 %v327, %v319
  %v424 = vpack.c.b16 %v328, %v320
  %v425 = vpack.c.b16 %v329, %v321
  %v426 = vpack.c.b16 %v330, %v322
  %v427 = vpack.c.b16 %v331, %v323
  %v428 = vpack.c.b16 %v332, %v324
  %v429 = vpack.c.b16 %v333, %v325
  %v430 = vpack.c.b16 %v342, %v334
  %v431 = vpack.c.b16 %v343, %v335
  %v432 = vpack.c.b16 %v344, %v336
  %v433 = vpack.c.b16 %v345, %v337
  %v434 = vpack.c.b16 %v346, %v338
  %v435 = vpack.c.b16 %v347, %v339
  %v436 = vpack.c.b16 %v348, %v340
  %v437 = vpack.c.b16 %v349, %v341
  %v438 = vpack.c.b16 %v358, %v350
  %v439 = vpack.c.b16 %v359, %v351
  %v440 = vpack.c.b16 %v360, %v352
  %v441 = vpack.c.b16 %v361, %v353
  %v442 = vpack.c.b16 %v362, %v354
  %v443 = vpack.c.b16 %v363, %v355
  %v444 = vpack.c.b16 %v364, %v356
  %v445 = vpack.c.b16 %v365, %v357
  %v446 = vpack.c.b16 %v374, %v366
  %v447 = vpack.c.b16 %v375, %v367
  %v448 = vpack.c.b16 %v376, %v368
  %v449 = vpack.c.b16 %v377, %v369
  %v450 = vpack.c.b16 %v378, %v370
  %v451 = vpack.c.b16 %v379, %v371
  %v452 = vpack.c.b16 %v380, %v372
  %v453 = vpack.c.b16 %v381, %v373
  %v454 = vpack.c.b16 %v390, %v382
  %v455 = vpack.c.b16 %v391, %v383
  %v456 = vpack.c.b16 %v392, %v384
  %v457 = vpack.c.b16 %v393, %v385
  %v458 = vpack.c.b16 %v394, %v386
  %v459 = vpack.c.b16 %v395, %v387
  %v460 = vpack.c.b16 %v396, %v388
  %v461 = vpack.c.b16 %v397, %v389
  %v654 = vunpack.c.l.b16 %v78
  %v655 = vunpack.c.l.b16 %v79
  %v656 = vunpack.c.l.b16 %v80
  %v657 = vunpack.c.l.b16 %v81
  %v658 = vunpack.c.l.b16 %v82
  %v659 = vunpack.c.l.b16 %v83
  %v660 = vunpack.c.l.b16 %v84
  %v661 = vunpack.c.l.b16 %v85
  %v662 = vunpack.c.l.b16 %v86
  %v663 = vunpack.c.l.b16 %v87
  %v664 = vunpack.c.l.b16 %v88
  %v665 = vunpack.c.l.b16 %v89
  %v666 = vunpack.c.l.b16 %v90
  %v667 = vunpack.c.l.b16 %v91
  %v668 = vunpack.c.l.b16 %v92
  %v669 = vunpack.c.l.b16 %v93
  %v670 = vunpack.c.l.b16 %v94
  %v671 = vunpack.c.l.b16 %v95
  %v672 = vunpack.c.l.b16 %v96
  %v673 = vunpack.c.l.b16 %v97
  %v674 = vunpack.c.l.b16 %v98
  %v675 = vunpack.c.l.b16 %v99
  %v676 = vunpack.c.l.b16 %v100
  %v677 = vunpack.c.l.b16 %v101
  %v678 = vunpack.c.l.b16 %v102
  %v679 = vunpack.c.l.b16 %v103
  %v680 = vunpack.c.l.b16 %v104
  %v681 = vunpack.c.l.b16 %v105
  %v682 = vunpack.c.l.b16 %v106
  %v683 = vunpack.c.l.b16 %v107
  %v684 = vunpack.c.l.b16 %v108
  %v685 = vunpack.c.l.b16 %v109
  %v686 = vunpack.c.l.b16 %v110
  %v687 = vunpack.c.l.b16 %v111
  %v688 = vunpack.c.l.b16 %v112
  %v689 = vunpack.c.l.b16 %v113
  %v690 = vunpack.c.l.b16 %v114
  %v691 = vunpack.c.l.b16 %v115
  %v692 = vunpack.c.l.b16 %v116
  %v693 = vunpack.c.l.b16 %v117
  %v694 = vunpack.c.l.b16 %v118
  %v695 = vunpack.c.l.b16 %v119
  %v696 = vunpack.c.l.b16 %v120
  %v697 = vunpack.c.l.b16 %v121
  %v698 = vunpack.c.l.b16 %v122
  %v699 = vunpack.c.l.b16 %v123
  %v700 = vunpack.c.l.b16 %v124
  %v701 = vunpack.c.l.b16 %v125
  %v702 = vunpack.c.l.b16 %v126
  %v703 = vunpack.c.l.b16 %v127
  %v704 = vunpack.c.l.b16 %v128
  %v705 = vunpack.c.l.b16 %v129
  %v706 = vunpack.c.l.b16 %v130
  %v707 = vunpack.c.l.b16 %v131
  %v708 = vunpack.c.l.b16 %v132
  %v709 = vunpack.c.l.b16 %v133
  %v710 = vunpack.c.l.b16 %v134
  %v711 = vunpack.c.l.b16 %v135
  %v712 = vunpack.c.l.b16 %v136
  %v713 = vunpack.c.l.b16 %v137
  %v714 = vunpack.c.l.b16 %v138
  %v715 = vunpack.c.l.b16 %v139
  %v716 = vunpack.c.l.b16 %v140
  %v717 = vunpack.c.l.b16 %v141
  %v718 = vunpack.c.l.b16 %v142
  %v719 = vunpack.c.l.b16 %v143
  %v720 = vunpack.c.l.b16 %v144
  %v721 = vunpack.c.l.b16 %v145
  %v722 = vunpack.c.l.b16 %v146
  %v723 = vunpack.c.l.b16 %v147
  %v724 = vunpack.c.l.b16 %v148
  %v725 = vunpack.c.l.b16 %v149
  %v726 = vunpack.c.l.b16 %v150
  %v727 = vunpack.c.l.b16 %v151
  %v728 = vunpack.c.l.b16 %v152
  %v729 = vunpack.c.l.b16 %v153
  %v730 = vunpack.c.l.b16 %v154
  %v731 = vunpack.c.l.b16 %v155
  %v732 = vunpack.c.l.b16 %v156
  %v733 = vunpack.c.l.b16 %v157
  %v734 = vunpack.c.l.b16 %v158
  %v735 = vunpack.c.l.b16 %v159
  %v736 = vunpack.c.l.b16 %v160
  %v737 = vunpack.c.l.b16 %v161
  %v738 = vunpack.c.l.b16 %v162
  %v739 = vunpack.c.l.b16 %v163
  %v740 = vunpack.c.l.b16 %v164
  %v741 = vunpack.c.l.b16 %v165
  %v742 = vunpack.c.l.b16 %v166
  %v743 = vunpack.c.l.b16 %v167
  %v744 = vunpack.c.l.b16 %v168
  %v745 = vunpack.c.l.b16 %v169
  %v746 = vunpack.c.l.b16 %v170
  %v747 = vunpack.c.l.b16 %v171
  %v748 = vunpack.c.l.b16 %v172
  %v749 = vunpack.c.l.b16 %v173
  %v750 = vunpack.c.l.b16 %v174
  %v751 = vunpack.c.l.b16 %v175
  %v752 = vunpack.c.l.b16 %v176
  %v753 = vunpack.c.l.b16 %v177
  %v754 = vunpack.c.l.b16 %v178
  %v755 = vunpack.c.l.b16 %v179
  %v756 = vunpack.c.l.b16 %v180
  %v757 = vunpack.c.l.b16 %v181
  %v758 = vunpack.c.l.b16 %v182
  %v759 = vunpack.c.l.b16 %v183
  %v760 = vunpack.c.l.b16 %v184
  %v761 = vunpack.c.l.b16 %v185
  %v762 = vunpack.c.l.b16 %v186
  %v763 = vunpack.c.l.b16 %v187
  %v764 = vunpack.c.l.b16 %v188
  %v765 = vunpack.c.l.b16 %v189
  %v766 = vunpack.c.l.b16 %v190
  %v767 = vunpack.c.l.b16 %v191
  %v768 = vunpack.c.l.b16 %v192
  %v769 = vunpack.c.l.b16 %v193
  %v770 = vunpack.c.l.b16 %v194
  %v771 = vunpack.c.l.b16 %v195
  %v772 = vunpack.c.l.b16 %v196
  %v773 = vunpack.c.l.b16 %v197
  %v774 = vunpack.c.l.b16 %v198
  %v775 = vunpack.c.l.b16 %v199
  %v776 = vunpack.c.l.b16 %v200
  %v777 = vunpack.c.l.b16 %v201
  %v778 = vunpack.c.l.b16 %v202
  %v779 = vunpack.c.l.b16 %v203
  %v780 = vunpack.c.l.b16 %v204
  %v781 = vunpack.c.l.b16 %v205
  %v782 = vpack.c.b16 %v655, %v654
  %v783 = vpack.c.b16 %v657, %v656
  %v784 = vpack.c.b16 %v659, %v658
  %v785 = vpack.c.b16 %v661, %v660
  %v786 = vpack.c.b16 %v663, %v662
  %v787 = vpack.c.b16 %v665, %v664
  %v788 = vpack.c.b16 %v667, %v666
  %v789 = vpack.c.b16 %v669, %v668
  %v790 = vpack.c.b16 %v671, %v670
  %v791 = vpack.c.b16 %v673, %v672
  %v792 = vpack.c.b16 %v675, %v674
  %v793 = vpack.c.b16 %v677, %v676
  %v794 = vpack.c.b16 %v679, %v678
  %v795 = vpack.c.b16 %v681, %v680
  %v796 = vpack.c.b16 %v683, %v682
  %v797 = vpack.c.b16 %v685, %v684
  %v798 = vpack.c.b16 %v687, %v686
  %v799 = vpack.c.b16 %v689, %v688
  %v800 = vpack.c.b16 %v691, %v690
  %v801 = vpack.c.b16 %v693, %v692
  %v802 = vpack.c.b16 %v695, %v694
  %v803 = vpack.c.b16 %v697, %v696
  %v804 = vpack.c.b16 %v699, %v698
  %v805 = vpack.c.b16 %v701, %v700
  %v806 = vpack.c.b16 %v703, %v702
  %v807 = vpack.c.b16 %v705, %v704
  %v808 = vpack.c.b16 %v707, %v706
  %v809 = vpack.c.b16 %v709, %v708
  %v810 = vpack.c.b16 %v711, %v710
  %v811 = vpack.c.b16 %v713, %v712
  %v812 = vpack.c.b16 %v715, %v714
  %v813 = vpack.c.b16 %v717, %v716
  %v814 = vpack.c.b16 %v719, %v718
  %v815 = vpack.c.b16 %v721, %v720
  %v816 = vpack.c.b16 %v723, %v722
  %v817 = vpack.c.b16 %v725, %v724
  %v818 = vpack.c.b16 %v727, %v726
  %v819 = vpack.c.b16 %v729, %v728
  %v820 = vpack.c.b16 %v731, %v730
  %v821 = vpack.c.b16 %v733, %v732
  %v822 = vpack.c.b16 %v735, %v734
  %v823 = vpack.c.b16 %v737, %v736
  %v824 = vpack.c.b16 %v739, %v738
  %v825 = vpack.c.b16 %v741, %v740
  %v826 = vpack.c.b16 %v743, %v742
  %v827 = vpack.c.b16 %v745, %v744
  %v828 = vpack.c.b16 %v747, %v746
  %v829 = vpack.c.b16 %v749, %v748
  %v830 = vpack.c.b16 %v751, %v750
  %v831 = vpack.c.b16 %v753, %v752
  %v832 = vpack.c.b16 %v755, %v754
  %v833 = vpack.c.b16 %v757, %v756
  %v834 = vpack.c.b16 %v759, %v758
  %v835 = vpack.c.b16 %v761, %v760
  %v836 = vpack.c.b16 %v763, %v762
  %v837 = vpack.c.b16 %v765, %v764
  %v838 = vpack.c.b16 %v767, %v766
  %v839 = vpack.c.b16 %v769, %v768
  %v840 = vpack.c.b16 %v771, %v770
  %v841 = vpack.c.b16 %v773, %v772
  %v842 = vpack.c.b16 %v775, %v774
  %v843 = vpack.c.b16 %v777, %v776
  %v844 = vpack.c.b16 %v779, %v778
  %v845 = vpack.c.b16 %v781, %v780
  %910 = vmatpush.bf16.msra.mxu0 %v789
  %911 = vmatpush.bf16.msra.mxu0 %v788
  %912 = vmatpush.bf16.msra.mxu0 %v787
  %913 = vmatpush.bf16.msra.mxu0 %v786
  %914 = vmatpush.bf16.msra.mxu0 %v785
  %915 = vmatpush.bf16.msra.mxu0 %v784
  %916 = vmatpush.bf16.msra.mxu0 %v783
  %917 = vmatpush.bf16.msra.mxu0 %v782
  %918 = vmatmul.bf16.gmra.mxu0 %v398
  %v919 = vpop.f32.mrf.mxu0
  %v920 = vadd.f32 0.0, %v919
  %v921 = vpop.f32.mrf.mxu0
  %v922 = vadd.f32 0.0, %v921
  %923 = vmatmul.bf16.gmra.mxu0 %v406
  %v924 = vpop.f32.mrf.mxu0
  %v925 = vadd.f32 0.0, %v924
  %v926 = vpop.f32.mrf.mxu0
  %v927 = vadd.f32 0.0, %v926
  %928 = vmatmul.bf16.gmra.mxu0 %v414
  %v929 = vpop.f32.mrf.mxu0
  %v930 = vadd.f32 0.0, %v929
  %v931 = vpop.f32.mrf.mxu0
  %v932 = vadd.f32 0.0, %v931
  %933 = vmatmul.bf16.gmra.mxu0 %v422
  %v934 = vpop.f32.mrf.mxu0
  %v935 = vadd.f32 0.0, %v934
  %v936 = vpop.f32.mrf.mxu0
  %v937 = vadd.f32 0.0, %v936
  %938 = vmatmul.bf16.gmra.mxu0 %v430
  %v939 = vpop.f32.mrf.mxu0
  %v940 = vadd.f32 0.0, %v939
  %v941 = vpop.f32.mrf.mxu0
  %v942 = vadd.f32 0.0, %v941
  %943 = vmatmul.bf16.gmra.mxu0 %v438
  %v944 = vpop.f32.mrf.mxu0
  %v945 = vadd.f32 0.0, %v944
  %v946 = vpop.f32.mrf.mxu0
  %v947 = vadd.f32 0.0, %v946
  %948 = vmatmul.bf16.gmra.mxu0 %v446
  %v949 = vpop.f32.mrf.mxu0
  %v950 = vadd.f32 0.0, %v949
  %v951 = vpop.f32.mrf.mxu0
  %v952 = vadd.f32 0.0, %v951
  %953 = vmatmul.bf16.gmra.mxu0 %v454
  %v954 = vpop.f32.mrf.mxu0
  %v955 = vadd.f32 0.0, %v954
  %v956 = vpop.f32.mrf.mxu0
  %v957 = vadd.f32 0.0, %v956
  %958 = vdwg.mxu0
  %959 = vmatpush.bf16.msra.mxu0 %v797
  %960 = vmatpush.bf16.msra.mxu0 %v796
  %961 = vmatpush.bf16.msra.mxu0 %v795
  %962 = vmatpush.bf16.msra.mxu0 %v794
  %963 = vmatpush.bf16.msra.mxu0 %v793
  %964 = vmatpush.bf16.msra.mxu0 %v792
  %965 = vmatpush.bf16.msra.mxu0 %v791
  %966 = vmatpush.bf16.msra.mxu0 %v790
  %967 = vmatmul.bf16.gmra.mxu0 %v399
  %v968 = vpop.f32.mrf.mxu0
  %v969 = vadd.f32 %v920, %v968
  %v970 = vpop.f32.mrf.mxu0
  %v971 = vadd.f32 %v922, %v970
  %972 = vmatmul.bf16.gmra.mxu0 %v407
  %v973 = vpop.f32.mrf.mxu0
  %v974 = vadd.f32 %v925, %v973
  %v975 = vpop.f32.mrf.mxu0
  %v976 = vadd.f32 %v927, %v975
  %977 = vmatmul.bf16.gmra.mxu0 %v415
  %v978 = vpop.f32.mrf.mxu0
  %v979 = vadd.f32 %v930, %v978
  %v980 = vpop.f32.mrf.mxu0
  %v981 = vadd.f32 %v932, %v980
  %982 = vmatmul.bf16.gmra.mxu0 %v423
  %v983 = vpop.f32.mrf.mxu0
  %v984 = vadd.f32 %v935, %v983
  %v985 = vpop.f32.mrf.mxu0
  %v986 = vadd.f32 %v937, %v985
  %987 = vmatmul.bf16.gmra.mxu0 %v431
  %v988 = vpop.f32.mrf.mxu0
  %v989 = vadd.f32 %v940, %v988
  %v990 = vpop.f32.mrf.mxu0
  %v991 = vadd.f32 %v942, %v990
  %992 = vmatmul.bf16.gmra.mxu0 %v439
  %v993 = vpop.f32.mrf.mxu0
  %v994 = vadd.f32 %v945, %v993
  %v995 = vpop.f32.mrf.mxu0
  %v996 = vadd.f32 %v947, %v995
  %997 = vmatmul.bf16.gmra.mxu0 %v447
  %v998 = vpop.f32.mrf.mxu0
  %v999 = vadd.f32 %v950, %v998
  %v1000 = vpop.f32.mrf.mxu0
  %v1001 = vadd.f32 %v952, %v1000
  %1002 = vmatmul.bf16.gmra.mxu0 %v455
  %v1003 = vpop.f32.mrf.mxu0
  %v1004 = vadd.f32 %v955, %v1003
  %v1005 = vpop.f32.mrf.mxu0
  %v1006 = vadd.f32 %v957, %v1005
  %1007 = vdwg.mxu0
  %1008 = vmatpush.bf16.msra.mxu0 %v805
  %1009 = vmatpush.bf16.msra.mxu0 %v804
  %1010 = vmatpush.bf16.msra.mxu0 %v803
  %1011 = vmatpush.bf16.msra.mxu0 %v802
  %1012 = vmatpush.bf16.msra.mxu0 %v801
  %1013 = vmatpush.bf16.msra.mxu0 %v800
  %1014 = vmatpush.bf16.msra.mxu0 %v799
  %1015 = vmatpush.bf16.msra.mxu0 %v798
  %1016 = vmatmul.bf16.gmra.mxu0 %v400
  %v1017 = vpop.f32.mrf.mxu0
  %v1018 = vadd.f32 %v969, %v1017
  %v1019 = vpop.f32.mrf.mxu0
  %v1020 = vadd.f32 %v971, %v1019
  %1021 = vmatmul.bf16.gmra.mxu0 %v408
  %v1022 = vpop.f32.mrf.mxu0
  %v1023 = vadd.f32 %v974, %v1022
  %v1024 = vpop.f32.mrf.mxu0
  %v1025 = vadd.f32 %v976, %v1024
  %1026 = vmatmul.bf16.gmra.mxu0 %v416
  %v1027 = vpop.f32.mrf.mxu0
  %v1028 = vadd.f32 %v979, %v1027
  %v1029 = vpop.f32.mrf.mxu0
  %v1030 = vadd.f32 %v981, %v1029
  %1031 = vmatmul.bf16.gmra.mxu0 %v424
  %v1032 = vpop.f32.mrf.mxu0
  %v1033 = vadd.f32 %v984, %v1032
  %v1034 = vpop.f32.mrf.mxu0
  %v1035 = vadd.f32 %v986, %v1034
  %1036 = vmatmul.bf16.gmra.mxu0 %v432
  %v1037 = vpop.f32.mrf.mxu0
  %v1038 = vadd.f32 %v989, %v1037
  %v1039 = vpop.f32.mrf.mxu0
  %v1040 = vadd.f32 %v991, %v1039
  %1041 = vmatmul.bf16.gmra.mxu0 %v440
  %v1042 = vpop.f32.mrf.mxu0
  %v1043 = vadd.f32 %v994, %v1042
  %v1044 = vpop.f32.mrf.mxu0
  %v1045 = vadd.f32 %v996, %v1044
  %1046 = vmatmul.bf16.gmra.mxu0 %v448
  %v1047 = vpop.f32.mrf.mxu0
  %v1048 = vadd.f32 %v999, %v1047
  %v1049 = vpop.f32.mrf.mxu0
  %v1050 = vadd.f32 %v1001, %v1049
  %1051 = vmatmul.bf16.gmra.mxu0 %v456
  %v1052 = vpop.f32.mrf.mxu0
  %v1053 = vadd.f32 %v1004, %v1052
  %v1054 = vpop.f32.mrf.mxu0
  %v1055 = vadd.f32 %v1006, %v1054
  %1056 = vdwg.mxu0
  %1057 = vmatpush.bf16.msra.mxu0 %v813
  %1058 = vmatpush.bf16.msra.mxu0 %v812
  %1059 = vmatpush.bf16.msra.mxu0 %v811
  %1060 = vmatpush.bf16.msra.mxu0 %v810
  %1061 = vmatpush.bf16.msra.mxu0 %v809
  %1062 = vmatpush.bf16.msra.mxu0 %v808
  %1063 = vmatpush.bf16.msra.mxu0 %v807
  %1064 = vmatpush.bf16.msra.mxu0 %v806
  %1065 = vmatmul.bf16.gmra.mxu0 %v401
  %v1066 = vpop.f32.mrf.mxu0
  %v1067 = vadd.f32 %v1018, %v1066
  %v1068 = vpop.f32.mrf.mxu0
  %v1069 = vadd.f32 %v1020, %v1068
  %1070 = vmatmul.bf16.gmra.mxu0 %v409
  %v1071 = vpop.f32.mrf.mxu0
  %v1072 = vadd.f32 %v1023, %v1071
  %v1073 = vpop.f32.mrf.mxu0
  %v1074 = vadd.f32 %v1025, %v1073
  %1075 = vmatmul.bf16.gmra.mxu0 %v417
  %v1076 = vpop.f32.mrf.mxu0
  %v1077 = vadd.f32 %v1028, %v1076
  %v1078 = vpop.f32.mrf.mxu0
  %v1079 = vadd.f32 %v1030, %v1078
  %1080 = vmatmul.bf16.gmra.mxu0 %v425
  %v1081 = vpop.f32.mrf.mxu0
  %v1082 = vadd.f32 %v1033, %v1081
  %v1083 = vpop.f32.mrf.mxu0
  %v1084 = vadd.f32 %v1035, %v1083
  %1085 = vmatmul.bf16.gmra.mxu0 %v433
  %v1086 = vpop.f32.mrf.mxu0
  %v1087 = vadd.f32 %v1038, %v1086
  %v1088 = vpop.f32.mrf.mxu0
  %v1089 = vadd.f32 %v1040, %v1088
  %1090 = vmatmul.bf16.gmra.mxu0 %v441
  %v1091 = vpop.f32.mrf.mxu0
  %v1092 = vadd.f32 %v1043, %v1091
  %v1093 = vpop.f32.mrf.mxu0
  %v1094 = vadd.f32 %v1045, %v1093
  %1095 = vmatmul.bf16.gmra.mxu0 %v449
  %v1096 = vpop.f32.mrf.mxu0
  %v1097 = vadd.f32 %v1048, %v1096
  %v1098 = vpop.f32.mrf.mxu0
  %v1099 = vadd.f32 %v1050, %v1098
  %1100 = vmatmul.bf16.gmra.mxu0 %v457
  %v1101 = vpop.f32.mrf.mxu0
  %v1102 = vadd.f32 %v1053, %v1101
  %v1103 = vpop.f32.mrf.mxu0
  %v1104 = vadd.f32 %v1055, %v1103
  %1105 = vdwg.mxu0
  %1106 = vmatpush.bf16.msra.mxu0 %v821
  %1107 = vmatpush.bf16.msra.mxu0 %v820
  %1108 = vmatpush.bf16.msra.mxu0 %v819
  %1109 = vmatpush.bf16.msra.mxu0 %v818
  %1110 = vmatpush.bf16.msra.mxu0 %v817
  %1111 = vmatpush.bf16.msra.mxu0 %v816
  %1112 = vmatpush.bf16.msra.mxu0 %v815
  %1113 = vmatpush.bf16.msra.mxu0 %v814
  %1114 = vmatmul.bf16.gmra.mxu0 %v402
  %v1115 = vpop.f32.mrf.mxu0
  %v1116 = vadd.f32 %v1067, %v1115
  %v1117 = vpop.f32.mrf.mxu0
  %v1118 = vadd.f32 %v1069, %v1117
  %1119 = vmatmul.bf16.gmra.mxu0 %v410
  %v1120 = vpop.f32.mrf.mxu0
  %v1121 = vadd.f32 %v1072, %v1120
  %v1122 = vpop.f32.mrf.mxu0
  %v1123 = vadd.f32 %v1074, %v1122
  %1124 = vmatmul.bf16.gmra.mxu0 %v418
  %v1125 = vpop.f32.mrf.mxu0
  %v1126 = vadd.f32 %v1077, %v1125
  %v1127 = vpop.f32.mrf.mxu0
  %v1128 = vadd.f32 %v1079, %v1127
  %1129 = vmatmul.bf16.gmra.mxu0 %v426
  %v1130 = vpop.f32.mrf.mxu0
  %v1131 = vadd.f32 %v1082, %v1130
  %v1132 = vpop.f32.mrf.mxu0
  %v1133 = vadd.f32 %v1084, %v1132
  %1134 = vmatmul.bf16.gmra.mxu0 %v434
  %v1135 = vpop.f32.mrf.mxu0
  %v1136 = vadd.f32 %v1087, %v1135
  %v1137 = vpop.f32.mrf.mxu0
  %v1138 = vadd.f32 %v1089, %v1137
  %1139 = vmatmul.bf16.gmra.mxu0 %v442
  %v1140 = vpop.f32.mrf.mxu0
  %v1141 = vadd.f32 %v1092, %v1140
  %v1142 = vpop.f32.mrf.mxu0
  %v1143 = vadd.f32 %v1094, %v1142
  %1144 = vmatmul.bf16.gmra.mxu0 %v450
  %v1145 = vpop.f32.mrf.mxu0
  %v1146 = vadd.f32 %v1097, %v1145
  %v1147 = vpop.f32.mrf.mxu0
  %v1148 = vadd.f32 %v1099, %v1147
  %1149 = vmatmul.bf16.gmra.mxu0 %v458
  %v1150 = vpop.f32.mrf.mxu0
  %v1151 = vadd.f32 %v1102, %v1150
  %v1152 = vpop.f32.mrf.mxu0
  %v1153 = vadd.f32 %v1104, %v1152
  %1154 = vdwg.mxu0
  %1155 = vmatpush.bf16.msra.mxu0 %v829
  %1156 = vmatpush.bf16.msra.mxu0 %v828
  %1157 = vmatpush.bf16.msra.mxu0 %v827
  %1158 = vmatpush.bf16.msra.mxu0 %v826
  %1159 = vmatpush.bf16.msra.mxu0 %v825
  %1160 = vmatpush.bf16.msra.mxu0 %v824
  %1161 = vmatpush.bf16.msra.mxu0 %v823
  %1162 = vmatpush.bf16.msra.mxu0 %v822
  %1163 = vmatmul.bf16.gmra.mxu0 %v403
  %v1164 = vpop.f32.mrf.mxu0
  %v1165 = vadd.f32 %v1116, %v1164
  %v1166 = vpop.f32.mrf.mxu0
  %v1167 = vadd.f32 %v1118, %v1166
  %1168 = vmatmul.bf16.gmra.mxu0 %v411
  %v1169 = vpop.f32.mrf.mxu0
  %v1170 = vadd.f32 %v1121, %v1169
  %v1171 = vpop.f32.mrf.mxu0
  %v1172 = vadd.f32 %v1123, %v1171
  %1173 = vmatmul.bf16.gmra.mxu0 %v419
  %v1174 = vpop.f32.mrf.mxu0
  %v1175 = vadd.f32 %v1126, %v1174
  %v1176 = vpop.f32.mrf.mxu0
  %v1177 = vadd.f32 %v1128, %v1176
  %1178 = vmatmul.bf16.gmra.mxu0 %v427
  %v1179 = vpop.f32.mrf.mxu0
  %v1180 = vadd.f32 %v1131, %v1179
  %v1181 = vpop.f32.mrf.mxu0
  %v1182 = vadd.f32 %v1133, %v1181
  %1183 = vmatmul.bf16.gmra.mxu0 %v435
  %v1184 = vpop.f32.mrf.mxu0
  %v1185 = vadd.f32 %v1136, %v1184
  %v1186 = vpop.f32.mrf.mxu0
  %v1187 = vadd.f32 %v1138, %v1186
  %1188 = vmatmul.bf16.gmra.mxu0 %v443
  %v1189 = vpop.f32.mrf.mxu0
  %v1190 = vadd.f32 %v1141, %v1189
  %v1191 = vpop.f32.mrf.mxu0
  %v1192 = vadd.f32 %v1143, %v1191
  %1193 = vmatmul.bf16.gmra.mxu0 %v451
  %v1194 = vpop.f32.mrf.mxu0
  %v1195 = vadd.f32 %v1146, %v1194
  %v1196 = vpop.f32.mrf.mxu0
  %v1197 = vadd.f32 %v1148, %v1196
  %1198 = vmatmul.bf16.gmra.mxu0 %v459
  %v1199 = vpop.f32.mrf.mxu0
  %v1200 = vadd.f32 %v1151, %v1199
  %v1201 = vpop.f32.mrf.mxu0
  %v1202 = vadd.f32 %v1153, %v1201
  %1203 = vdwg.mxu0
  %1204 = vmatpush.bf16.msra.mxu0 %v837
  %1205 = vmatpush.bf16.msra.mxu0 %v836
  %1206 = vmatpush.bf16.msra.mxu0 %v835
  %1207 = vmatpush.bf16.msra.mxu0 %v834
  %1208 = vmatpush.bf16.msra.mxu0 %v833
  %1209 = vmatpush.bf16.msra.mxu0 %v832
  %1210 = vmatpush.bf16.msra.mxu0 %v831
  %1211 = vmatpush.bf16.msra.mxu0 %v830
  %1212 = vmatmul.bf16.gmra.mxu0 %v404
  %v1213 = vpop.f32.mrf.mxu0
  %v1214 = vadd.f32 %v1165, %v1213
  %v1215 = vpop.f32.mrf.mxu0
  %v1216 = vadd.f32 %v1167, %v1215
  %1217 = vmatmul.bf16.gmra.mxu0 %v412
  %v1218 = vpop.f32.mrf.mxu0
  %v1219 = vadd.f32 %v1170, %v1218
  %v1220 = vpop.f32.mrf.mxu0
  %v1221 = vadd.f32 %v1172, %v1220
  %1222 = vmatmul.bf16.gmra.mxu0 %v420
  %v1223 = vpop.f32.mrf.mxu0
  %v1224 = vadd.f32 %v1175, %v1223
  %v1225 = vpop.f32.mrf.mxu0
  %v1226 = vadd.f32 %v1177, %v1225
  %1227 = vmatmul.bf16.gmra.mxu0 %v428
  %v1228 = vpop.f32.mrf.mxu0
  %v1229 = vadd.f32 %v1180, %v1228
  %v1230 = vpop.f32.mrf.mxu0
  %v1231 = vadd.f32 %v1182, %v1230
  %1232 = vmatmul.bf16.gmra.mxu0 %v436
  %v1233 = vpop.f32.mrf.mxu0
  %v1234 = vadd.f32 %v1185, %v1233
  %v1235 = vpop.f32.mrf.mxu0
  %v1236 = vadd.f32 %v1187, %v1235
  %1237 = vmatmul.bf16.gmra.mxu0 %v444
  %v1238 = vpop.f32.mrf.mxu0
  %v1239 = vadd.f32 %v1190, %v1238
  %v1240 = vpop.f32.mrf.mxu0
  %v1241 = vadd.f32 %v1192, %v1240
  %1242 = vmatmul.bf16.gmra.mxu0 %v452
  %v1243 = vpop.f32.mrf.mxu0
  %v1244 = vadd.f32 %v1195, %v1243
  %v1245 = vpop.f32.mrf.mxu0
  %v1246 = vadd.f32 %v1197, %v1245
  %1247 = vmatmul.bf16.gmra.mxu0 %v460
  %v1248 = vpop.f32.mrf.mxu0
  %v1249 = vadd.f32 %v1200, %v1248
  %v1250 = vpop.f32.mrf.mxu0
  %v1251 = vadd.f32 %v1202, %v1250
  %1252 = vdwg.mxu0
  %1253 = vmatpush.bf16.msra.mxu0 %v845
  %1254 = vmatpush.bf16.msra.mxu0 %v844
  %1255 = vmatpush.bf16.msra.mxu0 %v843
  %1256 = vmatpush.bf16.msra.mxu0 %v842
  %1257 = vmatpush.bf16.msra.mxu0 %v841
  %1258 = vmatpush.bf16.msra.mxu0 %v840
  %1259 = vmatpush.bf16.msra.mxu0 %v839
  %1260 = vmatpush.bf16.msra.mxu0 %v838
  %1261 = vmatmul.bf16.gmra.mxu0 %v405
  %v1262 = vpop.f32.mrf.mxu0
  %v1263 = vadd.f32 %v1214, %v1262
  %v1264 = vpop.f32.mrf.mxu0
  %v1265 = vadd.f32 %v1216, %v1264
  %1266 = vmatmul.bf16.gmra.mxu0 %v413
  %v1267 = vpop.f32.mrf.mxu0
  %v1268 = vadd.f32 %v1219, %v1267
  %v1269 = vpop.f32.mrf.mxu0
  %v1270 = vadd.f32 %v1221, %v1269
  %1271 = vmatmul.bf16.gmra.mxu0 %v421
  %v1272 = vpop.f32.mrf.mxu0
  %v1273 = vadd.f32 %v1224, %v1272
  %v1274 = vpop.f32.mrf.mxu0
  %v1275 = vadd.f32 %v1226, %v1274
  %1276 = vmatmul.bf16.gmra.mxu0 %v429
  %v1277 = vpop.f32.mrf.mxu0
  %v1278 = vadd.f32 %v1229, %v1277
  %v1279 = vpop.f32.mrf.mxu0
  %v1280 = vadd.f32 %v1231, %v1279
  %1281 = vmatmul.bf16.gmra.mxu0 %v437
  %v1282 = vpop.f32.mrf.mxu0
  %v1283 = vadd.f32 %v1234, %v1282
  %v1284 = vpop.f32.mrf.mxu0
  %v1285 = vadd.f32 %v1236, %v1284
  %1286 = vmatmul.bf16.gmra.mxu0 %v445
  %v1287 = vpop.f32.mrf.mxu0
  %v1288 = vadd.f32 %v1239, %v1287
  %v1289 = vpop.f32.mrf.mxu0
  %v1290 = vadd.f32 %v1241, %v1289
  %1291 = vmatmul.bf16.gmra.mxu0 %v453
  %v1292 = vpop.f32.mrf.mxu0
  %v1293 = vadd.f32 %v1244, %v1292
  %v1294 = vpop.f32.mrf.mxu0
  %v1295 = vadd.f32 %v1246, %v1294
  %1296 = vmatmul.bf16.gmra.mxu0 %v461
  %v1297 = vpop.f32.mrf.mxu0
  %v1298 = vadd.f32 %v1249, %v1297
  %v1299 = vpop.f32.mrf.mxu0
  %v1300 = vadd.f32 %v1251, %v1299
  %1301 = vdwg.mxu0
  %1302 = vst [vmem:[%s2] sm:$0xff] %v1263
  %1303 = vst [vmem:[%s2 + $0x8] sm:$0xff] %v1265
  %1304 = vst [vmem:[%s2 + $0x10] sm:$0xff] %v1268
  %1305 = vst [vmem:[%s2 + $0x18] sm:$0xff] %v1270
  %1306 = vst [vmem:[%s2 + $0x20] sm:$0xff] %v1273
  %1307 = vst [vmem:[%s2 + $0x28] sm:$0xff] %v1275
  %1308 = vst [vmem:[%s2 + $0x30] sm:$0xff] %v1278
  %1309 = vst [vmem:[%s2 + $0x38] sm:$0xff] %v1280
  %1310 = vst [vmem:[%s2 + $0x40] sm:$0xff] %v1283
  %1311 = vst [vmem:[%s2 + $0x48] sm:$0xff] %v1285
  %1312 = vst [vmem:[%s2 + $0x50] sm:$0xff] %v1288
  %1313 = vst [vmem:[%s2 + $0x58] sm:$0xff] %v1290
  %1314 = vst [vmem:[%s2 + $0x60] sm:$0xff] %v1293
  %1315 = vst [vmem:[%s2 + $0x68] sm:$0xff] %v1295
  %1316 = vst [vmem:[%s2 + $0x70] sm:$0xff] %v1298
  %1317 = vst [vmem:[%s2 + $0x78] sm:$0xff] %v1300
  %v1318 = vadd.f32 %v1263, %v1265
  %v1319 = vadd.f32 %v1318, %v1268
  %v1320 = vadd.f32 %v1319, %v1270
  %v1321 = vadd.f32 %v1320, %v1273
  %v1322 = vadd.f32 %v1321, %v1275
  %v1323 = vadd.f32 %v1322, %v1278
  %v1324 = vadd.f32 %v1323, %v1280
  %v1325 = vadd.f32 %v1324, %v1283
  %v1326 = vadd.f32 %v1325, %v1285
  %v1327 = vadd.f32 %v1326, %v1288
  %v1328 = vadd.f32 %v1327, %v1290
  %v1329 = vadd.f32 %v1328, %v1293
  %v1330 = vadd.f32 %v1329, %v1295
  %v1331 = vadd.f32 %v1330, %v1298
  %v1332 = vadd.f32 %v1331, %v1300
  %v1333 = vrot.slane %v1332, 4
  %v1334 = vadd.f32 %v1332, %v1333
  %v1335 = vrot.slane %v1334, 2
  %v1336 = vadd.f32 %v1334, %v1335
  %v1337 = vrot.slane %v1336, 1
  %v1338 = vadd.f32 %v1336, %v1337
  %1339 = vst [vmem:[%s3] sm:$0x1] %v1338
  %v1340 = vmul.f32 %v1263, %v1263
  %v1341 = vmul.f32 %v1265, %v1265
  %v1342 = vmul.f32 %v1268, %v1268
  %v1343 = vmul.f32 %v1270, %v1270
  %v1344 = vmul.f32 %v1273, %v1273
  %v1345 = vmul.f32 %v1275, %v1275
  %v1346 = vmul.f32 %v1278, %v1278
  %v1347 = vmul.f32 %v1280, %v1280
  %v1348 = vmul.f32 %v1283, %v1283
  %v1349 = vmul.f32 %v1285, %v1285
  %v1350 = vmul.f32 %v1288, %v1288
  %v1351 = vmul.f32 %v1290, %v1290
  %v1352 = vmul.f32 %v1293, %v1293
  %v1353 = vmul.f32 %v1295, %v1295
  %v1354 = vmul.f32 %v1298, %v1298
  %v1355 = vmul.f32 %v1300, %v1300
  %v1356 = vadd.f32 %v1340, %v1341
  %v1357 = vadd.f32 %v1356, %v1342
  %v1358 = vadd.f32 %v1357, %v1343
  %v1359 = vadd.f32 %v1358, %v1344
  %v1360 = vadd.f32 %v1359, %v1345
  %v1361 = vadd.f32 %v1360, %v1346
  %v1362 = vadd.f32 %v1361, %v1347
  %v1363 = vadd.f32 %v1362, %v1348
  %v1364 = vadd.f32 %v1363, %v1349
  %v1365 = vadd.f32 %v1364, %v1350
  %v1366 = vadd.f32 %v1365, %v1351
  %v1367 = vadd.f32 %v1366, %v1352
  %v1368 = vadd.f32 %v1367, %v1353
  %v1369 = vadd.f32 %v1368, %v1354
  %v1370 = vadd.f32 %v1369, %v1355
  %v1371 = vrot.slane %v1370, 4
  %v1372 = vadd.f32 %v1370, %v1371
  %v1373 = vrot.slane %v1372, 2
  %v1374 = vadd.f32 %v1372, %v1373
  %v1375 = vrot.slane %v1374, 1
  %v1376 = vadd.f32 %v1374, %v1375
  %1377 = vst [vmem:[%s4] sm:$0x1] %v1376
  // Predicated region
  $region10: #{stage1_d_img_forward.8} parent=0 // pred_check
    _
  $region11: #{stage1_d_img_forward.8} parent=0 // pred_check_branch
    %1379 = sbr.rel (0) target = $region13
  $region12: #{stage1_d_img_forward.8} parent=0 // pred_region
    _
  $region13: #{stage1_d_img_forward.8} parent=0 // pred_fallthru
    _
  // Predicated region
  $region14: #{stage1_d_img_forward.8} parent=0 // pred_check
    _
  $region15: #{stage1_d_img_forward.8} parent=0 // pred_check_branch
    %1381 = sbr.rel (0) target = $region17
  $region16: #{stage1_d_img_forward.8} parent=0 // pred_region
    _
  $region17: #{stage1_d_img_forward.8} parent=0 // pred_fallthru
    _
  // Predicated region
  $region18: #{stage1_d_img_forward.8} parent=0 // pred_check
    _
  $region19: #{stage1_d_img_forward.8} parent=0 // pred_check_branch
    %1383 = sbr.rel (0) target = $region21
  $region20: #{stage1_d_img_forward.8} parent=0 // pred_region
    _
  $region21: #{stage1_d_img_forward.8} parent=0 // pred_fallthru
    _
  // Predicated region
  $region22: #{stage1_d_img_forward.8} parent=0 // pred_check
    _
  $region23: #{stage1_d_img_forward.8} parent=0 // pred_check_branch
    %1385 = sbr.rel (0) target = $region25
  $region24: #{stage1_d_img_forward.8} parent=0 // pred_region
    _
  $region25: #{stage1_d_img_forward.8} parent=0 // pred_fallthru
    _
  // Predicated region
  $region26: #{stage1_d_img_forward.8} parent=0 // pred_check
    _
  $region27: #{stage1_d_img_forward.8} parent=0 // pred_check_branch
    %1387 = sbr.rel (0) target = $region29
  $region28: #{stage1_d_img_forward.8} parent=0 // pred_region
    _
  $region29: #{stage1_d_img_forward.8} parent=0 // pred_fallthru
    _
  // Predicated region
  $region30: #{stage1_d_img_forward.8} parent=0 // pred_check
    _
  $region31: #{stage1_d_img_forward.8} parent=0 // pred_check_branch
    %1389 = sbr.rel (0) target = $region33
  $region32: #{stage1_d_img_forward.8} parent=0 // pred_region
    _
  $region33: #{stage1_d_img_forward.8} parent=0 // pred_fallthru
    _

// kernel: tile.25
$region0: #{tile.25}
  #allocation0 [shape = 's32[1]{0}', space=sflag, size = 0x4, scoped, tag = 'scoped memory for tile.25']
  %s0 = inlined_call_operand.vmem [shape: f32[32], index: 0, kind: input, shape index: {}]
  %s1 = inlined_call_operand.vmem [shape: f32[4,32], index: 1, kind: output, shape index: {}]
  // Predicated region
  $region2: #{tile.25} parent=0 // pred_check
    _
  $region3: #{tile.25} parent=0 // pred_check_branch
    %3 = sbr.rel (0) target = $region5
  $region4: #{tile.25} parent=0 // pred_region
    _
  $region5: #{tile.25} parent=0 // pred_fallthru
    _
  %v4 = vld [vmem:[%s0] ss:$0 sm:$0xff]
  %5 = vst [vmem:[%s1] sm:$0xf] %v4

// kernel: tile.26
$region0: #{tile.26}
  %s0 = inlined_call_operand.vmem [shape: f32[4,32], index: 0, kind: input, shape index: {}]
  %s1 = inlined_call_operand.vmem [shape: f32[1,128], index: 1, kind: output, shape index: {}]
  $region1: #{tile.26} parent=0
    #allocation0 [shape = 'u8[4096]{0}', space=vmem, size = 0x1000, scoped, tag = 'scoped mem for output reshape']
    #allocation1 [shape = 'u8[4096]{0}', space=vmem, size = 0x1000, scoped, tag = 'scoped mem for input reshape']
    %s3 = ssub.s32 16, 1
    %v4 = vld [vmem:[%s0] sm:%s3]
    %5 = vst [vmem:[#allocation1] sm:%s3] %v4
    %v6 = vld [vmem:[#allocation1] sm:$0x1]
    %vm7 = vcmask 261120
    %8 = vst.msk [vmem:[#allocation0] sm:$0x1] %vm7, %v6
    %s9 = scalar_lea.vmem [#allocation1], 3
    %v10 = vld [vmem:[%s9] sm:$0x1]
    %11 = vrot.lane.b32.xlu0 %v10, 96
    %v12 = vpop.permute.xlu0 %11
    %vm13 = vcmask 1048320
    %14 = vst.msk [vmem:[#allocation0] sm:$0x1] %vm13, %v12
    %s15 = scalar_lea.vmem [#allocation1], 2
    %v16 = vld [vmem:[%s15] sm:$0x1]
    %17 = vrot.lane.b32.xlu0 %v16, 64
    %v18 = vpop.permute.xlu0 %17
    %vm19 = vcmask 785920
    %20 = vst.msk [vmem:[#allocation0] sm:$0x1] %vm19, %v18
    %s21 = scalar_lea.vmem [#allocation1], 1
    %v22 = vld [vmem:[%s21] sm:$0x1]
    %23 = vrot.lane.b32.xlu0 %v22, 32
    %v24 = vpop.permute.xlu0 %23
    %vm25 = vcmask 523520
    %26 = vst.msk [vmem:[#allocation0] sm:$0x1] %vm25, %v24
    %s28 = ssub.s32 2, 1
    %v29 = vld [vmem:[#allocation0] sm:%s28]
    %s31 = ssub.s32 2, 1
    %32 = vst [vmem:[%s1] sm:%s31] %v29

// kernel: stage1_d_img_forward.9
$region0: #{stage1_d_img_forward.9}
  #allocation0 [shape = 'u32[]', space=smem, size = 0x4, offset = 0x4, fixed_abs, tag = 'smem constant byte address 0x4 - core index']
  #allocation1 [shape = 'u32[72,128]{1,0:T(1,128)}', space=vmem, size = 0x9000, scoped, tag = 'internal scratch']
  %s0 = inlined_call_operand.vmem [shape: f32[128,128], index: 0, kind: input, shape index: {}]
  %s1 = inlined_call_operand.vmem [shape: f32[1,128], index: 1, kind: input, shape index: {}]
  %s2 = inlined_call_operand.vmem [shape: f32[1,128], index: 2, kind: input, shape index: {}]
  %s3 = inlined_call_operand.vmem [shape: bf16[128,128], index: 3, kind: output, shape index: {}]
  %s4 = sld [smem:[#allocation0]]
  $region22: #{stage1_d_img_forward.9} parent=0
    _
  %s6 = ssub.s32 1, %s4
  %s7 = scalar_select 0, %s6, %s4
  // Predicated region
  $region2: #{stage1_d_img_forward.9} parent=0 // pred_check
    _
  $region3: #{stage1_d_img_forward.9} parent=0 // pred_check_branch
    %9 = sbr.rel (0) target = $region5
  $region4: #{stage1_d_img_forward.9} parent=0 // pred_region
    _
  $region5: #{stage1_d_img_forward.9} parent=0 // pred_fallthru
    _
  // Predicated region
  $region6: #{stage1_d_img_forward.9} parent=0 // pred_check
    _
  $region7: #{stage1_d_img_forward.9} parent=0 // pred_check_branch
    %11 = sbr.rel (0) target = $region9
  $region8: #{stage1_d_img_forward.9} parent=0 // pred_region
    _
  $region9: #{stage1_d_img_forward.9} parent=0 // pred_fallthru
    _
  // Predicated region
  $region10: #{stage1_d_img_forward.9} parent=0 // pred_check
    _
  $region11: #{stage1_d_img_forward.9} parent=0 // pred_check_branch
    %13 = sbr.rel (0) target = $region13
  $region12: #{stage1_d_img_forward.9} parent=0 // pred_region
    _
  $region13: #{stage1_d_img_forward.9} parent=0 // pred_fallthru
    _
  %v14 = vld [vmem:[%s0] sm:$0xff]
  %v15 = vld [vmem:[%s0 + $0x8] sm:$0xff]
  %v16 = vld [vmem:[%s0 + $0x10] sm:$0xff]
  %v17 = vld [vmem:[%s0 + $0x18] sm:$0xff]
  %v18 = vld [vmem:[%s0 + $0x20] sm:$0xff]
  %v19 = vld [vmem:[%s0 + $0x28] sm:$0xff]
  %v20 = vld [vmem:[%s0 + $0x30] sm:$0xff]
  %v21 = vld [vmem:[%s0 + $0x38] sm:$0xff]
  %v22 = vld [vmem:[%s0 + $0x40] sm:$0xff]
  %v23 = vld [vmem:[%s0 + $0x48] sm:$0xff]
  %v24 = vld [vmem:[%s0 + $0x50] sm:$0xff]
  %v25 = vld [vmem:[%s0 + $0x58] sm:$0xff]
  %v26 = vld [vmem:[%s0 + $0x60] sm:$0xff]
  %v27 = vld [vmem:[%s0 + $0x68] sm:$0xff]
  %v28 = vld [vmem:[%s0 + $0x70] sm:$0xff]
  %v29 = vld [vmem:[%s0 + $0x78] sm:$0xff]
  %v30 = vld [vmem:[%s1] sm:$0x1]
  %v32 = vperm.slane %v30, 0
  %v34 = vmul.f32 %v14, %v32
  %v35 = vmul.f32 %v15, %v32
  %v36 = vmul.f32 %v16, %v32
  %v37 = vmul.f32 %v17, %v32
  %v38 = vmul.f32 %v18, %v32
  %v39 = vmul.f32 %v19, %v32
  %v40 = vmul.f32 %v20, %v32
  %v41 = vmul.f32 %v21, %v32
  %v42 = vmul.f32 %v22, %v32
  %v43 = vmul.f32 %v23, %v32
  %v44 = vmul.f32 %v24, %v32
  %v45 = vmul.f32 %v25, %v32
  %v46 = vmul.f32 %v26, %v32
  %v47 = vmul.f32 %v27, %v32
  %v48 = vmul.f32 %v28, %v32
  %v49 = vmul.f32 %v29, %v32
  %v50 = vld [vmem:[%s2] sm:$0x1]
  %v52 = vperm.slane %v50, 0
  %v54 = vadd.f32 %v34, %v52
  %v55 = vadd.f32 %v35, %v52
  %v56 = vadd.f32 %v36, %v52
  %v57 = vadd.f32 %v37, %v52
  %v58 = vadd.f32 %v38, %v52
  %v59 = vadd.f32 %v39, %v52
  %v60 = vadd.f32 %v40, %v52
  %v61 = vadd.f32 %v41, %v52
  %v62 = vadd.f32 %v42, %v52
  %v63 = vadd.f32 %v43, %v52
  %v64 = vadd.f32 %v44, %v52
  %v65 = vadd.f32 %v45, %v52
  %v66 = vadd.f32 %v46, %v52
  %v67 = vadd.f32 %v47, %v52
  %v68 = vadd.f32 %v48, %v52
  %v69 = vadd.f32 %v49, %v52
  %vm70 = vcmp.ge.f32.partialorder %v54, 0.0
  %vm71 = vcmp.ge.f32.partialorder %v55, 0.0
  %vm72 = vcmp.ge.f32.partialorder %v56, 0.0
  %vm73 = vcmp.ge.f32.partialorder %v57, 0.0
  %vm74 = vcmp.ge.f32.partialorder %v58, 0.0
  %vm75 = vcmp.ge.f32.partialorder %v59, 0.0
  %vm76 = vcmp.ge.f32.partialorder %v60, 0.0
  %vm77 = vcmp.ge.f32.partialorder %v61, 0.0
  %vm78 = vcmp.ge.f32.partialorder %v62, 0.0
  %vm79 = vcmp.ge.f32.partialorder %v63, 0.0
  %vm80 = vcmp.ge.f32.partialorder %v64, 0.0
  %vm81 = vcmp.ge.f32.partialorder %v65, 0.0
  %vm82 = vcmp.ge.f32.partialorder %v66, 0.0
  %vm83 = vcmp.ge.f32.partialorder %v67, 0.0
  %vm84 = vcmp.ge.f32.partialorder %v68, 0.0
  %vm85 = vcmp.ge.f32.partialorder %v69, 0.0
  %v86 = vmul.f32 %v54, 0.2
  %v87 = vmul.f32 %v55, 0.2
  %v88 = vmul.f32 %v56, 0.2
  %v89 = vmul.f32 %v57, 0.2
  %v90 = vmul.f32 %v58, 0.2
  %v91 = vmul.f32 %v59, 0.2
  %v92 = vmul.f32 %v60, 0.2
  %v93 = vmul.f32 %v61, 0.2
  %v94 = vmul.f32 %v62, 0.2
  %v95 = vmul.f32 %v63, 0.2
  %v96 = vmul.f32 %v64, 0.2
  %v97 = vmul.f32 %v65, 0.2
  %v98 = vmul.f32 %v66, 0.2
  %v99 = vmul.f32 %v67, 0.2
  %v100 = vmul.f32 %v68, 0.2
  %v101 = vmul.f32 %v69, 0.2
  %v102 = vsel %vm70, %v54, %v86
  %v103 = vsel %vm71, %v55, %v87
  %v104 = vsel %vm72, %v56, %v88
  %v105 = vsel %vm73, %v57, %v89
  %v106 = vsel %vm74, %v58, %v90
  %v107 = vsel %vm75, %v59, %v91
  %v108 = vsel %vm76, %v60, %v92
  %v109 = vsel %vm77, %v61, %v93
  %v110 = vsel %vm78, %v62, %v94
  %v111 = vsel %vm79, %v63, %v95
  %v112 = vsel %vm80, %v64, %v96
  %v113 = vsel %vm81, %v65, %v97
  %v114 = vsel %vm82, %v66, %v98
  %v115 = vsel %vm83, %v67, %v99
  %v116 = vsel %vm84, %v68, %v100
  %v117 = vsel %vm85, %v69, %v101
  %v118 = vpack.c.bf16 %v102, %v102
  %v119 = vpack.c.bf16 %v103, %v103
  %v120 = vpack.c.bf16 %v104, %v104
  %v121 = vpack.c.bf16 %v105, %v105
  %v122 = vpack.c.bf16 %v106, %v106
  %v123 = vpack.c.bf16 %v107, %v107
  %v124 = vpack.c.bf16 %v108, %v108
  %v125 = vpack.c.bf16 %v109, %v109
  %v126 = vpack.c.bf16 %v110, %v110
  %v127 = vpack.c.bf16 %v111, %v111
  %v128 = vpack.c.bf16 %v112, %v112
  %v129 = vpack.c.bf16 %v113, %v113
  %v130 = vpack.c.bf16 %v114, %v114
  %v131 = vpack.c.bf16 %v115, %v115
  %v132 = vpack.c.bf16 %v116, %v116
  %v133 = vpack.c.bf16 %v117, %v117
  %134 = vst [vmem:[%s3] sm:$0xf] %v118
  %135 = vst [vmem:[%s3 + $0x4] sm:$0xf] %v119
  %136 = vst [vmem:[%s3 + $0x8] sm:$0xf] %v120
  %137 = vst [vmem:[%s3 + $0xc] sm:$0xf] %v121
  %138 = vst [vmem:[%s3 + $0x10] sm:$0xf] %v122
  %139 = vst [vmem:[%s3 + $0x14] sm:$0xf] %v123
  %140 = vst [vmem:[%s3 + $0x18] sm:$0xf] %v124
  %141 = vst [vmem:[%s3 + $0x1c] sm:$0xf] %v125
  %142 = vst [vmem:[%s3 + $0x20] sm:$0xf] %v126
  %143 = vst [vmem:[%s3 + $0x24] sm:$0xf] %v127
  %144 = vst [vmem:[%s3 + $0x28] sm:$0xf] %v128
  %145 = vst [vmem:[%s3 + $0x2c] sm:$0xf] %v129
  %146 = vst [vmem:[%s3 + $0x30] sm:$0xf] %v130
  %147 = vst [vmem:[%s3 + $0x34] sm:$0xf] %v131
  %148 = vst [vmem:[%s3 + $0x38] sm:$0xf] %v132
  %149 = vst [vmem:[%s3 + $0x3c] sm:$0xf] %v133
  // Predicated region
  $region14: #{stage1_d_img_forward.9} parent=0 // pred_check
    _
  $region15: #{stage1_d_img_forward.9} parent=0 // pred_check_branch
    %151 = sbr.rel (0) target = $region17
  $region16: #{stage1_d_img_forward.9} parent=0 // pred_region
    _
  $region17: #{stage1_d_img_forward.9} parent=0 // pred_fallthru
    _
  // Predicated region
  $region18: #{stage1_d_img_forward.9} parent=0 // pred_check
    _
  $region19: #{stage1_d_img_forward.9} parent=0 // pred_check_branch
    %153 = sbr.rel (0) target = $region21
  $region20: #{stage1_d_img_forward.9} parent=0 // pred_region
    _
  $region21: #{stage1_d_img_forward.9} parent=0 // pred_fallthru
    _

// kernel: tile.35
$region0: #{tile.35}
  #allocation0 [shape = 's32[1]{0}', space=sflag, size = 0x4, scoped, tag = 'scoped memory for tile.35']
  %s0 = inlined_call_operand.vmem [shape: f32[64], index: 0, kind: input, shape index: {}]
  %s1 = inlined_call_operand.vmem [shape: f32[2,64], index: 1, kind: output, shape index: {}]
  // Predicated region
  $region2: #{tile.35} parent=0 // pred_check
    _
  $region3: #{tile.35} parent=0 // pred_check_branch
    %3 = sbr.rel (0) target = $region5
  $region4: #{tile.35} parent=0 // pred_region
    _
  $region5: #{tile.35} parent=0 // pred_fallthru
    _
  %v4 = vld [vmem:[%s0] ss:$0 sm:$0xff]
  %5 = vst [vmem:[%s1] sm:$0x3] %v4

// kernel: tile.36
$region0: #{tile.36}
  %s0 = inlined_call_operand.vmem [shape: f32[2,64], index: 0, kind: input, shape index: {}]
  %s1 = inlined_call_operand.vmem [shape: f32[1,128], index: 1, kind: output, shape index: {}]
  $region1: #{tile.36} parent=0
    #allocation0 [shape = 'u8[4096]{0}', space=vmem, size = 0x1000, scoped, tag = 'scoped mem for output reshape']
    #allocation1 [shape = 'u8[4096]{0}', space=vmem, size = 0x1000, scoped, tag = 'scoped mem for input reshape']
    %s3 = ssub.s32 4, 1
    %v4 = vld [vmem:[%s0] sm:%s3]
    %5 = vst [vmem:[#allocation1] sm:%s3] %v4
    %v6 = vld [vmem:[#allocation1] sm:$0x1]
    %vm7 = vcmask 523264
    %8 = vst.msk [vmem:[#allocation0] sm:$0x1] %vm7, %v6
    %s9 = scalar_lea.vmem [#allocation1], 1
    %v10 = vld [vmem:[%s9] sm:$0x1]
    %11 = vrot.lane.b32.xlu0 %v10, 64
    %v12 = vpop.permute.xlu0 %11
    %vm13 = vcmask 1048064
    %14 = vst.msk [vmem:[#allocation0] sm:$0x1] %vm13, %v12
    %s16 = ssub.s32 2, 1
    %v17 = vld [vmem:[#allocation0] sm:%s16]
    %s19 = ssub.s32 2, 1
    %20 = vst [vmem:[%s1] sm:%s19] %v17

// kernel: stage1_d_img_forward.10
$region0: #{stage1_d_img_forward.10}
  #allocation0 [shape = 'u32[]', space=smem, size = 0x4, offset = 0x4, fixed_abs, tag = 'smem constant byte address 0x4 - core index']
  #allocation1 [shape = 'u32[72,128]{1,0:T(1,128)}', space=vmem, size = 0x9000, scoped, tag = 'internal scratch']
  %s0 = inlined_call_operand.vmem [shape: bf16[64,1024], index: 0, kind: input, shape index: {}]
  %s1 = inlined_call_operand.vmem [shape: bf16[1024,128], index: 1, kind: input, shape index: {}]
  %s2 = inlined_call_operand.vmem [shape: f32[64,128], index: 2, kind: output, shape index: {0}]
  %s3 = inlined_call_operand.vmem [shape: f32[1,1,128], index: 3, kind: output, shape index: {1}]
  %s4 = inlined_call_operand.vmem [shape: f32[1,1,128], index: 4, kind: output, shape index: {2}]
  %5 = xla_tuple %s2, %s3, %s4
  %s6 = sld [smem:[#allocation0]]
  $region34: #{stage1_d_img_forward.10} parent=0
    _
  %s8 = ssub.s32 1, %s6
  %s9 = scalar_select 0, %s8, %s6
  // Predicated region
  $region2: #{stage1_d_img_forward.10} parent=0 // pred_check
    _
  $region3: #{stage1_d_img_forward.10} parent=0 // pred_check_branch
    %11 = sbr.rel (0) target = $region5
  $region4: #{stage1_d_img_forward.10} parent=0 // pred_region
    _
  $region5: #{stage1_d_img_forward.10} parent=0 // pred_fallthru
    _
  // Predicated region
  $region6: #{stage1_d_img_forward.10} parent=0 // pred_check
    _
  $region7: #{stage1_d_img_forward.10} parent=0 // pred_check_branch
    %13 = sbr.rel (0) target = $region9
  $region8: #{stage1_d_img_forward.10} parent=0 // pred_region
    _
  $region9: #{stage1_d_img_forward.10} parent=0 // pred_fallthru
    _
  %v14 = vld [vmem:[%s0] sm:$0xff]
  %v15 = vld [vmem:[%s0 + $0x8] sm:$0xff]
  %v16 = vld [vmem:[%s0 + $0x10] sm:$0xff]
  %v17 = vld [vmem:[%s0 + $0x18] sm:$0xff]
  %v18 = vld [vmem:[%s0 + $0x20] sm:$0xff]
  %v19 = vld [vmem:[%s0 + $0x28] sm:$0xff]
  %v20 = vld [vmem:[%s0 + $0x30] sm:$0xff]
  %v21 = vld [vmem:[%s0 + $0x38] sm:$0xff]
  %v22 = vld [vmem:[%s0 + $0x40] sm:$0xff]
  %v23 = vld [vmem:[%s0 + $0x48] sm:$0xff]
  %v24 = vld [vmem:[%s0 + $0x50] sm:$0xff]
  %v25 = vld [vmem:[%s0 + $0x58] sm:$0xff]
  %v26 = vld [vmem:[%s0 + $0x60] sm:$0xff]
  %v27 = vld [vmem:[%s0 + $0x68] sm:$0xff]
  %v28 = vld [vmem:[%s0 + $0x70] sm:$0xff]
  %v29 = vld [vmem:[%s0 + $0x78] sm:$0xff]
  %v30 = vld [vmem:[%s0 + $0x80] sm:$0xff]
  %v31 = vld [vmem:[%s0 + $0x88] sm:$0xff]
  %v32 = vld [vmem:[%s0 + $0x90] sm:$0xff]
  %v33 = vld [vmem:[%s0 + $0x98] sm:$0xff]
  %v34 = vld [vmem:[%s0 + $0xa0] sm:$0xff]
  %v35 = vld [vmem:[%s0 + $0xa8] sm:$0xff]
  %v36 = vld [vmem:[%s0 + $0xb0] sm:$0xff]
  %v37 = vld [vmem:[%s0 + $0xb8] sm:$0xff]
  %v38 = vld [vmem:[%s0 + $0xc0] sm:$0xff]
  %v39 = vld [vmem:[%s0 + $0xc8] sm:$0xff]
  %v40 = vld [vmem:[%s0 + $0xd0] sm:$0xff]
  %v41 = vld [vmem:[%s0 + $0xd8] sm:$0xff]
  %v42 = vld [vmem:[%s0 + $0xe0] sm:$0xff]
  %v43 = vld [vmem:[%s0 + $0xe8] sm:$0xff]
  %v44 = vld [vmem:[%s0 + $0xf0] sm:$0xff]
  %v45 = vld [vmem:[%s0 + $0xf8] sm:$0xff]
  %v46 = vld [vmem:[%s1] sm:$0xf]
  %v47 = vld [vmem:[%s1 + $0x4] sm:$0xf]
  %v48 = vld [vmem:[%s1 + $0x8] sm:$0xf]
  %v49 = vld [vmem:[%s1 + $0xc] sm:$0xf]
  %v50 = vld [vmem:[%s1 + $0x10] sm:$0xf]
  %v51 = vld [vmem:[%s1 + $0x14] sm:$0xf]
  %v52 = vld [vmem:[%s1 + $0x18] sm:$0xf]
  %v53 = vld [vmem:[%s1 + $0x1c] sm:$0xf]
  %v54 = vld [vmem:[%s1 + $0x20] sm:$0xf]
  %v55 = vld [vmem:[%s1 + $0x24] sm:$0xf]
  %v56 = vld [vmem:[%s1 + $0x28] sm:$0xf]
  %v57 = vld [vmem:[%s1 + $0x2c] sm:$0xf]
  %v58 = vld [vmem:[%s1 + $0x30] sm:$0xf]
  %v59 = vld [vmem:[%s1 + $0x34] sm:$0xf]
  %v60 = vld [vmem:[%s1 + $0x38] sm:$0xf]
  %v61 = vld [vmem:[%s1 + $0x3c] sm:$0xf]
  %v62 = vld [vmem:[%s1 + $0x40] sm:$0xf]
  %v63 = vld [vmem:[%s1 + $0x44] sm:$0xf]
  %v64 = vld [vmem:[%s1 + $0x48] sm:$0xf]
  %v65 = vld [vmem:[%s1 + $0x4c] sm:$0xf]
  %v66 = vld [vmem:[%s1 + $0x50] sm:$0xf]
  %v67 = vld [vmem:[%s1 + $0x54] sm:$0xf]
  %v68 = vld [vmem:[%s1 + $0x58] sm:$0xf]
  %v69 = vld [vmem:[%s1 + $0x5c] sm:$0xf]
  %v70 = vld [vmem:[%s1 + $0x60] sm:$0xf]
  %v71 = vld [vmem:[%s1 + $0x64] sm:$0xf]
  %v72 = vld [vmem:[%s1 + $0x68] sm:$0xf]
  %v73 = vld [vmem:[%s1 + $0x6c] sm:$0xf]
  %v74 = vld [vmem:[%s1 + $0x70] sm:$0xf]
  %v75 = vld [vmem:[%s1 + $0x74] sm:$0xf]
  %v76 = vld [vmem:[%s1 + $0x78] sm:$0xf]
  %v77 = vld [vmem:[%s1 + $0x7c] sm:$0xf]
  %v78 = vld [vmem:[%s1 + $0x80] sm:$0xf]
  %v79 = vld [vmem:[%s1 + $0x84] sm:$0xf]
  %v80 = vld [vmem:[%s1 + $0x88] sm:$0xf]
  %v81 = vld [vmem:[%s1 + $0x8c] sm:$0xf]
  %v82 = vld [vmem:[%s1 + $0x90] sm:$0xf]
  %v83 = vld [vmem:[%s1 + $0x94] sm:$0xf]
  %v84 = vld [vmem:[%s1 + $0x98] sm:$0xf]
  %v85 = vld [vmem:[%s1 + $0x9c] sm:$0xf]
  %v86 = vld [vmem:[%s1 + $0xa0] sm:$0xf]
  %v87 = vld [vmem:[%s1 + $0xa4] sm:$0xf]
  %v88 = vld [vmem:[%s1 + $0xa8] sm:$0xf]
  %v89 = vld [vmem:[%s1 + $0xac] sm:$0xf]
  %v90 = vld [vmem:[%s1 + $0xb0] sm:$0xf]
  %v91 = vld [vmem:[%s1 + $0xb4] sm:$0xf]
  %v92 = vld [vmem:[%s1 + $0xb8] sm:$0xf]
  %v93 = vld [vmem:[%s1 + $0xbc] sm:$0xf]
  %v94 = vld [vmem:[%s1 + $0xc0] sm:$0xf]
  %v95 = vld [vmem:[%s1 + $0xc4] sm:$0xf]
  %v96 = vld [vmem:[%s1 + $0xc8] sm:$0xf]
  %v97 = vld [vmem:[%s1 + $0xcc] sm:$0xf]
  %v98 = vld [vmem:[%s1 + $0xd0] sm:$0xf]
  %v99 = vld [vmem:[%s1 + $0xd4] sm:$0xf]
  %v100 = vld [vmem:[%s1 + $0xd8] sm:$0xf]
  %v101 = vld [vmem:[%s1 + $0xdc] sm:$0xf]
  %v102 = vld [vmem:[%s1 + $0xe0] sm:$0xf]
  %v103 = vld [vmem:[%s1 + $0xe4] sm:$0xf]
  %v104 = vld [vmem:[%s1 + $0xe8] sm:$0xf]
  %v105 = vld [vmem:[%s1 + $0xec] sm:$0xf]
  %v106 = vld [vmem:[%s1 + $0xf0] sm:$0xf]
  %v107 = vld [vmem:[%s1 + $0xf4] sm:$0xf]
  %v108 = vld [vmem:[%s1 + $0xf8] sm:$0xf]
  %v109 = vld [vmem:[%s1 + $0xfc] sm:$0xf]
  %v110 = vld [vmem:[%s1 + $0x100] sm:$0xf]
  %v111 = vld [vmem:[%s1 + $0x104] sm:$0xf]
  %v112 = vld [vmem:[%s1 + $0x108] sm:$0xf]
  %v113 = vld [vmem:[%s1 + $0x10c] sm:$0xf]
  %v114 = vld [vmem:[%s1 + $0x110] sm:$0xf]
  %v115 = vld [vmem:[%s1 + $0x114] sm:$0xf]
  %v116 = vld [vmem:[%s1 + $0x118] sm:$0xf]
  %v117 = vld [vmem:[%s1 + $0x11c] sm:$0xf]
  %v118 = vld [vmem:[%s1 + $0x120] sm:$0xf]
  %v119 = vld [vmem:[%s1 + $0x124] sm:$0xf]
  %v120 = vld [vmem:[%s1 + $0x128] sm:$0xf]
  %v121 = vld [vmem:[%s1 + $0x12c] sm:$0xf]
  %v122 = vld [vmem:[%s1 + $0x130] sm:$0xf]
  %v123 = vld [vmem:[%s1 + $0x134] sm:$0xf]
  %v124 = vld [vmem:[%s1 + $0x138] sm:$0xf]
  %v125 = vld [vmem:[%s1 + $0x13c] sm:$0xf]
  %v126 = vld [vmem:[%s1 + $0x140] sm:$0xf]
  %v127 = vld [vmem:[%s1 + $0x144] sm:$0xf]
  %v128 = vld [vmem:[%s1 + $0x148] sm:$0xf]
  %v129 = vld [vmem:[%s1 + $0x14c] sm:$0xf]
  %v130 = vld [vmem:[%s1 + $0x150] sm:$0xf]
  %v131 = vld [vmem:[%s1 + $0x154] sm:$0xf]
  %v132 = vld [vmem:[%s1 + $0x158] sm:$0xf]
  %v133 = vld [vmem:[%s1 + $0x15c] sm:$0xf]
  %v134 = vld [vmem:[%s1 + $0x160] sm:$0xf]
  %v135 = vld [vmem:[%s1 + $0x164] sm:$0xf]
  %v136 = vld [vmem:[%s1 + $0x168] sm:$0xf]
  %v137 = vld [vmem:[%s1 + $0x16c] sm:$0xf]
  %v138 = vld [vmem:[%s1 + $0x170] sm:$0xf]
  %v139 = vld [vmem:[%s1 + $0x174] sm:$0xf]
  %v140 = vld [vmem:[%s1 + $0x178] sm:$0xf]
  %v141 = vld [vmem:[%s1 + $0x17c] sm:$0xf]
  %v142 = vld [vmem:[%s1 + $0x180] sm:$0xf]
  %v143 = vld [vmem:[%s1 + $0x184] sm:$0xf]
  %v144 = vld [vmem:[%s1 + $0x188] sm:$0xf]
  %v145 = vld [vmem:[%s1 + $0x18c] sm:$0xf]
  %v146 = vld [vmem:[%s1 + $0x190] sm:$0xf]
  %v147 = vld [vmem:[%s1 + $0x194] sm:$0xf]
  %v148 = vld [vmem:[%s1 + $0x198] sm:$0xf]
  %v149 = vld [vmem:[%s1 + $0x19c] sm:$0xf]
  %v150 = vld [vmem:[%s1 + $0x1a0] sm:$0xf]
  %v151 = vld [vmem:[%s1 + $0x1a4] sm:$0xf]
  %v152 = vld [vmem:[%s1 + $0x1a8] sm:$0xf]
  %v153 = vld [vmem:[%s1 + $0x1ac] sm:$0xf]
  %v154 = vld [vmem:[%s1 + $0x1b0] sm:$0xf]
  %v155 = vld [vmem:[%s1 + $0x1b4] sm:$0xf]
  %v156 = vld [vmem:[%s1 + $0x1b8] sm:$0xf]
  %v157 = vld [vmem:[%s1 + $0x1bc] sm:$0xf]
  %v158 = vld [vmem:[%s1 + $0x1c0] sm:$0xf]
  %v159 = vld [vmem:[%s1 + $0x1c4] sm:$0xf]
  %v160 = vld [vmem:[%s1 + $0x1c8] sm:$0xf]
  %v161 = vld [vmem:[%s1 + $0x1cc] sm:$0xf]
  %v162 = vld [vmem:[%s1 + $0x1d0] sm:$0xf]
  %v163 = vld [vmem:[%s1 + $0x1d4] sm:$0xf]
  %v164 = vld [vmem:[%s1 + $0x1d8] sm:$0xf]
  %v165 = vld [vmem:[%s1 + $0x1dc] sm:$0xf]
  %v166 = vld [vmem:[%s1 + $0x1e0] sm:$0xf]
  %v167 = vld [vmem:[%s1 + $0x1e4] sm:$0xf]
  %v168 = vld [vmem:[%s1 + $0x1e8] sm:$0xf]
  %v169 = vld [vmem:[%s1 + $0x1ec] sm:$0xf]
  %v170 = vld [vmem:[%s1 + $0x1f0] sm:$0xf]
  %v171 = vld [vmem:[%s1 + $0x1f4] sm:$0xf]
  %v172 = vld [vmem:[%s1 + $0x1f8] sm:$0xf]
  %v173 = vld [vmem:[%s1 + $0x1fc] sm:$0xf]
  %v206 = vunpack.c.l.b16 %v14
  %v207 = vunpack.c.h.b16 %v14
  %v208 = vunpack.c.l.b16 %v15
  %v209 = vunpack.c.h.b16 %v15
  %v210 = vunpack.c.l.b16 %v16
  %v211 = vunpack.c.h.b16 %v16
  %v212 = vunpack.c.l.b16 %v17
  %v213 = vunpack.c.h.b16 %v17
  %v214 = vunpack.c.l.b16 %v18
  %v215 = vunpack.c.h.b16 %v18
  %v216 = vunpack.c.l.b16 %v19
  %v217 = vunpack.c.h.b16 %v19
  %v218 = vunpack.c.l.b16 %v20
  %v219 = vunpack.c.h.b16 %v20
  %v220 = vunpack.c.l.b16 %v21
  %v221 = vunpack.c.h.b16 %v21
  %v222 = vunpack.c.l.b16 %v22
  %v223 = vunpack.c.h.b16 %v22
  %v224 = vunpack.c.l.b16 %v23
  %v225 = vunpack.c.h.b16 %v23
  %v226 = vunpack.c.l.b16 %v24
  %v227 = vunpack.c.h.b16 %v24
  %v228 = vunpack.c.l.b16 %v25
  %v229 = vunpack.c.h.b16 %v25
  %v230 = vunpack.c.l.b16 %v26
  %v231 = vunpack.c.h.b16 %v26
  %v232 = vunpack.c.l.b16 %v27
  %v233 = vunpack.c.h.b16 %v27
  %v234 = vunpack.c.l.b16 %v28
  %v235 = vunpack.c.h.b16 %v28
  %v236 = vunpack.c.l.b16 %v29
  %v237 = vunpack.c.h.b16 %v29
  %v238 = vunpack.c.l.b16 %v30
  %v239 = vunpack.c.h.b16 %v30
  %v240 = vunpack.c.l.b16 %v31
  %v241 = vunpack.c.h.b16 %v31
  %v242 = vunpack.c.l.b16 %v32
  %v243 = vunpack.c.h.b16 %v32
  %v244 = vunpack.c.l.b16 %v33
  %v245 = vunpack.c.h.b16 %v33
  %v246 = vunpack.c.l.b16 %v34
  %v247 = vunpack.c.h.b16 %v34
  %v248 = vunpack.c.l.b16 %v35
  %v249 = vunpack.c.h.b16 %v35
  %v250 = vunpack.c.l.b16 %v36
  %v251 = vunpack.c.h.b16 %v36
  %v252 = vunpack.c.l.b16 %v37
  %v253 = vunpack.c.h.b16 %v37
  %v254 = vunpack.c.l.b16 %v38
  %v255 = vunpack.c.h.b16 %v38
  %v256 = vunpack.c.l.b16 %v39
  %v257 = vunpack.c.h.b16 %v39
  %v258 = vunpack.c.l.b16 %v40
  %v259 = vunpack.c.h.b16 %v40
  %v260 = vunpack.c.l.b16 %v41
  %v261 = vunpack.c.h.b16 %v41
  %v262 = vunpack.c.l.b16 %v42
  %v263 = vunpack.c.h.b16 %v42
  %v264 = vunpack.c.l.b16 %v43
  %v265 = vunpack.c.h.b16 %v43
  %v266 = vunpack.c.l.b16 %v44
  %v267 = vunpack.c.h.b16 %v44
  %v268 = vunpack.c.l.b16 %v45
  %v269 = vunpack.c.h.b16 %v45
  %v270 = vpack.c.b16 %v214, %v206
  %v271 = vpack.c.b16 %v215, %v207
  %v272 = vpack.c.b16 %v216, %v208
  %v273 = vpack.c.b16 %v217, %v209
  %v274 = vpack.c.b16 %v218, %v210
  %v275 = vpack.c.b16 %v219, %v211
  %v276 = vpack.c.b16 %v220, %v212
  %v277 = vpack.c.b16 %v221, %v213
  %v278 = vpack.c.b16 %v230, %v222
  %v279 = vpack.c.b16 %v231, %v223
  %v280 = vpack.c.b16 %v232, %v224
  %v281 = vpack.c.b16 %v233, %v225
  %v282 = vpack.c.b16 %v234, %v226
  %v283 = vpack.c.b16 %v235, %v227
  %v284 = vpack.c.b16 %v236, %v228
  %v285 = vpack.c.b16 %v237, %v229
  %v286 = vpack.c.b16 %v246, %v238
  %v287 = vpack.c.b16 %v247, %v239
  %v288 = vpack.c.b16 %v248, %v240
  %v289 = vpack.c.b16 %v249, %v241
  %v290 = vpack.c.b16 %v250, %v242
  %v291 = vpack.c.b16 %v251, %v243
  %v292 = vpack.c.b16 %v252, %v244
  %v293 = vpack.c.b16 %v253, %v245
  %v294 = vpack.c.b16 %v262, %v254
  %v295 = vpack.c.b16 %v263, %v255
  %v296 = vpack.c.b16 %v264, %v256
  %v297 = vpack.c.b16 %v265, %v257
  %v298 = vpack.c.b16 %v266, %v258
  %v299 = vpack.c.b16 %v267, %v259
  %v300 = vpack.c.b16 %v268, %v260
  %v301 = vpack.c.b16 %v269, %v261
  %v462 = vunpack.c.l.b16 %v46
  %v463 = vunpack.c.l.b16 %v47
  %v464 = vunpack.c.l.b16 %v48
  %v465 = vunpack.c.l.b16 %v49
  %v466 = vunpack.c.l.b16 %v50
  %v467 = vunpack.c.l.b16 %v51
  %v468 = vunpack.c.l.b16 %v52
  %v469 = vunpack.c.l.b16 %v53
  %v470 = vunpack.c.l.b16 %v54
  %v471 = vunpack.c.l.b16 %v55
  %v472 = vunpack.c.l.b16 %v56
  %v473 = vunpack.c.l.b16 %v57
  %v474 = vunpack.c.l.b16 %v58
  %v475 = vunpack.c.l.b16 %v59
  %v476 = vunpack.c.l.b16 %v60
  %v477 = vunpack.c.l.b16 %v61
  %v478 = vunpack.c.l.b16 %v62
  %v479 = vunpack.c.l.b16 %v63
  %v480 = vunpack.c.l.b16 %v64
  %v481 = vunpack.c.l.b16 %v65
  %v482 = vunpack.c.l.b16 %v66
  %v483 = vunpack.c.l.b16 %v67
  %v484 = vunpack.c.l.b16 %v68
  %v485 = vunpack.c.l.b16 %v69
  %v486 = vunpack.c.l.b16 %v70
  %v487 = vunpack.c.l.b16 %v71
  %v488 = vunpack.c.l.b16 %v72
  %v489 = vunpack.c.l.b16 %v73
  %v490 = vunpack.c.l.b16 %v74
  %v491 = vunpack.c.l.b16 %v75
  %v492 = vunpack.c.l.b16 %v76
  %v493 = vunpack.c.l.b16 %v77
  %v494 = vunpack.c.l.b16 %v78
  %v495 = vunpack.c.l.b16 %v79
  %v496 = vunpack.c.l.b16 %v80
  %v497 = vunpack.c.l.b16 %v81
  %v498 = vunpack.c.l.b16 %v82
  %v499 = vunpack.c.l.b16 %v83
  %v500 = vunpack.c.l.b16 %v84
  %v501 = vunpack.c.l.b16 %v85
  %v502 = vunpack.c.l.b16 %v86
  %v503 = vunpack.c.l.b16 %v87
  %v504 = vunpack.c.l.b16 %v88
  %v505 = vunpack.c.l.b16 %v89
  %v506 = vunpack.c.l.b16 %v90
  %v507 = vunpack.c.l.b16 %v91
  %v508 = vunpack.c.l.b16 %v92
  %v509 = vunpack.c.l.b16 %v93
  %v510 = vunpack.c.l.b16 %v94
  %v511 = vunpack.c.l.b16 %v95
  %v512 = vunpack.c.l.b16 %v96
  %v513 = vunpack.c.l.b16 %v97
  %v514 = vunpack.c.l.b16 %v98
  %v515 = vunpack.c.l.b16 %v99
  %v516 = vunpack.c.l.b16 %v100
  %v517 = vunpack.c.l.b16 %v101
  %v518 = vunpack.c.l.b16 %v102
  %v519 = vunpack.c.l.b16 %v103
  %v520 = vunpack.c.l.b16 %v104
  %v521 = vunpack.c.l.b16 %v105
  %v522 = vunpack.c.l.b16 %v106
  %v523 = vunpack.c.l.b16 %v107
  %v524 = vunpack.c.l.b16 %v108
  %v525 = vunpack.c.l.b16 %v109
  %v526 = vunpack.c.l.b16 %v110
  %v527 = vunpack.c.l.b16 %v111
  %v528 = vunpack.c.l.b16 %v112
  %v529 = vunpack.c.l.b16 %v113
  %v530 = vunpack.c.l.b16 %v114
  %v531 = vunpack.c.l.b16 %v115
  %v532 = vunpack.c.l.b16 %v116
  %v533 = vunpack.c.l.b16 %v117
  %v534 = vunpack.c.l.b16 %v118
  %v535 = vunpack.c.l.b16 %v119
  %v536 = vunpack.c.l.b16 %v120
  %v537 = vunpack.c.l.b16 %v121
  %v538 = vunpack.c.l.b16 %v122
  %v539 = vunpack.c.l.b16 %v123
  %v540 = vunpack.c.l.b16 %v124
  %v541 = vunpack.c.l.b16 %v125
  %v542 = vunpack.c.l.b16 %v126
  %v543 = vunpack.c.l.b16 %v127
  %v544 = vunpack.c.l.b16 %v128
  %v545 = vunpack.c.l.b16 %v129
  %v546 = vunpack.c.l.b16 %v130
  %v547 = vunpack.c.l.b16 %v131
  %v548 = vunpack.c.l.b16 %v132
  %v549 = vunpack.c.l.b16 %v133
  %v550 = vunpack.c.l.b16 %v134
  %v551 = vunpack.c.l.b16 %v135
  %v552 = vunpack.c.l.b16 %v136
  %v553 = vunpack.c.l.b16 %v137
  %v554 = vunpack.c.l.b16 %v138
  %v555 = vunpack.c.l.b16 %v139
  %v556 = vunpack.c.l.b16 %v140
  %v557 = vunpack.c.l.b16 %v141
  %v558 = vunpack.c.l.b16 %v142
  %v559 = vunpack.c.l.b16 %v143
  %v560 = vunpack.c.l.b16 %v144
  %v561 = vunpack.c.l.b16 %v145
  %v562 = vunpack.c.l.b16 %v146
  %v563 = vunpack.c.l.b16 %v147
  %v564 = vunpack.c.l.b16 %v148
  %v565 = vunpack.c.l.b16 %v149
  %v566 = vunpack.c.l.b16 %v150
  %v567 = vunpack.c.l.b16 %v151
  %v568 = vunpack.c.l.b16 %v152
  %v569 = vunpack.c.l.b16 %v153
  %v570 = vunpack.c.l.b16 %v154
  %v571 = vunpack.c.l.b16 %v155
  %v572 = vunpack.c.l.b16 %v156
  %v573 = vunpack.c.l.b16 %v157
  %v574 = vunpack.c.l.b16 %v158
  %v575 = vunpack.c.l.b16 %v159
  %v576 = vunpack.c.l.b16 %v160
  %v577 = vunpack.c.l.b16 %v161
  %v578 = vunpack.c.l.b16 %v162
  %v579 = vunpack.c.l.b16 %v163
  %v580 = vunpack.c.l.b16 %v164
  %v581 = vunpack.c.l.b16 %v165
  %v582 = vunpack.c.l.b16 %v166
  %v583 = vunpack.c.l.b16 %v167
  %v584 = vunpack.c.l.b16 %v168
  %v585 = vunpack.c.l.b16 %v169
  %v586 = vunpack.c.l.b16 %v170
  %v587 = vunpack.c.l.b16 %v171
  %v588 = vunpack.c.l.b16 %v172
  %v589 = vunpack.c.l.b16 %v173
  %v590 = vpack.c.b16 %v463, %v462
  %v591 = vpack.c.b16 %v465, %v464
  %v592 = vpack.c.b16 %v467, %v466
  %v593 = vpack.c.b16 %v469, %v468
  %v594 = vpack.c.b16 %v471, %v470
  %v595 = vpack.c.b16 %v473, %v472
  %v596 = vpack.c.b16 %v475, %v474
  %v597 = vpack.c.b16 %v477, %v476
  %v598 = vpack.c.b16 %v479, %v478
  %v599 = vpack.c.b16 %v481, %v480
  %v600 = vpack.c.b16 %v483, %v482
  %v601 = vpack.c.b16 %v485, %v484
  %v602 = vpack.c.b16 %v487, %v486
  %v603 = vpack.c.b16 %v489, %v488
  %v604 = vpack.c.b16 %v491, %v490
  %v605 = vpack.c.b16 %v493, %v492
  %v606 = vpack.c.b16 %v495, %v494
  %v607 = vpack.c.b16 %v497, %v496
  %v608 = vpack.c.b16 %v499, %v498
  %v609 = vpack.c.b16 %v501, %v500
  %v610 = vpack.c.b16 %v503, %v502
  %v611 = vpack.c.b16 %v505, %v504
  %v612 = vpack.c.b16 %v507, %v506
  %v613 = vpack.c.b16 %v509, %v508
  %v614 = vpack.c.b16 %v511, %v510
  %v615 = vpack.c.b16 %v513, %v512
  %v616 = vpack.c.b16 %v515, %v514
  %v617 = vpack.c.b16 %v517, %v516
  %v618 = vpack.c.b16 %v519, %v518
  %v619 = vpack.c.b16 %v521, %v520
  %v620 = vpack.c.b16 %v523, %v522
  %v621 = vpack.c.b16 %v525, %v524
  %v622 = vpack.c.b16 %v527, %v526
  %v623 = vpack.c.b16 %v529, %v528
  %v624 = vpack.c.b16 %v531, %v530
  %v625 = vpack.c.b16 %v533, %v532
  %v626 = vpack.c.b16 %v535, %v534
  %v627 = vpack.c.b16 %v537, %v536
  %v628 = vpack.c.b16 %v539, %v538
  %v629 = vpack.c.b16 %v541, %v540
  %v630 = vpack.c.b16 %v543, %v542
  %v631 = vpack.c.b16 %v545, %v544
  %v632 = vpack.c.b16 %v547, %v546
  %v633 = vpack.c.b16 %v549, %v548
  %v634 = vpack.c.b16 %v551, %v550
  %v635 = vpack.c.b16 %v553, %v552
  %v636 = vpack.c.b16 %v555, %v554
  %v637 = vpack.c.b16 %v557, %v556
  %v638 = vpack.c.b16 %v559, %v558
  %v639 = vpack.c.b16 %v561, %v560
  %v640 = vpack.c.b16 %v563, %v562
  %v641 = vpack.c.b16 %v565, %v564
  %v642 = vpack.c.b16 %v567, %v566
  %v643 = vpack.c.b16 %v569, %v568
  %v644 = vpack.c.b16 %v571, %v570
  %v645 = vpack.c.b16 %v573, %v572
  %v646 = vpack.c.b16 %v575, %v574
  %v647 = vpack.c.b16 %v577, %v576
  %v648 = vpack.c.b16 %v579, %v578
  %v649 = vpack.c.b16 %v581, %v580
  %v650 = vpack.c.b16 %v583, %v582
  %v651 = vpack.c.b16 %v585, %v584
  %v652 = vpack.c.b16 %v587, %v586
  %v653 = vpack.c.b16 %v589, %v588
  %718 = vmatpush.bf16.msra.mxu0 %v597
  %719 = vmatpush.bf16.msra.mxu0 %v596
  %720 = vmatpush.bf16.msra.mxu0 %v595
  %721 = vmatpush.bf16.msra.mxu0 %v594
  %722 = vmatpush.bf16.msra.mxu0 %v593
  %723 = vmatpush.bf16.msra.mxu0 %v592
  %724 = vmatpush.bf16.msra.mxu0 %v591
  %725 = vmatpush.bf16.msra.mxu0 %v590
  %726 = vmatmul.bf16.gmra.mxu0 %v270
  %v727 = vpop.f32.mrf.mxu0
  %v728 = vadd.f32 0.0, %v727
  %v729 = vpop.f32.mrf.mxu0
  %v730 = vadd.f32 0.0, %v729
  %731 = vmatmul.bf16.gmra.mxu0 %v278
  %v732 = vpop.f32.mrf.mxu0
  %v733 = vadd.f32 0.0, %v732
  %v734 = vpop.f32.mrf.mxu0
  %v735 = vadd.f32 0.0, %v734
  %736 = vmatmul.bf16.gmra.mxu0 %v286
  %v737 = vpop.f32.mrf.mxu0
  %v738 = vadd.f32 0.0, %v737
  %v739 = vpop.f32.mrf.mxu0
  %v740 = vadd.f32 0.0, %v739
  %741 = vmatmul.bf16.gmra.mxu0 %v294
  %v742 = vpop.f32.mrf.mxu0
  %v743 = vadd.f32 0.0, %v742
  %v744 = vpop.f32.mrf.mxu0
  %v745 = vadd.f32 0.0, %v744
  %746 = vdwg.mxu0
  %747 = vmatpush.bf16.msra.mxu0 %v605
  %748 = vmatpush.bf16.msra.mxu0 %v604
  %749 = vmatpush.bf16.msra.mxu0 %v603
  %750 = vmatpush.bf16.msra.mxu0 %v602
  %751 = vmatpush.bf16.msra.mxu0 %v601
  %752 = vmatpush.bf16.msra.mxu0 %v600
  %753 = vmatpush.bf16.msra.mxu0 %v599
  %754 = vmatpush.bf16.msra.mxu0 %v598
  %755 = vmatmul.bf16.gmra.mxu0 %v271
  %v756 = vpop.f32.mrf.mxu0
  %v757 = vadd.f32 %v728, %v756
  %v758 = vpop.f32.mrf.mxu0
  %v759 = vadd.f32 %v730, %v758
  %760 = vmatmul.bf16.gmra.mxu0 %v279
  %v761 = vpop.f32.mrf.mxu0
  %v762 = vadd.f32 %v733, %v761
  %v763 = vpop.f32.mrf.mxu0
  %v764 = vadd.f32 %v735, %v763
  %765 = vmatmul.bf16.gmra.mxu0 %v287
  %v766 = vpop.f32.mrf.mxu0
  %v767 = vadd.f32 %v738, %v766
  %v768 = vpop.f32.mrf.mxu0
  %v769 = vadd.f32 %v740, %v768
  %770 = vmatmul.bf16.gmra.mxu0 %v295
  %v771 = vpop.f32.mrf.mxu0
  %v772 = vadd.f32 %v743, %v771
  %v773 = vpop.f32.mrf.mxu0
  %v774 = vadd.f32 %v745, %v773
  %775 = vdwg.mxu0
  %776 = vmatpush.bf16.msra.mxu0 %v613
  %777 = vmatpush.bf16.msra.mxu0 %v612
  %778 = vmatpush.bf16.msra.mxu0 %v611
  %779 = vmatpush.bf16.msra.mxu0 %v610
  %780 = vmatpush.bf16.msra.mxu0 %v609
  %781 = vmatpush.bf16.msra.mxu0 %v608
  %782 = vmatpush.bf16.msra.mxu0 %v607
  %783 = vmatpush.bf16.msra.mxu0 %v606
  %784 = vmatmul.bf16.gmra.mxu0 %v272
  %v785 = vpop.f32.mrf.mxu0
  %v786 = vadd.f32 %v757, %v785
  %v787 = vpop.f32.mrf.mxu0
  %v788 = vadd.f32 %v759, %v787
  %789 = vmatmul.bf16.gmra.mxu0 %v280
  %v790 = vpop.f32.mrf.mxu0
  %v791 = vadd.f32 %v762, %v790
  %v792 = vpop.f32.mrf.mxu0
  %v793 = vadd.f32 %v764, %v792
  %794 = vmatmul.bf16.gmra.mxu0 %v288
  %v795 = vpop.f32.mrf.mxu0
  %v796 = vadd.f32 %v767, %v795
  %v797 = vpop.f32.mrf.mxu0
  %v798 = vadd.f32 %v769, %v797
  %799 = vmatmul.bf16.gmra.mxu0 %v296
  %v800 = vpop.f32.mrf.mxu0
  %v801 = vadd.f32 %v772, %v800
  %v802 = vpop.f32.mrf.mxu0
  %v803 = vadd.f32 %v774, %v802
  %804 = vdwg.mxu0
  %805 = vmatpush.bf16.msra.mxu0 %v621
  %806 = vmatpush.bf16.msra.mxu0 %v620
  %807 = vmatpush.bf16.msra.mxu0 %v619
  %808 = vmatpush.bf16.msra.mxu0 %v618
  %809 = vmatpush.bf16.msra.mxu0 %v617
  %810 = vmatpush.bf16.msra.mxu0 %v616
  %811 = vmatpush.bf16.msra.mxu0 %v615
  %812 = vmatpush.bf16.msra.mxu0 %v614
  %813 = vmatmul.bf16.gmra.mxu0 %v273
  %v814 = vpop.f32.mrf.mxu0
  %v815 = vadd.f32 %v786, %v814
  %v816 = vpop.f32.mrf.mxu0
  %v817 = vadd.f32 %v788, %v816
  %818 = vmatmul.bf16.gmra.mxu0 %v281
  %v819 = vpop.f32.mrf.mxu0
  %v820 = vadd.f32 %v791, %v819
  %v821 = vpop.f32.mrf.mxu0
  %v822 = vadd.f32 %v793, %v821
  %823 = vmatmul.bf16.gmra.mxu0 %v289
  %v824 = vpop.f32.mrf.mxu0
  %v825 = vadd.f32 %v796, %v824
  %v826 = vpop.f32.mrf.mxu0
  %v827 = vadd.f32 %v798, %v826
  %828 = vmatmul.bf16.gmra.mxu0 %v297
  %v829 = vpop.f32.mrf.mxu0
  %v830 = vadd.f32 %v801, %v829
  %v831 = vpop.f32.mrf.mxu0
  %v832 = vadd.f32 %v803, %v831
  %833 = vdwg.mxu0
  %834 = vmatpush.bf16.msra.mxu0 %v629
  %835 = vmatpush.bf16.msra.mxu0 %v628
  %836 = vmatpush.bf16.msra.mxu0 %v627
  %837 = vmatpush.bf16.msra.mxu0 %v626
  %838 = vmatpush.bf16.msra.mxu0 %v625
  %839 = vmatpush.bf16.msra.mxu0 %v624
  %840 = vmatpush.bf16.msra.mxu0 %v623
  %841 = vmatpush.bf16.msra.mxu0 %v622
  %842 = vmatmul.bf16.gmra.mxu0 %v274
  %v843 = vpop.f32.mrf.mxu0
  %v844 = vadd.f32 %v815, %v843
  %v845 = vpop.f32.mrf.mxu0
  %v846 = vadd.f32 %v817, %v845
  %847 = vmatmul.bf16.gmra.mxu0 %v282
  %v848 = vpop.f32.mrf.mxu0
  %v849 = vadd.f32 %v820, %v848
  %v850 = vpop.f32.mrf.mxu0
  %v851 = vadd.f32 %v822, %v850
  %852 = vmatmul.bf16.gmra.mxu0 %v290
  %v853 = vpop.f32.mrf.mxu0
  %v854 = vadd.f32 %v825, %v853
  %v855 = vpop.f32.mrf.mxu0
  %v856 = vadd.f32 %v827, %v855
  %857 = vmatmul.bf16.gmra.mxu0 %v298
  %v858 = vpop.f32.mrf.mxu0
  %v859 = vadd.f32 %v830, %v858
  %v860 = vpop.f32.mrf.mxu0
  %v861 = vadd.f32 %v832, %v860
  %862 = vdwg.mxu0
  %863 = vmatpush.bf16.msra.mxu0 %v637
  %864 = vmatpush.bf16.msra.mxu0 %v636
  %865 = vmatpush.bf16.msra.mxu0 %v635
  %866 = vmatpush.bf16.msra.mxu0 %v634
  %867 = vmatpush.bf16.msra.mxu0 %v633
  %868 = vmatpush.bf16.msra.mxu0 %v632
  %869 = vmatpush.bf16.msra.mxu0 %v631
  %870 = vmatpush.bf16.msra.mxu0 %v630
  %871 = vmatmul.bf16.gmra.mxu0 %v275
  %v872 = vpop.f32.mrf.mxu0
  %v873 = vadd.f32 %v844, %v872
  %v874 = vpop.f32.mrf.mxu0
  %v875 = vadd.f32 %v846, %v874
  %876 = vmatmul.bf16.gmra.mxu0 %v283
  %v877 = vpop.f32.mrf.mxu0
  %v878 = vadd.f32 %v849, %v877
  %v879 = vpop.f32.mrf.mxu0
  %v880 = vadd.f32 %v851, %v879
  %881 = vmatmul.bf16.gmra.mxu0 %v291
  %v882 = vpop.f32.mrf.mxu0
  %v883 = vadd.f32 %v854, %v882
  %v884 = vpop.f32.mrf.mxu0
  %v885 = vadd.f32 %v856, %v884
  %886 = vmatmul.bf16.gmra.mxu0 %v299
  %v887 = vpop.f32.mrf.mxu0
  %v888 = vadd.f32 %v859, %v887
  %v889 = vpop.f32.mrf.mxu0
  %v890 = vadd.f32 %v861, %v889
  %891 = vdwg.mxu0
  %892 = vmatpush.bf16.msra.mxu0 %v645
  %893 = vmatpush.bf16.msra.mxu0 %v644
  %894 = vmatpush.bf16.msra.mxu0 %v643
  %895 = vmatpush.bf16.msra.mxu0 %v642
  %896 = vmatpush.bf16.msra.mxu0 %v641
  %897 = vmatpush.bf16.msra.mxu0 %v640
  %898 = vmatpush.bf16.msra.mxu0 %v639
  %899 = vmatpush.bf16.msra.mxu0 %v638
  %900 = vmatmul.bf16.gmra.mxu0 %v276
  %v901 = vpop.f32.mrf.mxu0
  %v902 = vadd.f32 %v873, %v901
  %v903 = vpop.f32.mrf.mxu0
  %v904 = vadd.f32 %v875, %v903
  %905 = vmatmul.bf16.gmra.mxu0 %v284
  %v906 = vpop.f32.mrf.mxu0
  %v907 = vadd.f32 %v878, %v906
  %v908 = vpop.f32.mrf.mxu0
  %v909 = vadd.f32 %v880, %v908
  %910 = vmatmul.bf16.gmra.mxu0 %v292
  %v911 = vpop.f32.mrf.mxu0
  %v912 = vadd.f32 %v883, %v911
  %v913 = vpop.f32.mrf.mxu0
  %v914 = vadd.f32 %v885, %v913
  %915 = vmatmul.bf16.gmra.mxu0 %v300
  %v916 = vpop.f32.mrf.mxu0
  %v917 = vadd.f32 %v888, %v916
  %v918 = vpop.f32.mrf.mxu0
  %v919 = vadd.f32 %v890, %v918
  %920 = vdwg.mxu0
  %921 = vmatpush.bf16.msra.mxu0 %v653
  %922 = vmatpush.bf16.msra.mxu0 %v652
  %923 = vmatpush.bf16.msra.mxu0 %v651
  %924 = vmatpush.bf16.msra.mxu0 %v650
  %925 = vmatpush.bf16.msra.mxu0 %v649
  %926 = vmatpush.bf16.msra.mxu0 %v648
  %927 = vmatpush.bf16.msra.mxu0 %v647
  %928 = vmatpush.bf16.msra.mxu0 %v646
  %929 = vmatmul.bf16.gmra.mxu0 %v277
  %v930 = vpop.f32.mrf.mxu0
  %v931 = vadd.f32 %v902, %v930
  %v932 = vpop.f32.mrf.mxu0
  %v933 = vadd.f32 %v904, %v932
  %934 = vmatmul.bf16.gmra.mxu0 %v285
  %v935 = vpop.f32.mrf.mxu0
  %v936 = vadd.f32 %v907, %v935
  %v937 = vpop.f32.mrf.mxu0
  %v938 = vadd.f32 %v909, %v937
  %939 = vmatmul.bf16.gmra.mxu0 %v293
  %v940 = vpop.f32.mrf.mxu0
  %v941 = vadd.f32 %v912, %v940
  %v942 = vpop.f32.mrf.mxu0
  %v943 = vadd.f32 %v914, %v942
  %944 = vmatmul.bf16.gmra.mxu0 %v301
  %v945 = vpop.f32.mrf.mxu0
  %v946 = vadd.f32 %v917, %v945
  %v947 = vpop.f32.mrf.mxu0
  %v948 = vadd.f32 %v919, %v947
  %949 = vdwg.mxu0
  %950 = vst [vmem:[%s2] sm:$0xff] %v931
  %951 = vst [vmem:[%s2 + $0x8] sm:$0xff] %v933
  %952 = vst [vmem:[%s2 + $0x10] sm:$0xff] %v936
  %953 = vst [vmem:[%s2 + $0x18] sm:$0xff] %v938
  %954 = vst [vmem:[%s2 + $0x20] sm:$0xff] %v941
  %955 = vst [vmem:[%s2 + $0x28] sm:$0xff] %v943
  %956 = vst [vmem:[%s2 + $0x30] sm:$0xff] %v946
  %957 = vst [vmem:[%s2 + $0x38] sm:$0xff] %v948
  %v958 = vadd.f32 %v931, %v933
  %v959 = vadd.f32 %v958, %v936
  %v960 = vadd.f32 %v959, %v938
  %v961 = vadd.f32 %v960, %v941
  %v962 = vadd.f32 %v961, %v943
  %v963 = vadd.f32 %v962, %v946
  %v964 = vadd.f32 %v963, %v948
  %v965 = vrot.slane %v964, 4
  %v966 = vadd.f32 %v964, %v965
  %v967 = vrot.slane %v966, 2
  %v968 = vadd.f32 %v966, %v967
  %v969 = vrot.slane %v968, 1
  %v970 = vadd.f32 %v968, %v969
  %971 = vst [vmem:[%s3] sm:$0x1] %v970
  %v972 = vmul.f32 %v931, %v931
  %v973 = vmul.f32 %v933, %v933
  %v974 = vmul.f32 %v936, %v936
  %v975 = vmul.f32 %v938, %v938
  %v976 = vmul.f32 %v941, %v941
  %v977 = vmul.f32 %v943, %v943
  %v978 = vmul.f32 %v946, %v946
  %v979 = vmul.f32 %v948, %v948
  %v980 = vadd.f32 %v972, %v973
  %v981 = vadd.f32 %v980, %v974
  %v982 = vadd.f32 %v981, %v975
  %v983 = vadd.f32 %v982, %v976
  %v984 = vadd.f32 %v983, %v977
  %v985 = vadd.f32 %v984, %v978
  %v986 = vadd.f32 %v985, %v979
  %v987 = vrot.slane %v986, 4
  %v988 = vadd.f32 %v986, %v987
  %v989 = vrot.slane %v988, 2
  %v990 = vadd.f32 %v988, %v989
  %v991 = vrot.slane %v990, 1
  %v992 = vadd.f32 %v990, %v991
  %993 = vst [vmem:[%s4] sm:$0x1] %v992
  // Predicated region
  $region10: #{stage1_d_img_forward.10} parent=0 // pred_check
    _
  $region11: #{stage1_d_img_forward.10} parent=0 // pred_check_branch
    %995 = sbr.rel (0) target = $region13
  $region12: #{stage1_d_img_forward.10} parent=0 // pred_region
    _
  $region13: #{stage1_d_img_forward.10} parent=0 // pred_fallthru
    _
  // Predicated region
  $region14: #{stage1_d_img_forward.10} parent=0 // pred_check
    _
  $region15: #{stage1_d_img_forward.10} parent=0 // pred_check_branch
    %997 = sbr.rel (0) target = $region17
  $region16: #{stage1_d_img_forward.10} parent=0 // pred_region
    _
  $region17: #{stage1_d_img_forward.10} parent=0 // pred_fallthru
    _
  // Predicated region
  $region18: #{stage1_d_img_forward.10} parent=0 // pred_check
    _
  $region19: #{stage1_d_img_forward.10} parent=0 // pred_check_branch
    %999 = sbr.rel (0) target = $region21
  $region20: #{stage1_d_img_forward.10} parent=0 // pred_region
    _
  $region21: #{stage1_d_img_forward.10} parent=0 // pred_fallthru
    _
  // Predicated region
  $region22: #{stage1_d_img_forward.10} parent=0 // pred_check
    _
  $region23: #{stage1_d_img_forward.10} parent=0 // pred_check_branch
    %1001 = sbr.rel (0) target = $region25
  $region24: #{stage1_d_img_forward.10} parent=0 // pred_region
    _
  $region25: #{stage1_d_img_forward.10} parent=0 // pred_fallthru
    _
  // Predicated region
  $region26: #{stage1_d_img_forward.10} parent=0 // pred_check
    _
  $region27: #{stage1_d_img_forward.10} parent=0 // pred_check_branch
    %1003 = sbr.rel (0) target = $region29
  $region28: #{stage1_d_img_forward.10} parent=0 // pred_region
    _
  $region29: #{stage1_d_img_forward.10} parent=0 // pred_fallthru
    _
  // Predicated region
  $region30: #{stage1_d_img_forward.10} parent=0 // pred_check
    _
  $region31: #{stage1_d_img_forward.10} parent=0 // pred_check_branch
    %1005 = sbr.rel (0) target = $region33
  $region32: #{stage1_d_img_forward.10} parent=0 // pred_region
    _
  $region33: #{stage1_d_img_forward.10} parent=0 // pred_fallthru
    _

// kernel: stage1_d_img_forward.11
$region0: #{stage1_d_img_forward.11}
  #allocation0 [shape = 'u32[]', space=smem, size = 0x4, offset = 0x4, fixed_abs, tag = 'smem constant byte address 0x4 - core index']
  #allocation1 [shape = 'u32[72,128]{1,0:T(1,128)}', space=vmem, size = 0x9000, scoped, tag = 'internal scratch']
  %s0 = inlined_call_operand.vmem [shape: f32[64,128], index: 0, kind: input, shape index: {}]
  %s1 = inlined_call_operand.vmem [shape: f32[1,128], index: 1, kind: input, shape index: {}]
  %s2 = inlined_call_operand.vmem [shape: f32[1,128], index: 2, kind: input, shape index: {}]
  %s3 = inlined_call_operand.vmem [shape: bf16[64,128], index: 3, kind: output, shape index: {}]
  %s4 = sld [smem:[#allocation0]]
  $region22: #{stage1_d_img_forward.11} parent=0
    _
  %s6 = ssub.s32 1, %s4
  %s7 = scalar_select 0, %s6, %s4
  // Predicated region
  $region2: #{stage1_d_img_forward.11} parent=0 // pred_check
    _
  $region3: #{stage1_d_img_forward.11} parent=0 // pred_check_branch
    %9 = sbr.rel (0) target = $region5
  $region4: #{stage1_d_img_forward.11} parent=0 // pred_region
    _
  $region5: #{stage1_d_img_forward.11} parent=0 // pred_fallthru
    _
  // Predicated region
  $region6: #{stage1_d_img_forward.11} parent=0 // pred_check
    _
  $region7: #{stage1_d_img_forward.11} parent=0 // pred_check_branch
    %11 = sbr.rel (0) target = $region9
  $region8: #{stage1_d_img_forward.11} parent=0 // pred_region
    _
  $region9: #{stage1_d_img_forward.11} parent=0 // pred_fallthru
    _
  // Predicated region
  $region10: #{stage1_d_img_forward.11} parent=0 // pred_check
    _
  $region11: #{stage1_d_img_forward.11} parent=0 // pred_check_branch
    %13 = sbr.rel (0) target = $region13
  $region12: #{stage1_d_img_forward.11} parent=0 // pred_region
    _
  $region13: #{stage1_d_img_forward.11} parent=0 // pred_fallthru
    _
  %v14 = vld [vmem:[%s0] sm:$0xff]
  %v15 = vld [vmem:[%s0 + $0x8] sm:$0xff]
  %v16 = vld [vmem:[%s0 + $0x10] sm:$0xff]
  %v17 = vld [vmem:[%s0 + $0x18] sm:$0xff]
  %v18 = vld [vmem:[%s0 + $0x20] sm:$0xff]
  %v19 = vld [vmem:[%s0 + $0x28] sm:$0xff]
  %v20 = vld [vmem:[%s0 + $0x30] sm:$0xff]
  %v21 = vld [vmem:[%s0 + $0x38] sm:$0xff]
  %v22 = vld [vmem:[%s1] sm:$0x1]
  %v24 = vperm.slane %v22, 0
  %v26 = vmul.f32 %v14, %v24
  %v27 = vmul.f32 %v15, %v24
  %v28 = vmul.f32 %v16, %v24
  %v29 = vmul.f32 %v17, %v24
  %v30 = vmul.f32 %v18, %v24
  %v31 = vmul.f32 %v19, %v24
  %v32 = vmul.f32 %v20, %v24
  %v33 = vmul.f32 %v21, %v24
  %v34 = vld [vmem:[%s2] sm:$0x1]
  %v36 = vperm.slane %v34, 0
  %v38 = vadd.f32 %v26, %v36
  %v39 = vadd.f32 %v27, %v36
  %v40 = vadd.f32 %v28, %v36
  %v41 = vadd.f32 %v29, %v36
  %v42 = vadd.f32 %v30, %v36
  %v43 = vadd.f32 %v31, %v36
  %v44 = vadd.f32 %v32, %v36
  %v45 = vadd.f32 %v33, %v36
  %vm46 = vcmp.ge.f32.partialorder %v38, 0.0
  %vm47 = vcmp.ge.f32.partialorder %v39, 0.0
  %vm48 = vcmp.ge.f32.partialorder %v40, 0.0
  %vm49 = vcmp.ge.f32.partialorder %v41, 0.0
  %vm50 = vcmp.ge.f32.partialorder %v42, 0.0
  %vm51 = vcmp.ge.f32.partialorder %v43, 0.0
  %vm52 = vcmp.ge.f32.partialorder %v44, 0.0
  %vm53 = vcmp.ge.f32.partialorder %v45, 0.0
  %v54 = vmul.f32 %v38, 0.2
  %v55 = vmul.f32 %v39, 0.2
  %v56 = vmul.f32 %v40, 0.2
  %v57 = vmul.f32 %v41, 0.2
  %v58 = vmul.f32 %v42, 0.2
  %v59 = vmul.f32 %v43, 0.2
  %v60 = vmul.f32 %v44, 0.2
  %v61 = vmul.f32 %v45, 0.2
  %v62 = vsel %vm46, %v38, %v54
  %v63 = vsel %vm47, %v39, %v55
  %v64 = vsel %vm48, %v40, %v56
  %v65 = vsel %vm49, %v41, %v57
  %v66 = vsel %vm50, %v42, %v58
  %v67 = vsel %vm51, %v43, %v59
  %v68 = vsel %vm52, %v44, %v60
  %v69 = vsel %vm53, %v45, %v61
  %v70 = vpack.c.bf16 %v62, %v62
  %v71 = vpack.c.bf16 %v63, %v63
  %v72 = vpack.c.bf16 %v64, %v64
  %v73 = vpack.c.bf16 %v65, %v65
  %v74 = vpack.c.bf16 %v66, %v66
  %v75 = vpack.c.bf16 %v67, %v67
  %v76 = vpack.c.bf16 %v68, %v68
  %v77 = vpack.c.bf16 %v69, %v69
  %78 = vst [vmem:[%s3] sm:$0xf] %v70
  %79 = vst [vmem:[%s3 + $0x4] sm:$0xf] %v71
  %80 = vst [vmem:[%s3 + $0x8] sm:$0xf] %v72
  %81 = vst [vmem:[%s3 + $0xc] sm:$0xf] %v73
  %82 = vst [vmem:[%s3 + $0x10] sm:$0xf] %v74
  %83 = vst [vmem:[%s3 + $0x14] sm:$0xf] %v75
  %84 = vst [vmem:[%s3 + $0x18] sm:$0xf] %v76
  %85 = vst [vmem:[%s3 + $0x1c] sm:$0xf] %v77
  // Predicated region
  $region14: #{stage1_d_img_forward.11} parent=0 // pred_check
    _
  $region15: #{stage1_d_img_forward.11} parent=0 // pred_check_branch
    %87 = sbr.rel (0) target = $region17
  $region16: #{stage1_d_img_forward.11} parent=0 // pred_region
    _
  $region17: #{stage1_d_img_forward.11} parent=0 // pred_fallthru
    _
  // Predicated region
  $region18: #{stage1_d_img_forward.11} parent=0 // pred_check
    _
  $region19: #{stage1_d_img_forward.11} parent=0 // pred_check_branch
    %89 = sbr.rel (0) target = $region21
  $region20: #{stage1_d_img_forward.11} parent=0 // pred_region
    _
  $region21: #{stage1_d_img_forward.11} parent=0 // pred_fallthru
    _

// kernel: stage1_d_img_forward.13
$region0: #{stage1_d_img_forward.13}
  #allocation0 [shape = 'u32[]', space=smem, size = 0x4, offset = 0x4, fixed_abs, tag = 'smem constant byte address 0x4 - core index']
  #allocation1 [shape = 'u32[72,128]{1,0:T(1,128)}', space=vmem, size = 0x9000, scoped, tag = 'internal scratch']
  %s0 = inlined_call_operand.vmem [shape: f32[32,128], index: 0, kind: input, shape index: {}]
  %s1 = inlined_call_operand.vmem [shape: f32[1,128], index: 1, kind: input, shape index: {}]
  %s2 = inlined_call_operand.vmem [shape: f32[1,128], index: 2, kind: input, shape index: {}]
  %s3 = inlined_call_operand.hbm [shape: f32[32,128], index: 3, kind: output, shape index: {}]
  %s4 = sld [smem:[#allocation0]]
  $region22: #{stage1_d_img_forward.13} parent=0
    _
  %s6 = ssub.s32 1, %s4
  %s7 = scalar_select 0, %s6, %s4
  $region1: #{stage1_d_img_forward.13} parent=0
    #allocation2 [shape = 'u8[16384]{0}', space=vmem, size = 0x4000, scoped, tag = 'output window, operand 0, single buffered']
    #allocation3 [shape = 's32[1]{0}', space=sflag, size = 0x4, scoped, tag = 'scoped memory for stage1_d_img_forward.13']
    %8 = vsyncpa [#allocation3], 0
    // Predicated region
    $region2: #{stage1_d_img_forward.13} parent=1 // pred_check
      _
    $region3: #{stage1_d_img_forward.13} parent=1 // pred_check_branch
      %10 = sbr.rel (0) target = $region5
    $region4: #{stage1_d_img_forward.13} parent=1 // pred_region
      _
    $region5: #{stage1_d_img_forward.13} parent=1 // pred_fallthru
      _
    // Predicated region
    $region6: #{stage1_d_img_forward.13} parent=1 // pred_check
      _
    $region7: #{stage1_d_img_forward.13} parent=1 // pred_check_branch
      %12 = sbr.rel (0) target = $region9
    $region8: #{stage1_d_img_forward.13} parent=1 // pred_region
      _
    $region9: #{stage1_d_img_forward.13} parent=1 // pred_fallthru
      _
    // Predicated region
    $region10: #{stage1_d_img_forward.13} parent=1 // pred_check
      _
    $region11: #{stage1_d_img_forward.13} parent=1 // pred_check_branch
      %14 = sbr.rel (0) target = $region13
    $region12: #{stage1_d_img_forward.13} parent=1 // pred_region
      _
    $region13: #{stage1_d_img_forward.13} parent=1 // pred_fallthru
      _
    %v15 = vld [vmem:[%s0] sm:$0xff]
    %v16 = vld [vmem:[%s0 + $0x8] sm:$0xff]
    %v17 = vld [vmem:[%s0 + $0x10] sm:$0xff]
    %v18 = vld [vmem:[%s0 + $0x18] sm:$0xff]
    %v19 = vld [vmem:[%s1] sm:$0x1]
    %v21 = vperm.slane %v19, 0
    %v23 = vmul.f32 %v15, %v21
    %v24 = vmul.f32 %v16, %v21
    %v25 = vmul.f32 %v17, %v21
    %v26 = vmul.f32 %v18, %v21
    %v27 = vld [vmem:[%s2] sm:$0x1]
    %v29 = vperm.slane %v27, 0
    %v31 = vadd.f32 %v23, %v29
    %v32 = vadd.f32 %v24, %v29
    %v33 = vadd.f32 %v25, %v29
    %v34 = vadd.f32 %v26, %v29
    %vm35 = vcmp.ge.f32.partialorder %v31, 0.0
    %vm36 = vcmp.ge.f32.partialorder %v32, 0.0
    %vm37 = vcmp.ge.f32.partialorder %v33, 0.0
    %vm38 = vcmp.ge.f32.partialorder %v34, 0.0
    %v39 = vmul.f32 %v31, 0.2
    %v40 = vmul.f32 %v32, 0.2
    %v41 = vmul.f32 %v33, 0.2
    %v42 = vmul.f32 %v34, 0.2
    %v43 = vsel %vm35, %v31, %v39
    %v44 = vsel %vm36, %v32, %v40
    %v45 = vsel %vm37, %v33, %v41
    %v46 = vsel %vm38, %v34, %v42
    %47 = vst [vmem:[#allocation2] sm:$0xff] %v43
    %48 = vst [vmem:[#allocation2 + $0x8] sm:$0xff] %v44
    %49 = vst [vmem:[#allocation2 + $0x10] sm:$0xff] %v45
    %50 = vst [vmem:[#allocation2 + $0x18] sm:$0xff] %v46
    // Predicated region
    $region14: #{stage1_d_img_forward.13} parent=1 // pred_check
      _
    $region15: #{stage1_d_img_forward.13} parent=1 // pred_check_branch
      %52 = sbr.rel (0) target = $region17
    $region16: #{stage1_d_img_forward.13} parent=1 // pred_region
      %54 = vsyncadd [#allocation3], 0
      %s55 = sshll.u32 [#allocation2], 4
      %s56 = int_to_ptr.vmem [resolvable:$true] %s55
      %s57 = sshll.u32 %s3, 4
      %s58 = int_to_ptr.hbm [resolvable:$true] %s57
      %63 = dma.vmem_to_hbm [thread:$0]  %s56, 512, %s58, [#allocation3], 128, 128, 8
    $region17: #{stage1_d_img_forward.13} parent=1 // pred_fallthru
      _
    // Predicated region
    $region18: #{stage1_d_img_forward.13} parent=1 // pred_check
      _
    $region19: #{stage1_d_img_forward.13} parent=1 // pred_check_branch
      %65 = sbr.rel (0) target = $region21
    $region20: #{stage1_d_img_forward.13} parent=1 // pred_region
      %67 = dma.done [#allocation3], 512
    $region21: #{stage1_d_img_forward.13} parent=1 // pred_fallthru
      _
    %68 = vsyncpa [#allocation3], 1

// kernel: stage1_d_img_forward.12
$region0: #{stage1_d_img_forward.12}
  #allocation0 [shape = 'u32[]', space=smem, size = 0x4, offset = 0x4, fixed_abs, tag = 'smem constant byte address 0x4 - core index']
  #allocation1 [shape = 'u32[72,128]{1,0:T(1,128)}', space=vmem, size = 0x9000, scoped, tag = 'internal scratch']
  %s0 = inlined_call_operand.vmem [shape: bf16[32,1024], index: 0, kind: input, shape index: {}]
  %s1 = inlined_call_operand.vmem [shape: bf16[1024,128], index: 1, kind: input, shape index: {}]
  %s2 = inlined_call_operand.vmem [shape: f32[32,128], index: 2, kind: output, shape index: {0}]
  %s3 = inlined_call_operand.vmem [shape: f32[1,1,128], index: 3, kind: output, shape index: {1}]
  %s4 = inlined_call_operand.vmem [shape: f32[1,1,128], index: 4, kind: output, shape index: {2}]
  %5 = xla_tuple %s2, %s3, %s4
  %s6 = sld [smem:[#allocation0]]
  $region34: #{stage1_d_img_forward.12} parent=0
    _
  %s8 = ssub.s32 1, %s6
  %s9 = scalar_select 0, %s8, %s6
  // Predicated region
  $region2: #{stage1_d_img_forward.12} parent=0 // pred_check
    _
  $region3: #{stage1_d_img_forward.12} parent=0 // pred_check_branch
    %11 = sbr.rel (0) target = $region5
  $region4: #{stage1_d_img_forward.12} parent=0 // pred_region
    _
  $region5: #{stage1_d_img_forward.12} parent=0 // pred_fallthru
    _
  // Predicated region
  $region6: #{stage1_d_img_forward.12} parent=0 // pred_check
    _
  $region7: #{stage1_d_img_forward.12} parent=0 // pred_check_branch
    %13 = sbr.rel (0) target = $region9
  $region8: #{stage1_d_img_forward.12} parent=0 // pred_region
    _
  $region9: #{stage1_d_img_forward.12} parent=0 // pred_fallthru
    _
  %v14 = vld [vmem:[%s0] sm:$0xff]
  %v15 = vld [vmem:[%s0 + $0x8] sm:$0xff]
  %v16 = vld [vmem:[%s0 + $0x10] sm:$0xff]
  %v17 = vld [vmem:[%s0 + $0x18] sm:$0xff]
  %v18 = vld [vmem:[%s0 + $0x20] sm:$0xff]
  %v19 = vld [vmem:[%s0 + $0x28] sm:$0xff]
  %v20 = vld [vmem:[%s0 + $0x30] sm:$0xff]
  %v21 = vld [vmem:[%s0 + $0x38] sm:$0xff]
  %v22 = vld [vmem:[%s0 + $0x40] sm:$0xff]
  %v23 = vld [vmem:[%s0 + $0x48] sm:$0xff]
  %v24 = vld [vmem:[%s0 + $0x50] sm:$0xff]
  %v25 = vld [vmem:[%s0 + $0x58] sm:$0xff]
  %v26 = vld [vmem:[%s0 + $0x60] sm:$0xff]
  %v27 = vld [vmem:[%s0 + $0x68] sm:$0xff]
  %v28 = vld [vmem:[%s0 + $0x70] sm:$0xff]
  %v29 = vld [vmem:[%s0 + $0x78] sm:$0xff]
  %v30 = vld [vmem:[%s1] sm:$0xf]
  %v31 = vld [vmem:[%s1 + $0x4] sm:$0xf]
  %v32 = vld [vmem:[%s1 + $0x8] sm:$0xf]
  %v33 = vld [vmem:[%s1 + $0xc] sm:$0xf]
  %v34 = vld [vmem:[%s1 + $0x10] sm:$0xf]
  %v35 = vld [vmem:[%s1 + $0x14] sm:$0xf]
  %v36 = vld [vmem:[%s1 + $0x18] sm:$0xf]
  %v37 = vld [vmem:[%s1 + $0x1c] sm:$0xf]
  %v38 = vld [vmem:[%s1 + $0x20] sm:$0xf]
  %v39 = vld [vmem:[%s1 + $0x24] sm:$0xf]
  %v40 = vld [vmem:[%s1 + $0x28] sm:$0xf]
  %v41 = vld [vmem:[%s1 + $0x2c] sm:$0xf]
  %v42 = vld [vmem:[%s1 + $0x30] sm:$0xf]
  %v43 = vld [vmem:[%s1 + $0x34] sm:$0xf]
  %v44 = vld [vmem:[%s1 + $0x38] sm:$0xf]
  %v45 = vld [vmem:[%s1 + $0x3c] sm:$0xf]
  %v46 = vld [vmem:[%s1 + $0x40] sm:$0xf]
  %v47 = vld [vmem:[%s1 + $0x44] sm:$0xf]
  %v48 = vld [vmem:[%s1 + $0x48] sm:$0xf]
  %v49 = vld [vmem:[%s1 + $0x4c] sm:$0xf]
  %v50 = vld [vmem:[%s1 + $0x50] sm:$0xf]
  %v51 = vld [vmem:[%s1 + $0x54] sm:$0xf]
  %v52 = vld [vmem:[%s1 + $0x58] sm:$0xf]
  %v53 = vld [vmem:[%s1 + $0x5c] sm:$0xf]
  %v54 = vld [vmem:[%s1 + $0x60] sm:$0xf]
  %v55 = vld [vmem:[%s1 + $0x64] sm:$0xf]
  %v56 = vld [vmem:[%s1 + $0x68] sm:$0xf]
  %v57 = vld [vmem:[%s1 + $0x6c] sm:$0xf]
  %v58 = vld [vmem:[%s1 + $0x70] sm:$0xf]
  %v59 = vld [vmem:[%s1 + $0x74] sm:$0xf]
  %v60 = vld [vmem:[%s1 + $0x78] sm:$0xf]
  %v61 = vld [vmem:[%s1 + $0x7c] sm:$0xf]
  %v62 = vld [vmem:[%s1 + $0x80] sm:$0xf]
  %v63 = vld [vmem:[%s1 + $0x84] sm:$0xf]
  %v64 = vld [vmem:[%s1 + $0x88] sm:$0xf]
  %v65 = vld [vmem:[%s1 + $0x8c] sm:$0xf]
  %v66 = vld [vmem:[%s1 + $0x90] sm:$0xf]
  %v67 = vld [vmem:[%s1 + $0x94] sm:$0xf]
  %v68 = vld [vmem:[%s1 + $0x98] sm:$0xf]
  %v69 = vld [vmem:[%s1 + $0x9c] sm:$0xf]
  %v70 = vld [vmem:[%s1 + $0xa0] sm:$0xf]
  %v71 = vld [vmem:[%s1 + $0xa4] sm:$0xf]
  %v72 = vld [vmem:[%s1 + $0xa8] sm:$0xf]
  %v73 = vld [vmem:[%s1 + $0xac] sm:$0xf]
  %v74 = vld [vmem:[%s1 + $0xb0] sm:$0xf]
  %v75 = vld [vmem:[%s1 + $0xb4] sm:$0xf]
  %v76 = vld [vmem:[%s1 + $0xb8] sm:$0xf]
  %v77 = vld [vmem:[%s1 + $0xbc] sm:$0xf]
  %v78 = vld [vmem:[%s1 + $0xc0] sm:$0xf]
  %v79 = vld [vmem:[%s1 + $0xc4] sm:$0xf]
  %v80 = vld [vmem:[%s1 + $0xc8] sm:$0xf]
  %v81 = vld [vmem:[%s1 + $0xcc] sm:$0xf]
  %v82 = vld [vmem:[%s1 + $0xd0] sm:$0xf]
  %v83 = vld [vmem:[%s1 + $0xd4] sm:$0xf]
  %v84 = vld [vmem:[%s1 + $0xd8] sm:$0xf]
  %v85 = vld [vmem:[%s1 + $0xdc] sm:$0xf]
  %v86 = vld [vmem:[%s1 + $0xe0] sm:$0xf]
  %v87 = vld [vmem:[%s1 + $0xe4] sm:$0xf]
  %v88 = vld [vmem:[%s1 + $0xe8] sm:$0xf]
  %v89 = vld [vmem:[%s1 + $0xec] sm:$0xf]
  %v90 = vld [vmem:[%s1 + $0xf0] sm:$0xf]
  %v91 = vld [vmem:[%s1 + $0xf4] sm:$0xf]
  %v92 = vld [vmem:[%s1 + $0xf8] sm:$0xf]
  %v93 = vld [vmem:[%s1 + $0xfc] sm:$0xf]
  %v94 = vld [vmem:[%s1 + $0x100] sm:$0xf]
  %v95 = vld [vmem:[%s1 + $0x104] sm:$0xf]
  %v96 = vld [vmem:[%s1 + $0x108] sm:$0xf]
  %v97 = vld [vmem:[%s1 + $0x10c] sm:$0xf]
  %v98 = vld [vmem:[%s1 + $0x110] sm:$0xf]
  %v99 = vld [vmem:[%s1 + $0x114] sm:$0xf]
  %v100 = vld [vmem:[%s1 + $0x118] sm:$0xf]
  %v101 = vld [vmem:[%s1 + $0x11c] sm:$0xf]
  %v102 = vld [vmem:[%s1 + $0x120] sm:$0xf]
  %v103 = vld [vmem:[%s1 + $0x124] sm:$0xf]
  %v104 = vld [vmem:[%s1 + $0x128] sm:$0xf]
  %v105 = vld [vmem:[%s1 + $0x12c] sm:$0xf]
  %v106 = vld [vmem:[%s1 + $0x130] sm:$0xf]
  %v107 = vld [vmem:[%s1 + $0x134] sm:$0xf]
  %v108 = vld [vmem:[%s1 + $0x138] sm:$0xf]
  %v109 = vld [vmem:[%s1 + $0x13c] sm:$0xf]
  %v110 = vld [vmem:[%s1 + $0x140] sm:$0xf]
  %v111 = vld [vmem:[%s1 + $0x144] sm:$0xf]
  %v112 = vld [vmem:[%s1 + $0x148] sm:$0xf]
  %v113 = vld [vmem:[%s1 + $0x14c] sm:$0xf]
  %v114 = vld [vmem:[%s1 + $0x150] sm:$0xf]
  %v115 = vld [vmem:[%s1 + $0x154] sm:$0xf]
  %v116 = vld [vmem:[%s1 + $0x158] sm:$0xf]
  %v117 = vld [vmem:[%s1 + $0x15c] sm:$0xf]
  %v118 = vld [vmem:[%s1 + $0x160] sm:$0xf]
  %v119 = vld [vmem:[%s1 + $0x164] sm:$0xf]
  %v120 = vld [vmem:[%s1 + $0x168] sm:$0xf]
  %v121 = vld [vmem:[%s1 + $0x16c] sm:$0xf]
  %v122 = vld [vmem:[%s1 + $0x170] sm:$0xf]
  %v123 = vld [vmem:[%s1 + $0x174] sm:$0xf]
  %v124 = vld [vmem:[%s1 + $0x178] sm:$0xf]
  %v125 = vld [vmem:[%s1 + $0x17c] sm:$0xf]
  %v126 = vld [vmem:[%s1 + $0x180] sm:$0xf]
  %v127 = vld [vmem:[%s1 + $0x184] sm:$0xf]
  %v128 = vld [vmem:[%s1 + $0x188] sm:$0xf]
  %v129 = vld [vmem:[%s1 + $0x18c] sm:$0xf]
  %v130 = vld [vmem:[%s1 + $0x190] sm:$0xf]
  %v131 = vld [vmem:[%s1 + $0x194] sm:$0xf]
  %v132 = vld [vmem:[%s1 + $0x198] sm:$0xf]
  %v133 = vld [vmem:[%s1 + $0x19c] sm:$0xf]
  %v134 = vld [vmem:[%s1 + $0x1a0] sm:$0xf]
  %v135 = vld [vmem:[%s1 + $0x1a4] sm:$0xf]
  %v136 = vld [vmem:[%s1 + $0x1a8] sm:$0xf]
  %v137 = vld [vmem:[%s1 + $0x1ac] sm:$0xf]
  %v138 = vld [vmem:[%s1 + $0x1b0] sm:$0xf]
  %v139 = vld [vmem:[%s1 + $0x1b4] sm:$0xf]
  %v140 = vld [vmem:[%s1 + $0x1b8] sm:$0xf]
  %v141 = vld [vmem:[%s1 + $0x1bc] sm:$0xf]
  %v142 = vld [vmem:[%s1 + $0x1c0] sm:$0xf]
  %v143 = vld [vmem:[%s1 + $0x1c4] sm:$0xf]
  %v144 = vld [vmem:[%s1 + $0x1c8] sm:$0xf]
  %v145 = vld [vmem:[%s1 + $0x1cc] sm:$0xf]
  %v146 = vld [vmem:[%s1 + $0x1d0] sm:$0xf]
  %v147 = vld [vmem:[%s1 + $0x1d4] sm:$0xf]
  %v148 = vld [vmem:[%s1 + $0x1d8] sm:$0xf]
  %v149 = vld [vmem:[%s1 + $0x1dc] sm:$0xf]
  %v150 = vld [vmem:[%s1 + $0x1e0] sm:$0xf]
  %v151 = vld [vmem:[%s1 + $0x1e4] sm:$0xf]
  %v152 = vld [vmem:[%s1 + $0x1e8] sm:$0xf]
  %v153 = vld [vmem:[%s1 + $0x1ec] sm:$0xf]
  %v154 = vld [vmem:[%s1 + $0x1f0] sm:$0xf]
  %v155 = vld [vmem:[%s1 + $0x1f4] sm:$0xf]
  %v156 = vld [vmem:[%s1 + $0x1f8] sm:$0xf]
  %v157 = vld [vmem:[%s1 + $0x1fc] sm:$0xf]
  %v174 = vunpack.c.l.b16 %v14
  %v175 = vunpack.c.h.b16 %v14
  %v176 = vunpack.c.l.b16 %v15
  %v177 = vunpack.c.h.b16 %v15
  %v178 = vunpack.c.l.b16 %v16
  %v179 = vunpack.c.h.b16 %v16
  %v180 = vunpack.c.l.b16 %v17
  %v181 = vunpack.c.h.b16 %v17
  %v182 = vunpack.c.l.b16 %v18
  %v183 = vunpack.c.h.b16 %v18
  %v184 = vunpack.c.l.b16 %v19
  %v185 = vunpack.c.h.b16 %v19
  %v186 = vunpack.c.l.b16 %v20
  %v187 = vunpack.c.h.b16 %v20
  %v188 = vunpack.c.l.b16 %v21
  %v189 = vunpack.c.h.b16 %v21
  %v190 = vunpack.c.l.b16 %v22
  %v191 = vunpack.c.h.b16 %v22
  %v192 = vunpack.c.l.b16 %v23
  %v193 = vunpack.c.h.b16 %v23
  %v194 = vunpack.c.l.b16 %v24
  %v195 = vunpack.c.h.b16 %v24
  %v196 = vunpack.c.l.b16 %v25
  %v197 = vunpack.c.h.b16 %v25
  %v198 = vunpack.c.l.b16 %v26
  %v199 = vunpack.c.h.b16 %v26
  %v200 = vunpack.c.l.b16 %v27
  %v201 = vunpack.c.h.b16 %v27
  %v202 = vunpack.c.l.b16 %v28
  %v203 = vunpack.c.h.b16 %v28
  %v204 = vunpack.c.l.b16 %v29
  %v205 = vunpack.c.h.b16 %v29
  %v206 = vpack.c.b16 %v182, %v174
  %v207 = vpack.c.b16 %v183, %v175
  %v208 = vpack.c.b16 %v184, %v176
  %v209 = vpack.c.b16 %v185, %v177
  %v210 = vpack.c.b16 %v186, %v178
  %v211 = vpack.c.b16 %v187, %v179
  %v212 = vpack.c.b16 %v188, %v180
  %v213 = vpack.c.b16 %v189, %v181
  %v214 = vpack.c.b16 %v198, %v190
  %v215 = vpack.c.b16 %v199, %v191
  %v216 = vpack.c.b16 %v200, %v192
  %v217 = vpack.c.b16 %v201, %v193
  %v218 = vpack.c.b16 %v202, %v194
  %v219 = vpack.c.b16 %v203, %v195
  %v220 = vpack.c.b16 %v204, %v196
  %v221 = vpack.c.b16 %v205, %v197
  %v366 = vunpack.c.l.b16 %v30
  %v367 = vunpack.c.l.b16 %v31
  %v368 = vunpack.c.l.b16 %v32
  %v369 = vunpack.c.l.b16 %v33
  %v370 = vunpack.c.l.b16 %v34
  %v371 = vunpack.c.l.b16 %v35
  %v372 = vunpack.c.l.b16 %v36
  %v373 = vunpack.c.l.b16 %v37
  %v374 = vunpack.c.l.b16 %v38
  %v375 = vunpack.c.l.b16 %v39
  %v376 = vunpack.c.l.b16 %v40
  %v377 = vunpack.c.l.b16 %v41
  %v378 = vunpack.c.l.b16 %v42
  %v379 = vunpack.c.l.b16 %v43
  %v380 = vunpack.c.l.b16 %v44
  %v381 = vunpack.c.l.b16 %v45
  %v382 = vunpack.c.l.b16 %v46
  %v383 = vunpack.c.l.b16 %v47
  %v384 = vunpack.c.l.b16 %v48
  %v385 = vunpack.c.l.b16 %v49
  %v386 = vunpack.c.l.b16 %v50
  %v387 = vunpack.c.l.b16 %v51
  %v388 = vunpack.c.l.b16 %v52
  %v389 = vunpack.c.l.b16 %v53
  %v390 = vunpack.c.l.b16 %v54
  %v391 = vunpack.c.l.b16 %v55
  %v392 = vunpack.c.l.b16 %v56
  %v393 = vunpack.c.l.b16 %v57
  %v394 = vunpack.c.l.b16 %v58
  %v395 = vunpack.c.l.b16 %v59
  %v396 = vunpack.c.l.b16 %v60
  %v397 = vunpack.c.l.b16 %v61
  %v398 = vunpack.c.l.b16 %v62
  %v399 = vunpack.c.l.b16 %v63
  %v400 = vunpack.c.l.b16 %v64
  %v401 = vunpack.c.l.b16 %v65
  %v402 = vunpack.c.l.b16 %v66
  %v403 = vunpack.c.l.b16 %v67
  %v404 = vunpack.c.l.b16 %v68
  %v405 = vunpack.c.l.b16 %v69
  %v406 = vunpack.c.l.b16 %v70
  %v407 = vunpack.c.l.b16 %v71
  %v408 = vunpack.c.l.b16 %v72
  %v409 = vunpack.c.l.b16 %v73
  %v410 = vunpack.c.l.b16 %v74
  %v411 = vunpack.c.l.b16 %v75
  %v412 = vunpack.c.l.b16 %v76
  %v413 = vunpack.c.l.b16 %v77
  %v414 = vunpack.c.l.b16 %v78
  %v415 = vunpack.c.l.b16 %v79
  %v416 = vunpack.c.l.b16 %v80
  %v417 = vunpack.c.l.b16 %v81
  %v418 = vunpack.c.l.b16 %v82
  %v419 = vunpack.c.l.b16 %v83
  %v420 = vunpack.c.l.b16 %v84
  %v421 = vunpack.c.l.b16 %v85
  %v422 = vunpack.c.l.b16 %v86
  %v423 = vunpack.c.l.b16 %v87
  %v424 = vunpack.c.l.b16 %v88
  %v425 = vunpack.c.l.b16 %v89
  %v426 = vunpack.c.l.b16 %v90
  %v427 = vunpack.c.l.b16 %v91
  %v428 = vunpack.c.l.b16 %v92
  %v429 = vunpack.c.l.b16 %v93
  %v430 = vunpack.c.l.b16 %v94
  %v431 = vunpack.c.l.b16 %v95
  %v432 = vunpack.c.l.b16 %v96
  %v433 = vunpack.c.l.b16 %v97
  %v434 = vunpack.c.l.b16 %v98
  %v435 = vunpack.c.l.b16 %v99
  %v436 = vunpack.c.l.b16 %v100
  %v437 = vunpack.c.l.b16 %v101
  %v438 = vunpack.c.l.b16 %v102
  %v439 = vunpack.c.l.b16 %v103
  %v440 = vunpack.c.l.b16 %v104
  %v441 = vunpack.c.l.b16 %v105
  %v442 = vunpack.c.l.b16 %v106
  %v443 = vunpack.c.l.b16 %v107
  %v444 = vunpack.c.l.b16 %v108
  %v445 = vunpack.c.l.b16 %v109
  %v446 = vunpack.c.l.b16 %v110
  %v447 = vunpack.c.l.b16 %v111
  %v448 = vunpack.c.l.b16 %v112
  %v449 = vunpack.c.l.b16 %v113
  %v450 = vunpack.c.l.b16 %v114
  %v451 = vunpack.c.l.b16 %v115
  %v452 = vunpack.c.l.b16 %v116
  %v453 = vunpack.c.l.b16 %v117
  %v454 = vunpack.c.l.b16 %v118
  %v455 = vunpack.c.l.b16 %v119
  %v456 = vunpack.c.l.b16 %v120
  %v457 = vunpack.c.l.b16 %v121
  %v458 = vunpack.c.l.b16 %v122
  %v459 = vunpack.c.l.b16 %v123
  %v460 = vunpack.c.l.b16 %v124
  %v461 = vunpack.c.l.b16 %v125
  %v462 = vunpack.c.l.b16 %v126
  %v463 = vunpack.c.l.b16 %v127
  %v464 = vunpack.c.l.b16 %v128
  %v465 = vunpack.c.l.b16 %v129
  %v466 = vunpack.c.l.b16 %v130
  %v467 = vunpack.c.l.b16 %v131
  %v468 = vunpack.c.l.b16 %v132
  %v469 = vunpack.c.l.b16 %v133
  %v470 = vunpack.c.l.b16 %v134
  %v471 = vunpack.c.l.b16 %v135
  %v472 = vunpack.c.l.b16 %v136
  %v473 = vunpack.c.l.b16 %v137
  %v474 = vunpack.c.l.b16 %v138
  %v475 = vunpack.c.l.b16 %v139
  %v476 = vunpack.c.l.b16 %v140
  %v477 = vunpack.c.l.b16 %v141
  %v478 = vunpack.c.l.b16 %v142
  %v479 = vunpack.c.l.b16 %v143
  %v480 = vunpack.c.l.b16 %v144
  %v481 = vunpack.c.l.b16 %v145
  %v482 = vunpack.c.l.b16 %v146
  %v483 = vunpack.c.l.b16 %v147
  %v484 = vunpack.c.l.b16 %v148
  %v485 = vunpack.c.l.b16 %v149
  %v486 = vunpack.c.l.b16 %v150
  %v487 = vunpack.c.l.b16 %v151
  %v488 = vunpack.c.l.b16 %v152
  %v489 = vunpack.c.l.b16 %v153
  %v490 = vunpack.c.l.b16 %v154
  %v491 = vunpack.c.l.b16 %v155
  %v492 = vunpack.c.l.b16 %v156
  %v493 = vunpack.c.l.b16 %v157
  %v494 = vpack.c.b16 %v367, %v366
  %v495 = vpack.c.b16 %v369, %v368
  %v496 = vpack.c.b16 %v371, %v370
  %v497 = vpack.c.b16 %v373, %v372
  %v498 = vpack.c.b16 %v375, %v374
  %v499 = vpack.c.b16 %v377, %v376
  %v500 = vpack.c.b16 %v379, %v378
  %v501 = vpack.c.b16 %v381, %v380
  %v502 = vpack.c.b16 %v383, %v382
  %v503 = vpack.c.b16 %v385, %v384
  %v504 = vpack.c.b16 %v387, %v386
  %v505 = vpack.c.b16 %v389, %v388
  %v506 = vpack.c.b16 %v391, %v390
  %v507 = vpack.c.b16 %v393, %v392
  %v508 = vpack.c.b16 %v395, %v394
  %v509 = vpack.c.b16 %v397, %v396
  %v510 = vpack.c.b16 %v399, %v398
  %v511 = vpack.c.b16 %v401, %v400
  %v512 = vpack.c.b16 %v403, %v402
  %v513 = vpack.c.b16 %v405, %v404
  %v514 = vpack.c.b16 %v407, %v406
  %v515 = vpack.c.b16 %v409, %v408
  %v516 = vpack.c.b16 %v411, %v410
  %v517 = vpack.c.b16 %v413, %v412
  %v518 = vpack.c.b16 %v415, %v414
  %v519 = vpack.c.b16 %v417, %v416
  %v520 = vpack.c.b16 %v419, %v418
  %v521 = vpack.c.b16 %v421, %v420
  %v522 = vpack.c.b16 %v423, %v422
  %v523 = vpack.c.b16 %v425, %v424
  %v524 = vpack.c.b16 %v427, %v426
  %v525 = vpack.c.b16 %v429, %v428
  %v526 = vpack.c.b16 %v431, %v430
  %v527 = vpack.c.b16 %v433, %v432
  %v528 = vpack.c.b16 %v435, %v434
  %v529 = vpack.c.b16 %v437, %v436
  %v530 = vpack.c.b16 %v439, %v438
  %v531 = vpack.c.b16 %v441, %v440
  %v532 = vpack.c.b16 %v443, %v442
  %v533 = vpack.c.b16 %v445, %v444
  %v534 = vpack.c.b16 %v447, %v446
  %v535 = vpack.c.b16 %v449, %v448
  %v536 = vpack.c.b16 %v451, %v450
  %v537 = vpack.c.b16 %v453, %v452
  %v538 = vpack.c.b16 %v455, %v454
  %v539 = vpack.c.b16 %v457, %v456
  %v540 = vpack.c.b16 %v459, %v458
  %v541 = vpack.c.b16 %v461, %v460
  %v542 = vpack.c.b16 %v463, %v462
  %v543 = vpack.c.b16 %v465, %v464
  %v544 = vpack.c.b16 %v467, %v466
  %v545 = vpack.c.b16 %v469, %v468
  %v546 = vpack.c.b16 %v471, %v470
  %v547 = vpack.c.b16 %v473, %v472
  %v548 = vpack.c.b16 %v475, %v474
  %v549 = vpack.c.b16 %v477, %v476
  %v550 = vpack.c.b16 %v479, %v478
  %v551 = vpack.c.b16 %v481, %v480
  %v552 = vpack.c.b16 %v483, %v482
  %v553 = vpack.c.b16 %v485, %v484
  %v554 = vpack.c.b16 %v487, %v486
  %v555 = vpack.c.b16 %v489, %v488
  %v556 = vpack.c.b16 %v491, %v490
  %v557 = vpack.c.b16 %v493, %v492
  %622 = vmatpush.bf16.msra.mxu0 %v501
  %623 = vmatpush.bf16.msra.mxu0 %v500
  %624 = vmatpush.bf16.msra.mxu0 %v499
  %625 = vmatpush.bf16.msra.mxu0 %v498
  %626 = vmatpush.bf16.msra.mxu0 %v497
  %627 = vmatpush.bf16.msra.mxu0 %v496
  %628 = vmatpush.bf16.msra.mxu0 %v495
  %629 = vmatpush.bf16.msra.mxu0 %v494
  %630 = vmatmul.bf16.gmra.mxu0 %v206
  %v631 = vpop.f32.mrf.mxu0
  %v632 = vadd.f32 0.0, %v631
  %v633 = vpop.f32.mrf.mxu0
  %v634 = vadd.f32 0.0, %v633
  %635 = vmatmul.bf16.gmra.mxu0 %v214
  %v636 = vpop.f32.mrf.mxu0
  %v637 = vadd.f32 0.0, %v636
  %v638 = vpop.f32.mrf.mxu0
  %v639 = vadd.f32 0.0, %v638
  %640 = vdwg.mxu0
  %641 = vmatpush.bf16.msra.mxu0 %v509
  %642 = vmatpush.bf16.msra.mxu0 %v508
  %643 = vmatpush.bf16.msra.mxu0 %v507
  %644 = vmatpush.bf16.msra.mxu0 %v506
  %645 = vmatpush.bf16.msra.mxu0 %v505
  %646 = vmatpush.bf16.msra.mxu0 %v504
  %647 = vmatpush.bf16.msra.mxu0 %v503
  %648 = vmatpush.bf16.msra.mxu0 %v502
  %649 = vmatmul.bf16.gmra.mxu0 %v207
  %v650 = vpop.f32.mrf.mxu0
  %v651 = vadd.f32 %v632, %v650
  %v652 = vpop.f32.mrf.mxu0
  %v653 = vadd.f32 %v634, %v652
  %654 = vmatmul.bf16.gmra.mxu0 %v215
  %v655 = vpop.f32.mrf.mxu0
  %v656 = vadd.f32 %v637, %v655
  %v657 = vpop.f32.mrf.mxu0
  %v658 = vadd.f32 %v639, %v657
  %659 = vdwg.mxu0
  %660 = vmatpush.bf16.msra.mxu0 %v517
  %661 = vmatpush.bf16.msra.mxu0 %v516
  %662 = vmatpush.bf16.msra.mxu0 %v515
  %663 = vmatpush.bf16.msra.mxu0 %v514
  %664 = vmatpush.bf16.msra.mxu0 %v513
  %665 = vmatpush.bf16.msra.mxu0 %v512
  %666 = vmatpush.bf16.msra.mxu0 %v511
  %667 = vmatpush.bf16.msra.mxu0 %v510
  %668 = vmatmul.bf16.gmra.mxu0 %v208
  %v669 = vpop.f32.mrf.mxu0
  %v670 = vadd.f32 %v651, %v669
  %v671 = vpop.f32.mrf.mxu0
  %v672 = vadd.f32 %v653, %v671
  %673 = vmatmul.bf16.gmra.mxu0 %v216
  %v674 = vpop.f32.mrf.mxu0
  %v675 = vadd.f32 %v656, %v674
  %v676 = vpop.f32.mrf.mxu0
  %v677 = vadd.f32 %v658, %v676
  %678 = vdwg.mxu0
  %679 = vmatpush.bf16.msra.mxu0 %v525
  %680 = vmatpush.bf16.msra.mxu0 %v524
  %681 = vmatpush.bf16.msra.mxu0 %v523
  %682 = vmatpush.bf16.msra.mxu0 %v522
  %683 = vmatpush.bf16.msra.mxu0 %v521
  %684 = vmatpush.bf16.msra.mxu0 %v520
  %685 = vmatpush.bf16.msra.mxu0 %v519
  %686 = vmatpush.bf16.msra.mxu0 %v518
  %687 = vmatmul.bf16.gmra.mxu0 %v209
  %v688 = vpop.f32.mrf.mxu0
  %v689 = vadd.f32 %v670, %v688
  %v690 = vpop.f32.mrf.mxu0
  %v691 = vadd.f32 %v672, %v690
  %692 = vmatmul.bf16.gmra.mxu0 %v217
  %v693 = vpop.f32.mrf.mxu0
  %v694 = vadd.f32 %v675, %v693
  %v695 = vpop.f32.mrf.mxu0
  %v696 = vadd.f32 %v677, %v695
  %697 = vdwg.mxu0
  %698 = vmatpush.bf16.msra.mxu0 %v533
  %699 = vmatpush.bf16.msra.mxu0 %v532
  %700 = vmatpush.bf16.msra.mxu0 %v531
  %701 = vmatpush.bf16.msra.mxu0 %v530
  %702 = vmatpush.bf16.msra.mxu0 %v529
  %703 = vmatpush.bf16.msra.mxu0 %v528
  %704 = vmatpush.bf16.msra.mxu0 %v527
  %705 = vmatpush.bf16.msra.mxu0 %v526
  %706 = vmatmul.bf16.gmra.mxu0 %v210
  %v707 = vpop.f32.mrf.mxu0
  %v708 = vadd.f32 %v689, %v707
  %v709 = vpop.f32.mrf.mxu0
  %v710 = vadd.f32 %v691, %v709
  %711 = vmatmul.bf16.gmra.mxu0 %v218
  %v712 = vpop.f32.mrf.mxu0
  %v713 = vadd.f32 %v694, %v712
  %v714 = vpop.f32.mrf.mxu0
  %v715 = vadd.f32 %v696, %v714
  %716 = vdwg.mxu0
  %717 = vmatpush.bf16.msra.mxu0 %v541
  %718 = vmatpush.bf16.msra.mxu0 %v540
  %719 = vmatpush.bf16.msra.mxu0 %v539
  %720 = vmatpush.bf16.msra.mxu0 %v538
  %721 = vmatpush.bf16.msra.mxu0 %v537
  %722 = vmatpush.bf16.msra.mxu0 %v536
  %723 = vmatpush.bf16.msra.mxu0 %v535
  %724 = vmatpush.bf16.msra.mxu0 %v534
  %725 = vmatmul.bf16.gmra.mxu0 %v211
  %v726 = vpop.f32.mrf.mxu0
  %v727 = vadd.f32 %v708, %v726
  %v728 = vpop.f32.mrf.mxu0
  %v729 = vadd.f32 %v710, %v728
  %730 = vmatmul.bf16.gmra.mxu0 %v219
  %v731 = vpop.f32.mrf.mxu0
  %v732 = vadd.f32 %v713, %v731
  %v733 = vpop.f32.mrf.mxu0
  %v734 = vadd.f32 %v715, %v733
  %735 = vdwg.mxu0
  %736 = vmatpush.bf16.msra.mxu0 %v549
  %737 = vmatpush.bf16.msra.mxu0 %v548
  %738 = vmatpush.bf16.msra.mxu0 %v547
  %739 = vmatpush.bf16.msra.mxu0 %v546
  %740 = vmatpush.bf16.msra.mxu0 %v545
  %741 = vmatpush.bf16.msra.mxu0 %v544
  %742 = vmatpush.bf16.msra.mxu0 %v543
  %743 = vmatpush.bf16.msra.mxu0 %v542
  %744 = vmatmul.bf16.gmra.mxu0 %v212
  %v745 = vpop.f32.mrf.mxu0
  %v746 = vadd.f32 %v727, %v745
  %v747 = vpop.f32.mrf.mxu0
  %v748 = vadd.f32 %v729, %v747
  %749 = vmatmul.bf16.gmra.mxu0 %v220
  %v750 = vpop.f32.mrf.mxu0
  %v751 = vadd.f32 %v732, %v750
  %v752 = vpop.f32.mrf.mxu0
  %v753 = vadd.f32 %v734, %v752
  %754 = vdwg.mxu0
  %755 = vmatpush.bf16.msra.mxu0 %v557
  %756 = vmatpush.bf16.msra.mxu0 %v556
  %757 = vmatpush.bf16.msra.mxu0 %v555
  %758 = vmatpush.bf16.msra.mxu0 %v554
  %759 = vmatpush.bf16.msra.mxu0 %v553
  %760 = vmatpush.bf16.msra.mxu0 %v552
  %761 = vmatpush.bf16.msra.mxu0 %v551
  %762 = vmatpush.bf16.msra.mxu0 %v550
  %763 = vmatmul.bf16.gmra.mxu0 %v213
  %v764 = vpop.f32.mrf.mxu0
  %v765 = vadd.f32 %v746, %v764
  %v766 = vpop.f32.mrf.mxu0
  %v767 = vadd.f32 %v748, %v766
  %768 = vmatmul.bf16.gmra.mxu0 %v221
  %v769 = vpop.f32.mrf.mxu0
  %v770 = vadd.f32 %v751, %v769
  %v771 = vpop.f32.mrf.mxu0
  %v772 = vadd.f32 %v753, %v771
  %773 = vdwg.mxu0
  %774 = vst [vmem:[%s2] sm:$0xff] %v765
  %775 = vst [vmem:[%s2 + $0x8] sm:$0xff] %v767
  %776 = vst [vmem:[%s2 + $0x10] sm:$0xff] %v770
  %777 = vst [vmem:[%s2 + $0x18] sm:$0xff] %v772
  %v778 = vadd.f32 %v765, %v767
  %v779 = vadd.f32 %v778, %v770
  %v780 = vadd.f32 %v779, %v772
  %v781 = vrot.slane %v780, 4
  %v782 = vadd.f32 %v780, %v781
  %v783 = vrot.slane %v782, 2
  %v784 = vadd.f32 %v782, %v783
  %v785 = vrot.slane %v784, 1
  %v786 = vadd.f32 %v784, %v785
  %787 = vst [vmem:[%s3] sm:$0x1] %v786
  %v788 = vmul.f32 %v765, %v765
  %v789 = vmul.f32 %v767, %v767
  %v790 = vmul.f32 %v770, %v770
  %v791 = vmul.f32 %v772, %v772
  %v792 = vadd.f32 %v788, %v789
  %v793 = vadd.f32 %v792, %v790
  %v794 = vadd.f32 %v793, %v791
  %v795 = vrot.slane %v794, 4
  %v796 = vadd.f32 %v794, %v795
  %v797 = vrot.slane %v796, 2
  %v798 = vadd.f32 %v796, %v797
  %v799 = vrot.slane %v798, 1
  %v800 = vadd.f32 %v798, %v799
  %801 = vst [vmem:[%s4] sm:$0x1] %v800
  // Predicated region
  $region10: #{stage1_d_img_forward.12} parent=0 // pred_check
    _
  $region11: #{stage1_d_img_forward.12} parent=0 // pred_check_branch
    %803 = sbr.rel (0) target = $region13
  $region12: #{stage1_d_img_forward.12} parent=0 // pred_region
    _
  $region13: #{stage1_d_img_forward.12} parent=0 // pred_fallthru
    _
  // Predicated region
  $region14: #{stage1_d_img_forward.12} parent=0 // pred_check
    _
  $region15: #{stage1_d_img_forward.12} parent=0 // pred_check_branch
    %805 = sbr.rel (0) target = $region17
  $region16: #{stage1_d_img_forward.12} parent=0 // pred_region
    _
  $region17: #{stage1_d_img_forward.12} parent=0 // pred_fallthru
    _
  // Predicated region
  $region18: #{stage1_d_img_forward.12} parent=0 // pred_check
    _
  $region19: #{stage1_d_img_forward.12} parent=0 // pred_check_branch
    %807 = sbr.rel (0) target = $region21
  $region20: #{stage1_d_img_forward.12} parent=0 // pred_region
    _
  $region21: #{stage1_d_img_forward.12} parent=0 // pred_fallthru
    _
  // Predicated region
  $region22: #{stage1_d_img_forward.12} parent=0 // pred_check
    _
  $region23: #{stage1_d_img_forward.12} parent=0 // pred_check_branch
    %809 = sbr.rel (0) target = $region25
  $region24: #{stage1_d_img_forward.12} parent=0 // pred_region
    _
  $region25: #{stage1_d_img_forward.12} parent=0 // pred_fallthru
    _
  // Predicated region
  $region26: #{stage1_d_img_forward.12} parent=0 // pred_check
    _
  $region27: #{stage1_d_img_forward.12} parent=0 // pred_check_branch
    %811 = sbr.rel (0) target = $region29
  $region28: #{stage1_d_img_forward.12} parent=0 // pred_region
    _
  $region29: #{stage1_d_img_forward.12} parent=0 // pred_fallthru
    _
  // Predicated region
  $region30: #{stage1_d_img_forward.12} parent=0 // pred_check
    _
  $region31: #{stage1_d_img_forward.12} parent=0 // pred_check_branch
    %813 = sbr.rel (0) target = $region33
  $region32: #{stage1_d_img_forward.12} parent=0 // pred_region
    _
  $region33: #{stage1_d_img_forward.12} parent=0 // pred_fallthru
    _

</llo_original>
